<compile_context>
chip_gen: v7x
topology: tpu7x:2x2x1
jax: 0.10.0
libtpu: 0.0.40
codegen_flags: <defaults>
</compile_context>

<pallas_src>
import functools

import jax
import jax.numpy as jnp
from jax import lax
from jax.experimental import pallas as pl
from jax.experimental.pallas import tpu as pltpu


def _round_up(x, m):
    return (x + m - 1) // m * m


# ---------------------------------------------------------------------------
# Kernel: one (batch, L-tile) per grid step, whole block fused.
# ---------------------------------------------------------------------------
def _conv_block_kernel(xm_ref, xh_ref, w1_ref, c1_ref, w2_ref, c2_ref,
                       w3_ref, c3_ref, o_ref, xbuf, im2,
                       *, t_len, pad, ksize, n_sup, l_out):
    f32 = jnp.float32
    t = pl.program_id(1)
    hp = o_ref.shape[-1]
    hh = xh_ref.shape[0]
    rows1 = t_len + 4 * pad          # "scaled" rows this tile (with halo)
    rows2 = t_len + 2 * pad          # "mid" rows this tile (with halo)

    # Assemble the contiguous input window (tile body + small right halo).
    xbuf[pl.ds(0, t_len), :] = xm_ref[...]
    xbuf[pl.ds(t_len, hh), :] = xh_ref[...]

    # ---- conv1 (strided): stride phases live on lanes, so every tap is a
    #      full-depth (rows1, s*Cp) @ (s*Cp, Hp) bf16 MXU matmul. -------------
    acc = jnp.zeros((rows1, hp), f32)
    for j in range(n_sup):
        acc += jnp.dot(xbuf[pl.ds(j, rows1), :], w1_ref[j],
                       preferred_element_type=f32)
    scaled = jnp.maximum(acc + c1_ref[...], 0.0)

    # Positions outside [0, L_out) act as zero padding for conv2 / conv3.
    pos1 = t * t_len - 2 * pad + lax.broadcasted_iota(jnp.int32, (rows1, 1), 0)
    scaled = jnp.where((pos1 >= 0) & (pos1 < l_out), scaled, 0.0)

    # ---- conv2: im2col into (rows2, K*Hp) -> one deep MXU contraction -------
    sb = scaled.astype(jnp.bfloat16)
    for k in range(ksize):
        im2[pl.ds(0, rows2), k * hp:(k + 1) * hp] = sb[k:k + rows2, :]
    mid = jnp.dot(im2[pl.ds(0, rows2), :], w2_ref[...],
                  preferred_element_type=f32)
    mid = jnp.maximum(mid + c2_ref[...], 0.0)
    pos2 = t * t_len - pad + lax.broadcasted_iota(jnp.int32, (rows2, 1), 0)
    mid = jnp.where((pos2 >= 0) & (pos2 < l_out), mid, 0.0)

    # ---- conv3: same im2col trick, reusing the scratch ----------------------
    mb = mid.astype(jnp.bfloat16)
    for k in range(ksize):
        im2[pl.ds(0, t_len), k * hp:(k + 1) * hp] = mb[k:k + t_len, :]
    res = jnp.dot(im2[pl.ds(0, t_len), :], w3_ref[...],
                  preferred_element_type=f32)
    res = res + c3_ref[...]

    # ---- residual add + ReLU (f32 elementwise) ------------------------------
    o_ref[...] = jnp.maximum(res + scaled[2 * pad:2 * pad + t_len, :],
                             0.0).astype(o_ref.dtype)


# ---------------------------------------------------------------------------
# Wrapper: BN folding + lane-dense layout + tiling + pallas_call.
# ---------------------------------------------------------------------------
def conv_block_forward(x, params, *, size, stride=2, block_len=512):
    """x: (B, C_in, L) f32 (PyTorch Conv1d layout). Returns (B, H, L_out) f32."""
    assert size % 2 == 1, "residual add requires an odd kernel size"
    B, Ci, L = x.shape
    pad, K, s = size // 2, size, stride
    H = params["w1"].shape[0]
    eps = 1e-5
    LANE = 128
    Cp, Hp = _round_up(Ci, LANE), _round_up(H, LANE)

    L_out = (L + 2 * pad - K) // s + 1
    n_sup = pl.cdiv(K, s)                    # conv1 taps after phase interleave
    halo = 4 * pad + n_sup                   # extra input super-rows per tile
    Hh = _round_up(max(halo, 8), 8)          # halo block rows (sublane aligned)
    T = _round_up(min(block_len, _round_up(L_out, Hh)), Hh)   # out rows / tile
    n_tiles = pl.cdiv(L_out, T)
    M_total = n_tiles * T + Hh               # super-rows of the padded input

    # Fold inference-mode BN (running stats) into conv weights / bias.
    def fold(w, b, bn, cin_pad):
        gamma, beta, mean, var = bn
        scale = gamma / jnp.sqrt(var + eps)
        wt = jnp.transpose(w, (2, 1, 0)).astype(jnp.float32) * scale[None, None, :]
        wt = jnp.pad(wt, ((0, 0), (0, cin_pad - w.shape[1]), (0, Hp - w.shape[0])))
        bias = jnp.pad(((b - mean) * scale + beta).astype(jnp.float32),
                       (0, Hp - w.shape[0])).reshape(1, Hp)
        return wt, bias

    wt1, c1 = fold(params["w1"], params["b1"], params["bn1"], Cp)   # (K, Cp, Hp)
    wt2, c2 = fold(params["w2"], params["b2"], params["bn2"], Hp)   # (K, Hp, Hp)
    wt3, c3 = fold(params["w3"], params["b3"], params["bn3"], Hp)

    # conv1 weights: pad taps to n_sup*s, fold the stride phase into the
    # contraction dim -> (n_sup, s*Cp, Hp); conv2/3: (K*Hp, Hp). bf16 operands.
    w1 = jnp.pad(wt1, ((0, n_sup * s - K), (0, 0), (0, 0))
                 ).reshape(n_sup, s * Cp, Hp).astype(jnp.bfloat16)
    w2 = wt2.reshape(K * Hp, Hp).astype(jnp.bfloat16)
    w3 = wt3.reshape(K * Hp, Hp).astype(jnp.bfloat16)

    # Single input materialisation: channels-last, channel-padded to 128 lanes,
    # bf16, L zero-padded (conv halo + tile rounding), and the `stride`
    # consecutive rows per output step interleaved on lanes ("super rows").
    PL = 2 * pad * s + pad
    PR = s * M_total - PL - L
    assert PR >= 0
    xsr = jnp.pad(jnp.transpose(x, (0, 2, 1)).astype(jnp.bfloat16),
                  ((0, 0), (PL, PR), (0, Cp - Ci))).reshape(B, M_total, s * Cp)

    kernel = functools.partial(_conv_block_kernel, t_len=T, pad=pad, ksize=K,
                               n_sup=n_sup, l_out=L_out)

    out = pl.pallas_call(
        kernel,
        out_shape=jax.ShapeDtypeStruct((B, n_tiles * T, Hp), jnp.float32),
        grid=(B, n_tiles),
        in_specs=[
            pl.BlockSpec((None, T, s * Cp), lambda b, t: (b, t, 0)),        # tile body
            pl.BlockSpec((None, Hh, s * Cp),
                         lambda b, t: (b, (t + 1) * (T // Hh), 0)),         # right halo
            pl.BlockSpec((n_sup, s * Cp, Hp), lambda b, t: (0, 0, 0)),      # w1
            pl.BlockSpec((1, Hp), lambda b, t: (0, 0)),                     # bias1
            pl.BlockSpec((K * Hp, Hp), lambda b, t: (0, 0)),                # w2
            pl.BlockSpec((1, Hp), lambda b, t: (0, 0)),                     # bias2
            pl.BlockSpec((K * Hp, Hp), lambda b, t: (0, 0)),                # w3
            pl.BlockSpec((1, Hp), lambda b, t: (0, 0)),                     # bias3
        ],
        out_specs=pl.BlockSpec((None, T, Hp), lambda b, t: (b, t, 0)),
        scratch_shapes=[
            pltpu.VMEM((T + Hh, s * Cp), jnp.bfloat16),                     # xbuf
            pltpu.VMEM((_round_up(T + 2 * pad, 8), K * Hp), jnp.bfloat16),  # im2col
        ],
        compiler_params=pltpu.CompilerParams(
            dimension_semantics=("parallel", "parallel"),
            vmem_limit_bytes=32 * 1024 * 1024,
        ),
    )(xsr, xsr, w1, c1, w2, c2, w3, c3)

    # TODO(synk): single-buffer the constant weight operands (pipeline_mode)
    # once very large block_len values push the VMEM budget on v7x.
    return jnp.transpose(out[:, :L_out, :H], (0, 2, 1))


# ---------------------------------------------------------------------------
# Pure-JAX reference (eval-mode PyTorch semantics) for the self-check.
# ---------------------------------------------------------------------------
def conv_block_reference(x, params, *, size, stride=2):
    pad = size // 2
    eps = 1e-5

    def conv1d(y, w, b, s):
        z = lax.conv_general_dilated(
            y, w, window_strides=(s,), padding=[(pad, pad)],
            dimension_numbers=("NCH", "OIH", "NCH"))
        return z + b[None, :, None]

    def bn(y, stats):
        gamma, beta, mean, var = stats
        inv = gamma / jnp.sqrt(var + eps)
        return y * inv[None, :, None] + (beta - mean * inv)[None, :, None]

    scaled = jax.nn.relu(bn(conv1d(x, params["w1"], params["b1"], stride), params["bn1"]))
    mid = jax.nn.relu(bn(conv1d(scaled, params["w2"], params["b2"], 1), params["bn2"]))
    res = bn(conv1d(mid, params["w3"], params["b3"], 1), params["bn3"])
    return jax.nn.relu(res + scaled)


# ---------------------------------------------------------------------------
# Demo / self-check
# ---------------------------------------------------------------------------
if __name__ == "__main__":
    B, C_IN, HIDDEN, L, SIZE, STRIDE = 2, 64, 64, 200, 5, 2

    key = jax.random.PRNGKey(0)
    keys = jax.random.split(key, 10)

    def conv_w(k, co, ci, ks):
        return jax.random.normal(k, (co, ci, ks), jnp.float32) / jnp.sqrt(ci * ks)

    def bn_params(k, c):
        k1, k2, k3, k4 = jax.random.split(k, 4)
        return (jax.random.uniform(k1, (c,), jnp.float32, 0.5, 1.5),   # gamma
                0.1 * jax.random.normal(k2, (c,), jnp.float32),        # beta
                0.1 * jax.random.normal(k3, (c,), jnp.float32),        # running mean
                jax.random.uniform(k4, (c,), jnp.float32, 0.5, 1.5))   # running var

    params = {
        "w1": conv_w(keys[0], HIDDEN, C_IN, SIZE),
        "b1": 0.05 * jax.random.normal(keys[1], (HIDDEN,), jnp.float32),
        "bn1": bn_params(keys[2], HIDDEN),
        "w2": conv_w(keys[3], HIDDEN, HIDDEN, SIZE),
        "b2": 0.05 * jax.random.normal(keys[4], (HIDDEN,), jnp.float32),
        "bn2": bn_params(keys[5], HIDDEN),
        "w3": conv_w(keys[6], HIDDEN, HIDDEN, SIZE),
        "b3": 0.05 * jax.random.normal(keys[7], (HIDDEN,), jnp.float32),
        "bn3": bn_params(keys[8], HIDDEN),
    }
    x = jax.random.normal(keys[9], (B, C_IN, L), jnp.float32)

    # block_len=64 -> 2 L-tiles at this small demo length, exercising the halo
    # BlockSpec, the out-of-range masking and the partial last-tile crop.
    out = conv_block_forward(x, params, size=SIZE, stride=STRIDE, block_len=64)
    out = jax.block_until_ready(out)

    ref = conv_block_reference(x, params, size=SIZE, stride=STRIDE)
    ref = jax.block_until_ready(ref)

    L_OUT = (L + 2 * (SIZE // 2) - SIZE) // STRIDE + 1
    assert out.shape == (B, HIDDEN, L_OUT), out.shape
    # bf16 matmul operands + f32 accumulation: expected rel error well under 1%.
    rel_err = jnp.linalg.norm(out - ref) / (jnp.linalg.norm(ref) + 1e-12)
    assert float(rel_err) < 3e-2, float(rel_err)

    print("KERNEL_OK")
</pallas_src>

<mosaic_0001>
module attributes {stable_mosaic.version = 11 : i64} {
  func.func @_conv_block_kernel(%arg0: i32, %arg1: i32, %arg2: memref<1x64x256xbf16, #tpu.memory_space<vmem>>, %arg3: memref<1x16x256xbf16, #tpu.memory_space<vmem>>, %arg4: memref<3x256x128xbf16, #tpu.memory_space<vmem>>, %arg5: memref<1x128xf32, #tpu.memory_space<vmem>>, %arg6: memref<640x128xbf16, #tpu.memory_space<vmem>>, %arg7: memref<1x128xf32, #tpu.memory_space<vmem>>, %arg8: memref<640x128xbf16, #tpu.memory_space<vmem>>, %arg9: memref<1x128xf32, #tpu.memory_space<vmem>>, %arg10: memref<1x64x128xf32, #tpu.memory_space<vmem>>, %arg11: memref<80x256xbf16, #tpu.memory_space<vmem>>, %arg12: memref<72x640xbf16, #tpu.memory_space<vmem>>) attributes {dimension_semantics = [#tpu.dimension_semantics<parallel>, #tpu.dimension_semantics<parallel>], iteration_bounds = array<i64: 2, 2>, scalar_prefetch = 0 : i64, scratch_operands = 2 : i64, tpu.core_type = #tpu.core_type<tc>, window_params = [{transform_indices = @transform_0, window_bounds = array<i64: 1, 64, 256>}, {transform_indices = @transform_1, window_bounds = array<i64: 1, 16, 256>}, {pipeline_mode = #tpu.pipeline_mode<synchronous>, transform_indices = @transform_2, window_bounds = array<i64: 3, 256, 128>}, {pipeline_mode = #tpu.pipeline_mode<synchronous>, transform_indices = @transform_3, window_bounds = array<i64: 1, 128>}, {pipeline_mode = #tpu.pipeline_mode<synchronous>, transform_indices = @transform_4, window_bounds = array<i64: 640, 128>}, {pipeline_mode = #tpu.pipeline_mode<synchronous>, transform_indices = @transform_5, window_bounds = array<i64: 1, 128>}, {pipeline_mode = #tpu.pipeline_mode<synchronous>, transform_indices = @transform_6, window_bounds = array<i64: 640, 128>}, {pipeline_mode = #tpu.pipeline_mode<synchronous>, transform_indices = @transform_7, window_bounds = array<i64: 1, 128>}, {transform_indices = @transform_8, window_bounds = array<i64: 1, 64, 128>}]} {
    %c0 = arith.constant 0 : index
    %c0_0 = arith.constant 0 : index
    %c0_1 = arith.constant 0 : index
    %0 = vector.load %arg2[%c0, %c0_0, %c0_1] : memref<1x64x256xbf16, #tpu.memory_space<vmem>>, vector<1x64x256xbf16>
    %1 = vector.shape_cast %0 : vector<1x64x256xbf16> to vector<64x256xbf16>
    %c0_2 = arith.constant 0 : index
    %c0_3 = arith.constant 0 : index
    %2 = vector.load %arg11[%c0_2, %c0_3] : memref<80x256xbf16, #tpu.memory_space<vmem>>, vector<64x256xbf16>
    tpu.vector_store %arg11[%c0_2, %c0_3], %1 {strides = array<i32>} : memref<80x256xbf16, #tpu.memory_space<vmem>>, vector<64x256xbf16>,
    %c0_4 = arith.constant 0 : index
    %c0_5 = arith.constant 0 : index
    %c0_6 = arith.constant 0 : index
    %3 = vector.load %arg3[%c0_4, %c0_5, %c0_6] : memref<1x16x256xbf16, #tpu.memory_space<vmem>>, vector<1x16x256xbf16>
    %4 = vector.shape_cast %3 : vector<1x16x256xbf16> to vector<16x256xbf16>
    %c64 = arith.constant 64 : index
    %c0_7 = arith.constant 0 : index
    %5 = vector.load %arg11[%c64, %c0_7] : memref<80x256xbf16, #tpu.memory_space<vmem>>, vector<16x256xbf16>
    tpu.vector_store %arg11[%c64, %c0_7], %4 {strides = array<i32>} : memref<80x256xbf16, #tpu.memory_space<vmem>>, vector<16x256xbf16>,
    %cst = arith.constant 0.000000e+00 : f32
    %6 = vector.broadcast %cst : f32 to vector<72x128xf32>
    %c0_8 = arith.constant 0 : index
    %c0_9 = arith.constant 0 : index
    %7 = vector.load %arg11[%c0_8, %c0_9] : memref<80x256xbf16, #tpu.memory_space<vmem>>, vector<72x256xbf16>
    %c0_10 = arith.constant 0 : index
    %c0_11 = arith.constant 0 : index
    %c0_12 = arith.constant 0 : index
    %8 = vector.load %arg4[%c0_10, %c0_11, %c0_12] : memref<3x256x128xbf16, #tpu.memory_space<vmem>>, vector<1x256x128xbf16>
    %9 = vector.shape_cast %8 : vector<1x256x128xbf16> to vector<256x128xbf16>
    %cst_13 = arith.constant dense<0.000000e+00> : vector<72x128xf32>
    %10 = tpu.matmul %7, %9, %cst_13 {dimension_numbers = #tpu.dot_dimension_numbers<[1], [0], [0], [1], [0, 0, 1, 1], [], []>} : vector<72x256xbf16>, vector<256x128xbf16>, vector<72x128xf32> -> vector<72x128xf32>
    %11 = arith.addf %6, %10 : vector<72x128xf32>
    %c1 = arith.constant 1 : index
    %c0_14 = arith.constant 0 : index
    %12 = vector.load %arg11[%c1, %c0_14] : memref<80x256xbf16, #tpu.memory_space<vmem>>, vector<72x256xbf16>
    %c1_15 = arith.constant 1 : index
    %c0_16 = arith.constant 0 : index
    %c0_17 = arith.constant 0 : index
    %13 = vector.load %arg4[%c1_15, %c0_16, %c0_17] : memref<3x256x128xbf16, #tpu.memory_space<vmem>>, vector<1x256x128xbf16>
    %14 = vector.shape_cast %13 : vector<1x256x128xbf16> to vector<256x128xbf16>
    %cst_18 = arith.constant dense<0.000000e+00> : vector<72x128xf32>
    %15 = tpu.matmul %12, %14, %cst_18 {dimension_numbers = #tpu.dot_dimension_numbers<[1], [0], [0], [1], [0, 0, 1, 1], [], []>} : vector<72x256xbf16>, vector<256x128xbf16>, vector<72x128xf32> -> vector<72x128xf32>
    %16 = arith.addf %11, %15 : vector<72x128xf32>
    %c2 = arith.constant 2 : index
    %c0_19 = arith.constant 0 : index
    %17 = vector.load %arg11[%c2, %c0_19] : memref<80x256xbf16, #tpu.memory_space<vmem>>, vector<72x256xbf16>
    %c2_20 = arith.constant 2 : index
    %c0_21 = arith.constant 0 : index
    %c0_22 = arith.constant 0 : index
    %18 = vector.load %arg4[%c2_20, %c0_21, %c0_22] : memref<3x256x128xbf16, #tpu.memory_space<vmem>>, vector<1x256x128xbf16>
    %19 = vector.shape_cast %18 : vector<1x256x128xbf16> to vector<256x128xbf16>
    %cst_23 = arith.constant dense<0.000000e+00> : vector<72x128xf32>
    %20 = tpu.matmul %17, %19, %cst_23 {dimension_numbers = #tpu.dot_dimension_numbers<[1], [0], [0], [1], [0, 0, 1, 1], [], []>} : vector<72x256xbf16>, vector<256x128xbf16>, vector<72x128xf32> -> vector<72x128xf32>
    %21 = arith.addf %16, %20 : vector<72x128xf32>
    %c0_24 = arith.constant 0 : index
    %c0_25 = arith.constant 0 : index
    %22 = vector.load %arg5[%c0_24, %c0_25] : memref<1x128xf32, #tpu.memory_space<vmem>>, vector<1x128xf32>
    %23 = vector.broadcast %22 : vector<1x128xf32> to vector<72x128xf32>
    %24 = arith.addf %21, %23 : vector<72x128xf32>
    %cst_26 = arith.constant 0.000000e+00 : f32
    %25 = vector.broadcast %cst_26 : f32 to vector<72x128xf32>
    %26 = arith.maximumf %24, %25 : vector<72x128xf32>
    %c64_i32 = arith.constant 64 : i32
    %27 = arith.muli %arg1, %c64_i32 : i32
    %c4_i32 = arith.constant 4 : i32
    %28 = arith.subi %27, %c4_i32 : i32
    %29 = tpu.iota {dimensions = array<i32: 0>} : vector<72x1xi32>
    %30 = vector.broadcast %28 : i32 to vector<72x1xi32>
    %31 = arith.addi %30, %29 : vector<72x1xi32>
    %c0_i32 = arith.constant 0 : i32
    %32 = vector.broadcast %c0_i32 : i32 to vector<72x1xi32>
    %33 = arith.cmpi sge, %31, %32 : vector<72x1xi32>
    %c100_i32 = arith.constant 100 : i32
    %34 = vector.broadcast %c100_i32 : i32 to vector<72x1xi32>
    %35 = arith.cmpi slt, %31, %34 : vector<72x1xi32>
    %36 = arith.andi %33, %35 : vector<72x1xi1>
    %cst_27 = arith.constant 0.000000e+00 : f32
    %37 = vector.shape_cast %36 : vector<72x1xi1> to vector<72x1xi1>
    %38 = vector.broadcast %37 : vector<72x1xi1> to vector<72x128xi1>
    %39 = vector.broadcast %cst_27 : f32 to vector<72x128xf32>
    %40 = arith.select %38, %26, %39 : vector<72x128xi1>, vector<72x128xf32>
    %41 = arith.truncf %40 : vector<72x128xf32> to vector<72x128xbf16>
    %42 = vector.extract_strided_slice %41 {offsets = [0, 0], sizes = [68, 128], strides = [1, 1]} : vector<72x128xbf16> to vector<68x128xbf16>
    %c0_28 = arith.constant 0 : index
    %c0_29 = arith.constant 0 : index
    %43 = vector.load %arg12[%c0_28, %c0_29] : memref<72x640xbf16, #tpu.memory_space<vmem>>, vector<68x128xbf16>
    tpu.vector_store %arg12[%c0_28, %c0_29], %42 {strides = array<i32>} : memref<72x640xbf16, #tpu.memory_space<vmem>>, vector<68x128xbf16>,
    %44 = vector.extract_strided_slice %41 {offsets = [1, 0], sizes = [68, 128], strides = [1, 1]} : vector<72x128xbf16> to vector<68x128xbf16>
    %c0_30 = arith.constant 0 : index
    %c128 = arith.constant 128 : index
    %45 = vector.load %arg12[%c0_30, %c128] : memref<72x640xbf16, #tpu.memory_space<vmem>>, vector<68x128xbf16>
    tpu.vector_store %arg12[%c0_30, %c128], %44 {strides = array<i32>} : memref<72x640xbf16, #tpu.memory_space<vmem>>, vector<68x128xbf16>,
    %46 = vector.extract_strided_slice %41 {offsets = [2, 0], sizes = [68, 128], strides = [1, 1]} : vector<72x128xbf16> to vector<68x128xbf16>
    %c0_31 = arith.constant 0 : index
    %c256 = arith.constant 256 : index
    %47 = vector.load %arg12[%c0_31, %c256] : memref<72x640xbf16, #tpu.memory_space<vmem>>, vector<68x128xbf16>
    tpu.vector_store %arg12[%c0_31, %c256], %46 {strides = array<i32>} : memref<72x640xbf16, #tpu.memory_space<vmem>>, vector<68x128xbf16>,
    %48 = vector.extract_strided_slice %41 {offsets = [3, 0], sizes = [68, 128], strides = [1, 1]} : vector<72x128xbf16> to vector<68x128xbf16>
    %c0_32 = arith.constant 0 : index
    %c384 = arith.constant 384 : index
    %49 = vector.load %arg12[%c0_32, %c384] : memref<72x640xbf16, #tpu.memory_space<vmem>>, vector<68x128xbf16>
    tpu.vector_store %arg12[%c0_32, %c384], %48 {strides = array<i32>} : memref<72x640xbf16, #tpu.memory_space<vmem>>, vector<68x128xbf16>,
    %50 = vector.extract_strided_slice %41 {offsets = [4, 0], sizes = [68, 128], strides = [1, 1]} : vector<72x128xbf16> to vector<68x128xbf16>
    %c0_33 = arith.constant 0 : index
    %c512 = arith.constant 512 : index
    %51 = vector.load %arg12[%c0_33, %c512] : memref<72x640xbf16, #tpu.memory_space<vmem>>, vector<68x128xbf16>
    tpu.vector_store %arg12[%c0_33, %c512], %50 {strides = array<i32>} : memref<72x640xbf16, #tpu.memory_space<vmem>>, vector<68x128xbf16>,
    %c0_34 = arith.constant 0 : index
    %c0_35 = arith.constant 0 : index
    %52 = vector.load %arg12[%c0_34, %c0_35] : memref<72x640xbf16, #tpu.memory_space<vmem>>, vector<68x640xbf16>
    %c0_36 = arith.constant 0 : index
    %c0_37 = arith.constant 0 : index
    %53 = vector.load %arg6[%c0_36, %c0_37] : memref<640x128xbf16, #tpu.memory_space<vmem>>, vector<640x128xbf16>
    %cst_38 = arith.constant dense<0.000000e+00> : vector<68x128xf32>
    %54 = tpu.matmul %52, %53, %cst_38 {dimension_numbers = #tpu.dot_dimension_numbers<[1], [0], [0], [1], [0, 0, 1, 1], [], []>} : vector<68x640xbf16>, vector<640x128xbf16>, vector<68x128xf32> -> vector<68x128xf32>
    %c0_39 = arith.constant 0 : index
    %c0_40 = arith.constant 0 : index
    %55 = vector.load %arg7[%c0_39, %c0_40] : memref<1x128xf32, #tpu.memory_space<vmem>>, vector<1x128xf32>
    %56 = vector.broadcast %55 : vector<1x128xf32> to vector<68x128xf32>
    %57 = arith.addf %54, %56 : vector<68x128xf32>
    %cst_41 = arith.constant 0.000000e+00 : f32
    %58 = vector.broadcast %cst_41 : f32 to vector<68x128xf32>
    %59 = arith.maximumf %57, %58 : vector<68x128xf32>
    %c64_i32_42 = arith.constant 64 : i32
    %60 = arith.muli %arg1, %c64_i32_42 : i32
    %c2_i32 = arith.constant 2 : i32
    %61 = arith.subi %60, %c2_i32 : i32
    %62 = tpu.iota {dimensions = array<i32: 0>} : vector<68x1xi32>
    %63 = vector.broadcast %61 : i32 to vector<68x1xi32>
    %64 = arith.addi %63, %62 : vector<68x1xi32>
    %c0_i32_43 = arith.constant 0 : i32
    %65 = vector.broadcast %c0_i32_43 : i32 to vector<68x1xi32>
    %66 = arith.cmpi sge, %64, %65 : vector<68x1xi32>
    %c100_i32_44 = arith.constant 100 : i32
    %67 = vector.broadcast %c100_i32_44 : i32 to vector<68x1xi32>
    %68 = arith.cmpi slt, %64, %67 : vector<68x1xi32>
    %69 = arith.andi %66, %68 : vector<68x1xi1>
    %cst_45 = arith.constant 0.000000e+00 : f32
    %70 = vector.shape_cast %69 : vector<68x1xi1> to vector<68x1xi1>
    %71 = vector.broadcast %70 : vector<68x1xi1> to vector<68x128xi1>
    %72 = vector.broadcast %cst_45 : f32 to vector<68x128xf32>
    %73 = arith.select %71, %59, %72 : vector<68x128xi1>, vector<68x128xf32>
    %74 = arith.truncf %73 : vector<68x128xf32> to vector<68x128xbf16>
    %75 = vector.extract_strided_slice %74 {offsets = [0, 0], sizes = [64, 128], strides = [1, 1]} : vector<68x128xbf16> to vector<64x128xbf16>
    %c0_46 = arith.constant 0 : index
    %c0_47 = arith.constant 0 : index
    %76 = vector.load %arg12[%c0_46, %c0_47] : memref<72x640xbf16, #tpu.memory_space<vmem>>, vector<64x128xbf16>
    tpu.vector_store %arg12[%c0_46, %c0_47], %75 {strides = array<i32>} : memref<72x640xbf16, #tpu.memory_space<vmem>>, vector<64x128xbf16>,
    %77 = vector.extract_strided_slice %74 {offsets = [1, 0], sizes = [64, 128], strides = [1, 1]} : vector<68x128xbf16> to vector<64x128xbf16>
    %c0_48 = arith.constant 0 : index
    %c128_49 = arith.constant 128 : index
    %78 = vector.load %arg12[%c0_48, %c128_49] : memref<72x640xbf16, #tpu.memory_space<vmem>>, vector<64x128xbf16>
    tpu.vector_store %arg12[%c0_48, %c128_49], %77 {strides = array<i32>} : memref<72x640xbf16, #tpu.memory_space<vmem>>, vector<64x128xbf16>,
    %79 = vector.extract_strided_slice %74 {offsets = [2, 0], sizes = [64, 128], strides = [1, 1]} : vector<68x128xbf16> to vector<64x128xbf16>
    %c0_50 = arith.constant 0 : index
    %c256_51 = arith.constant 256 : index
    %80 = vector.load %arg12[%c0_50, %c256_51] : memref<72x640xbf16, #tpu.memory_space<vmem>>, vector<64x128xbf16>
    tpu.vector_store %arg12[%c0_50, %c256_51], %79 {strides = array<i32>} : memref<72x640xbf16, #tpu.memory_space<vmem>>, vector<64x128xbf16>,
    %81 = vector.extract_strided_slice %74 {offsets = [3, 0], sizes = [64, 128], strides = [1, 1]} : vector<68x128xbf16> to vector<64x128xbf16>
    %c0_52 = arith.constant 0 : index
    %c384_53 = arith.constant 384 : index
    %82 = vector.load %arg12[%c0_52, %c384_53] : memref<72x640xbf16, #tpu.memory_space<vmem>>, vector<64x128xbf16>
    tpu.vector_store %arg12[%c0_52, %c384_53], %81 {strides = array<i32>} : memref<72x640xbf16, #tpu.memory_space<vmem>>, vector<64x128xbf16>,
    %83 = vector.extract_strided_slice %74 {offsets = [4, 0], sizes = [64, 128], strides = [1, 1]} : vector<68x128xbf16> to vector<64x128xbf16>
    %c0_54 = arith.constant 0 : index
    %c512_55 = arith.constant 512 : index
    %84 = vector.load %arg12[%c0_54, %c512_55] : memref<72x640xbf16, #tpu.memory_space<vmem>>, vector<64x128xbf16>
    tpu.vector_store %arg12[%c0_54, %c512_55], %83 {strides = array<i32>} : memref<72x640xbf16, #tpu.memory_space<vmem>>, vector<64x128xbf16>,
    %c0_56 = arith.constant 0 : index
    %c0_57 = arith.constant 0 : index
    %85 = vector.load %arg12[%c0_56, %c0_57] : memref<72x640xbf16, #tpu.memory_space<vmem>>, vector<64x640xbf16>
    %c0_58 = arith.constant 0 : index
    %c0_59 = arith.constant 0 : index
    %86 = vector.load %arg8[%c0_58, %c0_59] : memref<640x128xbf16, #tpu.memory_space<vmem>>, vector<640x128xbf16>
    %cst_60 = arith.constant dense<0.000000e+00> : vector<64x128xf32>
    %87 = tpu.matmul %85, %86, %cst_60 {dimension_numbers = #tpu.dot_dimension_numbers<[1], [0], [0], [1], [0, 0, 1, 1], [], []>} : vector<64x640xbf16>, vector<640x128xbf16>, vector<64x128xf32> -> vector<64x128xf32>
    %c0_61 = arith.constant 0 : index
    %c0_62 = arith.constant 0 : index
    %88 = vector.load %arg9[%c0_61, %c0_62] : memref<1x128xf32, #tpu.memory_space<vmem>>, vector<1x128xf32>
    %89 = vector.broadcast %88 : vector<1x128xf32> to vector<64x128xf32>
    %90 = arith.addf %87, %89 : vector<64x128xf32>
    %91 = vector.extract_strided_slice %40 {offsets = [4, 0], sizes = [64, 128], strides = [1, 1]} : vector<72x128xf32> to vector<64x128xf32>
    %92 = arith.addf %90, %91 : vector<64x128xf32>
    %cst_63 = arith.constant 0.000000e+00 : f32
    %93 = vector.broadcast %cst_63 : f32 to vector<64x128xf32>
    %94 = arith.maximumf %92, %93 : vector<64x128xf32>
    %c0_64 = arith.constant 0 : index
    %c0_65 = arith.constant 0 : index
    %c0_66 = arith.constant 0 : index
    %95 = vector.load %arg10[%c0_64, %c0_65, %c0_66] : memref<1x64x128xf32, #tpu.memory_space<vmem>>, vector<1x64x128xf32>
    %96 = vector.shape_cast %95 : vector<1x64x128xf32> to vector<64x128xf32>
    %97 = vector.shape_cast %94 : vector<64x128xf32> to vector<1x64x128xf32>
    tpu.vector_store %arg10[%c0_64, %c0_65, %c0_66], %97 {strides = array<i32>} : memref<1x64x128xf32, #tpu.memory_space<vmem>>, vector<1x64x128xf32>,
    return
  }
  func.func @transform_0(%arg0: i32, %arg1: i32) -> (i32, i32, i32) {
    %c0_i32 = arith.constant 0 : i32
    %c0_i32_0 = arith.constant 0 : i32
    return %arg0, %arg1, %c0_i32 : i32, i32, i32
  }
  func.func @transform_1(%arg0: i32, %arg1: i32) -> (i32, i32, i32) {
    %c1_i32 = arith.constant 1 : i32
    %0 = arith.addi %arg1, %c1_i32 : i32
    %c4_i32 = arith.constant 4 : i32
    %1 = arith.muli %0, %c4_i32 : i32
    %c0_i32 = arith.constant 0 : i32
    %c0_i32_0 = arith.constant 0 : i32
    return %arg0, %1, %c0_i32 : i32, i32, i32
  }
  func.func @transform_2(%arg0: i32, %arg1: i32) -> (i32, i32, i32) {
    %c0_i32 = arith.constant 0 : i32
    %c0_i32_0 = arith.constant 0 : i32
    %c0_i32_1 = arith.constant 0 : i32
    %c0_i32_2 = arith.constant 0 : i32
    return %c0_i32, %c0_i32_0, %c0_i32_1 : i32, i32, i32
  }
  func.func @transform_3(%arg0: i32, %arg1: i32) -> (i32, i32) {
    %c0_i32 = arith.constant 0 : i32
    %c0_i32_0 = arith.constant 0 : i32
    %c0_i32_1 = arith.constant 0 : i32
    return %c0_i32, %c0_i32_0 : i32, i32
  }
  func.func @transform_4(%arg0: i32, %arg1: i32) -> (i32, i32) {
    %c0_i32 = arith.constant 0 : i32
    %c0_i32_0 = arith.constant 0 : i32
    %c0_i32_1 = arith.constant 0 : i32
    return %c0_i32, %c0_i32_0 : i32, i32
  }
  func.func @transform_5(%arg0: i32, %arg1: i32) -> (i32, i32) {
    %c0_i32 = arith.constant 0 : i32
    %c0_i32_0 = arith.constant 0 : i32
    %c0_i32_1 = arith.constant 0 : i32
    return %c0_i32, %c0_i32_0 : i32, i32
  }
  func.func @transform_6(%arg0: i32, %arg1: i32) -> (i32, i32) {
    %c0_i32 = arith.constant 0 : i32
    %c0_i32_0 = arith.constant 0 : i32
    %c0_i32_1 = arith.constant 0 : i32
    return %c0_i32, %c0_i32_0 : i32, i32
  }
  func.func @transform_7(%arg0: i32, %arg1: i32) -> (i32, i32) {
    %c0_i32 = arith.constant 0 : i32
    %c0_i32_0 = arith.constant 0 : i32
    %c0_i32_1 = arith.constant 0 : i32
    return %c0_i32, %c0_i32_0 : i32, i32
  }
  func.func @transform_8(%arg0: i32, %arg1: i32) -> (i32, i32, i32) {
    %c0_i32 = arith.constant 0 : i32
    %c0_i32_0 = arith.constant 0 : i32
    return %arg0, %arg1, %c0_i32 : i32, i32, i32
  }
}

</mosaic_0001>

<llo_original>
// kernel: tpu_custom_call.1
$region0: #{tpu_custom_call.1}
  #allocation0 [shape = 'u32[]', space=smem, size = 0x4, offset = 0x4, fixed_abs, tag = 'smem constant byte address 0x4 - core index']
  #allocation1 [shape = 'u32[144,128]{1,0:T(1,128)}', space=vmem, size = 0x12000, scoped, tag = 'internal scratch']
  #allocation2 [shape = 'bf16[80,256]{1,0:T(16,128)(2,1)}', space=vmem, size = 0xa000, scoped, tag = 'scratch operand']
  #allocation3 [shape = 'bf16[72,640]{1,0:T(8,128)(2,1)}', space=vmem, size = 0x16800, scoped, tag = 'scratch operand']
  %s0 = inlined_call_operand.hbm [shape: bf16[2,144,256], index: 0, kind: input, shape index: {}]
  %s1 = inlined_call_operand.hbm [shape: bf16[2,144,256], index: 1, kind: input, shape index: {}]
  %s2 = inlined_call_operand.hbm [shape: bf16[3,256,128], index: 2, kind: input, shape index: {}]
  %s3 = inlined_call_operand.vmem [shape: f32[1,128], index: 3, kind: input, shape index: {}]
  %s4 = inlined_call_operand.hbm [shape: bf16[640,128], index: 4, kind: input, shape index: {}]
  %s5 = inlined_call_operand.vmem [shape: f32[1,128], index: 5, kind: input, shape index: {}]
  %s6 = inlined_call_operand.hbm [shape: bf16[640,128], index: 6, kind: input, shape index: {}]
  %s7 = inlined_call_operand.vmem [shape: f32[1,128], index: 7, kind: input, shape index: {}]
  %s8 = inlined_call_operand.hbm [shape: f32[2,128,128], index: 8, kind: output, shape index: {}]
  %s9 = sld [smem:[#allocation0]]
  $region85: #{tpu_custom_call.1} parent=0
    _
  %s11 = ssub.s32 1, %s9
  %s12 = scalar_select 0, %s11, %s9
  $region1: #{tpu_custom_call.1} parent=0
    #allocation4 [shape = 'u8[65536]{0}', space=vmem, size = 0x10000, scoped, tag = 'input window, operand 0']
    #allocation5 [shape = 's32[2]{0}', space=sflag, size = 0x8, scoped, tag = 'scoped memory for tpu_custom_call.1']
    #allocation6 [shape = 's32[2]{0}', space=sflag, size = 0x8, scoped, tag = 'scoped memory for tpu_custom_call.1']
    #allocation7 [shape = 'u8[16384]{0}', space=vmem, size = 0x4000, scoped, tag = 'input window, operand 1']
    #allocation8 [shape = 's32[2]{0}', space=sflag, size = 0x8, scoped, tag = 'scoped memory for tpu_custom_call.1']
    #allocation9 [shape = 'u8[196608]{0}', space=vmem, size = 0x30000, scoped, tag = 'input window, operand 2, single buffered']
    #allocation10 [shape = 'u8[163840]{0}', space=vmem, size = 0x28000, scoped, tag = 'input window, operand 4, single buffered']
    #allocation11 [shape = 's32[1]{0}', space=sflag, size = 0x4, scoped, tag = 'scoped memory for tpu_custom_call.1']
    #allocation12 [shape = 'u8[163840]{0}', space=vmem, size = 0x28000, scoped, tag = 'input window, operand 6, single buffered']
    #allocation13 [shape = 'u8[65536]{0}', space=vmem, size = 0x10000, scoped, tag = 'output window, operand 0']
    %13 = vsyncpa [#allocation5], 0
    %s14 = scalar_lea.sflag [#allocation5], 1
    %15 = vsyncpa %s14, 0
    %16 = vsyncpa [#allocation8], 0
    %s17 = scalar_lea.sflag [#allocation8], 1
    %18 = vsyncpa %s17, 0
    %19 = vsyncpa [#allocation11], 0
    %20 = vsyncpa [#allocation6], 0
    %s21 = scalar_lea.sflag [#allocation6], 1
    %22 = vsyncpa %s21, 0
    loop: start=0, step=1, limit=6
    $region2: #{tpu_custom_call.1} parent=1 // loop_pre_header
      _
    $region3: #{tpu_custom_call.1} parent=1 // loop_header
      %s24 = sphi 0, %s28
      %p25 = scmp.ge.s32.totalorder %s24, 6
      %s31 = sphi 0, %s43
      %s32 = sphi 0, %s39
      %s33 = sphi 0, %s31
      %s34 = sphi 0, %s32
      %s35 = sphi 0, %s33
      %s36 = sphi 0, %s34
      %s48 = sphi 0, %s50
      %s51 = sphi 0, %s48
      %s52 = sphi 0, %s51
      %s68 = sphi 0, %s52
      %s80 = sphi 0, %s82
      %s83 = sphi 0, %s80
      %s84 = sphi 0, %s83
      %s100 = sphi 0, %s84
      %s104 = sphi 0, %s104
      %s106 = sphi 0, %s104
      %s107 = sphi 0, %s106
      %s121 = sphi 0, %s107
      %s125 = sphi 0, %s125
      %s127 = sphi 0, %s125
      %s128 = sphi 0, %s127
      %s142 = sphi 0, %s128
      %s146 = sphi 0, %s146
      %s148 = sphi 0, %s146
      %s149 = sphi 0, %s148
      %s163 = sphi 0, %s149
      %s167 = sphi 0, %s167
      %s169 = sphi 0, %s167
      %s170 = sphi 0, %s169
      %s184 = sphi 0, %s170
      %s188 = sphi 0, %s188
      %s190 = sphi 0, %s188
      %s191 = sphi 0, %s190
      %s205 = sphi 0, %s191
      %s209 = sphi 0, %s209
      %s211 = sphi 0, %s209
      %s212 = sphi 0, %s211
      %s226 = sphi 0, %s212
      %s234 = sphi 0, %s236
      %s237 = sphi 0, %s234
      %s238 = sphi 0, %s237
      %s254 = sphi 0, %s238
    $region4: #{tpu_custom_call.1} parent=1 // loop_header_branch
      %27 = sbr.rel (%p25) target = $region8
    $region5: #{tpu_custom_call.1} parent=1 // loop_body
      %s29 = ssub.s32 %s24, 1
      %s30 = ssub.s32 %s24, 2
      %s37 = sadd.s32 1, %s32
      %p38 = scmp.ge.s32.totalorder %s37, 2
      %s39 = scalar_select %p38, 0, %s37
      %s40 = sadd.s32 1, %s31
      %s41 = scalar_select %p38, %s40, %s31
      %p42 = scmp.ge.s32.totalorder %s41, 2
      %s43 = scalar_select %p42, 0, %s41
      %s44 = ssub.s32 %s31, %s43
      %s45 = ssub.s32 %s32, %s39
      %s46 = sor.u32 %s44, %s45
      %p47 = scmp.eq.s32.totalorder %s46, 0
      %s49 = sadd.s32 %s48, 1
      %s50 = scalar_select %p47, %s48, %s49
      %p53 = pneg %p47
      %p54 = scmp.eq.s32.totalorder %s24, 3
      %p55 = por %p53, %p54
      %p56 = scmp.ne.s32.totalorder %s48, %s51
      %p57 = scmp.eq.s32.totalorder %s24, 0
      %p58 = por %p56, %p57
      %p59 = scmp.ne.s32.totalorder %s48, %s51
      %p60 = scmp.eq.s32.totalorder %s29, 3
      %p61 = por %p59, %p60
      %p62 = scmp.ne.s32.totalorder %s51, %s52
      %p63 = scmp.eq.s32.totalorder %s29, 0
      %p64 = por %p62, %p63
      %p65 = scmp.ne.s32.totalorder %s51, %s52
      %p66 = scmp.eq.s32.totalorder %s30, 3
      %p67 = por %p65, %p66
      %p69 = scmp.ne.s32.totalorder %s52, %s68
      %p70 = scmp.eq.s32.totalorder %s30, 0
      %p71 = por %p69, %p70
      %s72 = sadd.s32 %s32, 1
      %s73 = smul.u32 %s72, 4
      %s74 = sadd.s32 %s39, 1
      %s75 = smul.u32 %s74, 4
      %s76 = ssub.s32 %s31, %s43
      %s77 = ssub.s32 %s73, %s75
      %s78 = sor.u32 %s76, %s77
      %p79 = scmp.eq.s32.totalorder %s78, 0
      %s81 = sadd.s32 %s80, 1
      %s82 = scalar_select %p79, %s80, %s81
      %p85 = pneg %p79
      %p86 = scmp.eq.s32.totalorder %s24, 3
      %p87 = por %p85, %p86
      %p88 = scmp.ne.s32.totalorder %s80, %s83
      %p89 = scmp.eq.s32.totalorder %s24, 0
      %p90 = por %p88, %p89
      %p91 = scmp.ne.s32.totalorder %s80, %s83
      %p92 = scmp.eq.s32.totalorder %s29, 3
      %p93 = por %p91, %p92
      %p94 = scmp.ne.s32.totalorder %s83, %s84
      %p95 = scmp.eq.s32.totalorder %s29, 0
      %p96 = por %p94, %p95
      %p97 = scmp.ne.s32.totalorder %s83, %s84
      %p98 = scmp.eq.s32.totalorder %s30, 3
      %p99 = por %p97, %p98
      %p101 = scmp.ne.s32.totalorder %s84, %s100
      %p102 = scmp.eq.s32.totalorder %s30, 0
      %p103 = por %p101, %p102
      %s105 = sadd.s32 %s104, 1
      %p108 = scmp.eq.s32.totalorder %s24, 3
      %p109 = scmp.ne.s32.totalorder %s104, %s106
      %p110 = scmp.eq.s32.totalorder %s24, 0
      %p111 = por %p109, %p110
      %p112 = scmp.ne.s32.totalorder %s104, %s106
      %p113 = scmp.eq.s32.totalorder %s29, 3
      %p114 = por %p112, %p113
      %p115 = scmp.ne.s32.totalorder %s106, %s107
      %p116 = scmp.eq.s32.totalorder %s29, 0
      %p117 = por %p115, %p116
      %p118 = scmp.ne.s32.totalorder %s106, %s107
      %p119 = scmp.eq.s32.totalorder %s30, 3
      %p120 = por %p118, %p119
      %p122 = scmp.ne.s32.totalorder %s107, %s121
      %p123 = scmp.eq.s32.totalorder %s30, 0
      %p124 = por %p122, %p123
      %s126 = sadd.s32 %s125, 1
      %p129 = scmp.eq.s32.totalorder %s24, 3
      %p130 = scmp.ne.s32.totalorder %s125, %s127
      %p131 = scmp.eq.s32.totalorder %s24, 0
      %p132 = por %p130, %p131
      %p133 = scmp.ne.s32.totalorder %s125, %s127
      %p134 = scmp.eq.s32.totalorder %s29, 3
      %p135 = por %p133, %p134
      %p136 = scmp.ne.s32.totalorder %s127, %s128
      %p137 = scmp.eq.s32.totalorder %s29, 0
      %p138 = por %p136, %p137
      %p139 = scmp.ne.s32.totalorder %s127, %s128
      %p140 = scmp.eq.s32.totalorder %s30, 3
      %p141 = por %p139, %p140
      %p143 = scmp.ne.s32.totalorder %s128, %s142
      %p144 = scmp.eq.s32.totalorder %s30, 0
      %p145 = por %p143, %p144
      %s147 = sadd.s32 %s146, 1
      %p150 = scmp.eq.s32.totalorder %s24, 3
      %p151 = scmp.ne.s32.totalorder %s146, %s148
      %p152 = scmp.eq.s32.totalorder %s24, 0
      %p153 = por %p151, %p152
      %p154 = scmp.ne.s32.totalorder %s146, %s148
      %p155 = scmp.eq.s32.totalorder %s29, 3
      %p156 = por %p154, %p155
      %p157 = scmp.ne.s32.totalorder %s148, %s149
      %p158 = scmp.eq.s32.totalorder %s29, 0
      %p159 = por %p157, %p158
      %p160 = scmp.ne.s32.totalorder %s148, %s149
      %p161 = scmp.eq.s32.totalorder %s30, 3
      %p162 = por %p160, %p161
      %p164 = scmp.ne.s32.totalorder %s149, %s163
      %p165 = scmp.eq.s32.totalorder %s30, 0
      %p166 = por %p164, %p165
      %s168 = sadd.s32 %s167, 1
      %p171 = scmp.eq.s32.totalorder %s24, 3
      %p172 = scmp.ne.s32.totalorder %s167, %s169
      %p173 = scmp.eq.s32.totalorder %s24, 0
      %p174 = por %p172, %p173
      %p175 = scmp.ne.s32.totalorder %s167, %s169
      %p176 = scmp.eq.s32.totalorder %s29, 3
      %p177 = por %p175, %p176
      %p178 = scmp.ne.s32.totalorder %s169, %s170
      %p179 = scmp.eq.s32.totalorder %s29, 0
      %p180 = por %p178, %p179
      %p181 = scmp.ne.s32.totalorder %s169, %s170
      %p182 = scmp.eq.s32.totalorder %s30, 3
      %p183 = por %p181, %p182
      %p185 = scmp.ne.s32.totalorder %s170, %s184
      %p186 = scmp.eq.s32.totalorder %s30, 0
      %p187 = por %p185, %p186
      %s189 = sadd.s32 %s188, 1
      %p192 = scmp.eq.s32.totalorder %s24, 3
      %p193 = scmp.ne.s32.totalorder %s188, %s190
      %p194 = scmp.eq.s32.totalorder %s24, 0
      %p195 = por %p193, %p194
      %p196 = scmp.ne.s32.totalorder %s188, %s190
      %p197 = scmp.eq.s32.totalorder %s29, 3
      %p198 = por %p196, %p197
      %p199 = scmp.ne.s32.totalorder %s190, %s191
      %p200 = scmp.eq.s32.totalorder %s29, 0
      %p201 = por %p199, %p200
      %p202 = scmp.ne.s32.totalorder %s190, %s191
      %p203 = scmp.eq.s32.totalorder %s30, 3
      %p204 = por %p202, %p203
      %p206 = scmp.ne.s32.totalorder %s191, %s205
      %p207 = scmp.eq.s32.totalorder %s30, 0
      %p208 = por %p206, %p207
      %s210 = sadd.s32 %s209, 1
      %p213 = scmp.eq.s32.totalorder %s24, 3
      %p214 = scmp.ne.s32.totalorder %s209, %s211
      %p215 = scmp.eq.s32.totalorder %s24, 0
      %p216 = por %p214, %p215
      %p217 = scmp.ne.s32.totalorder %s209, %s211
      %p218 = scmp.eq.s32.totalorder %s29, 3
      %p219 = por %p217, %p218
      %p220 = scmp.ne.s32.totalorder %s211, %s212
      %p221 = scmp.eq.s32.totalorder %s29, 0
      %p222 = por %p220, %p221
      %p223 = scmp.ne.s32.totalorder %s211, %s212
      %p224 = scmp.eq.s32.totalorder %s30, 3
      %p225 = por %p223, %p224
      %p227 = scmp.ne.s32.totalorder %s212, %s226
      %p228 = scmp.eq.s32.totalorder %s30, 0
      %p229 = por %p227, %p228
      %s230 = ssub.s32 %s31, %s43
      %s231 = ssub.s32 %s32, %s39
      %s232 = sor.u32 %s230, %s231
      %p233 = scmp.eq.s32.totalorder %s232, 0
      %s235 = sadd.s32 %s234, 1
      %s236 = scalar_select %p233, %s234, %s235
      %p239 = pneg %p233
      %p240 = scmp.eq.s32.totalorder %s24, 3
      %p241 = por %p239, %p240
      %p242 = scmp.ne.s32.totalorder %s234, %s237
      %p243 = scmp.eq.s32.totalorder %s24, 0
      %p244 = por %p242, %p243
      %p245 = scmp.ne.s32.totalorder %s234, %s237
      %p246 = scmp.eq.s32.totalorder %s29, 3
      %p247 = por %p245, %p246
      %p248 = scmp.ne.s32.totalorder %s237, %s238
      %p249 = scmp.eq.s32.totalorder %s29, 0
      %p250 = por %p248, %p249
      %p251 = scmp.ne.s32.totalorder %s237, %s238
      %p252 = scmp.eq.s32.totalorder %s30, 3
      %p253 = por %p251, %p252
      %p255 = scmp.ne.s32.totalorder %s238, %s254
      %p256 = scmp.eq.s32.totalorder %s30, 0
      %p257 = por %p255, %p256
      %p258 = scmp.le.s32.totalorder 1, %s24
      %p259 = scmp.lt.s32.totalorder %s24, 5
      %p260 = pnand %p258, %p259
      %p261 = pneg %p260
      // Predicated region
      $region9: #{tpu_custom_call.1} parent=5 // pred_check
        _
      $region10: #{tpu_custom_call.1} parent=5 // pred_check_branch
        %263 = sbr.rel (%p260) target = $region12
      $region11: #{tpu_custom_call.1} parent=5 // pred_region
        %s264 = ssub.s32 %s24, 1
        // Predicated region
        $region13: #{tpu_custom_call.1} parent=11 // pred_check
          %p265 = pneg %p117
        $region14: #{tpu_custom_call.1} parent=11 // pred_check_branch
          %267 = sbr.rel (%p265) target = $region16
        $region15: #{tpu_custom_call.1} parent=11 // pred_region
          %s269 = ssub.s32 6144, 6144
          %270 = vsyncadd [#allocation8], %s269
          %s271 = sshll.u32 [#allocation9], 4
          %s272 = int_to_ptr.vmem [resolvable:$true] %s271
          %277 = dma.hbm_to_vmem [thread:$0]  %s2, 6144, %s272, [#allocation8], 64, 64, 4
        $region16: #{tpu_custom_call.1} parent=11 // pred_fallthru
          _
        // Predicated region
        $region17: #{tpu_custom_call.1} parent=11 // pred_check
          %p278 = pneg %p138
        $region18: #{tpu_custom_call.1} parent=11 // pred_check_branch
          %280 = sbr.rel (%p278) target = $region20
        $region19: #{tpu_custom_call.1} parent=11 // pred_region
          _
        $region20: #{tpu_custom_call.1} parent=11 // pred_fallthru
          _
        // Predicated region
        $region21: #{tpu_custom_call.1} parent=11 // pred_check
          %p281 = pneg %p159
        $region22: #{tpu_custom_call.1} parent=11 // pred_check_branch
          %283 = sbr.rel (%p281) target = $region24
        $region23: #{tpu_custom_call.1} parent=11 // pred_region
          %s285 = ssub.s32 5120, 5120
          %286 = vsyncadd [#allocation11], %s285
          %s287 = sshll.u32 [#allocation10], 4
          %s288 = int_to_ptr.vmem [resolvable:$true] %s287
          %293 = dma.hbm_to_vmem [thread:$0]  %s4, 5120, %s288, [#allocation11], 64, 64, 4
        $region24: #{tpu_custom_call.1} parent=11 // pred_fallthru
          _
        // Predicated region
        $region25: #{tpu_custom_call.1} parent=11 // pred_check
          %p294 = pneg %p180
        $region26: #{tpu_custom_call.1} parent=11 // pred_check_branch
          %296 = sbr.rel (%p294) target = $region28
        $region27: #{tpu_custom_call.1} parent=11 // pred_region
          _
        $region28: #{tpu_custom_call.1} parent=11 // pred_fallthru
          _
        // Predicated region
        $region29: #{tpu_custom_call.1} parent=11 // pred_check
          %p297 = pneg %p201
        $region30: #{tpu_custom_call.1} parent=11 // pred_check_branch
          %299 = sbr.rel (%p297) target = $region32
        $region31: #{tpu_custom_call.1} parent=11 // pred_region
          %s301 = ssub.s32 5120, 5120
          %302 = vsyncadd [#allocation11], %s301
          %s303 = sshll.u32 [#allocation12], 4
          %s304 = int_to_ptr.vmem [resolvable:$true] %s303
          %309 = dma.hbm_to_vmem [thread:$0]  %s6, 5120, %s304, [#allocation11], 64, 64, 4
        $region32: #{tpu_custom_call.1} parent=11 // pred_fallthru
          _
        // Predicated region
        $region33: #{tpu_custom_call.1} parent=11 // pred_check
          %p310 = pneg %p222
        $region34: #{tpu_custom_call.1} parent=11 // pred_check_branch
          %312 = sbr.rel (%p310) target = $region36
        $region35: #{tpu_custom_call.1} parent=11 // pred_region
          _
        $region36: #{tpu_custom_call.1} parent=11 // pred_fallthru
          _
      $region12: #{tpu_custom_call.1} parent=5 // pred_fallthru
        _
      %p313 = scmp.lt.s32.totalorder %s24, 4
      // Predicated region
      $region37: #{tpu_custom_call.1} parent=5 // pred_check
        %p314 = pneg %p313
      $region38: #{tpu_custom_call.1} parent=5 // pred_check_branch
        %316 = sbr.rel (%p314) target = $region40
      $region39: #{tpu_custom_call.1} parent=5 // pred_region
        // Predicated region
        $region41: #{tpu_custom_call.1} parent=39 // pred_check
          %p317 = pneg %p58
        $region42: #{tpu_custom_call.1} parent=39 // pred_check_branch
          %319 = sbr.rel (%p317) target = $region44
        $region43: #{tpu_custom_call.1} parent=39 // pred_region
          %s320 = sand.u32 %s48, 1
          %s321 = scalar_lea.sflag [#allocation5], %s320
          %s322 = sand.u32 %s48, 1
          %s323 = smul.addr %s322, 64
          %s324 = scalar_lea.vmem [#allocation4], %s323
          %s325 = smul.u32 8, %s32
          %s326 = ssub.s32 18, %s325
          %p327 = scmp.lt.s32.totalorder %s326, 8
          %s328 = scalar_select %p327, %s326, 8
          %s329 = smul.u32 64, %s328
          %s330 = smul.u32 %s329, 2
          %s332 = ssub.s32 1024, %s330
          %333 = vsyncadd %s321, %s332
          %p334 = scmp.ne.s32.totalorder 0, %s330
          %s335 = smul.addr %s325, 2
          %s336 = smul.addr %s31, 36
          %s337 = sadd.s32 %s335, %s336
          %s338 = smul.addr %s337, 64
          %s339 = scalar_lea.hbm %s0, %s338
          %s340 = smul.u32 8, %s328
          %s341 = sshll.u32 %s324, 4
          %s342 = int_to_ptr.vmem [resolvable:$true] %s341
          %s343 = sshll.u32 %s340, 4
          %347 = dma.hbm_to_vmem [thread:$0]  (%p334), %s339, %s343, %s342, %s321, 128, 128, 8
        $region44: #{tpu_custom_call.1} parent=39 // pred_fallthru
          _
        // Predicated region
        $region45: #{tpu_custom_call.1} parent=39 // pred_check
          %p348 = pneg %p90
        $region46: #{tpu_custom_call.1} parent=39 // pred_check_branch
          %350 = sbr.rel (%p348) target = $region48
        $region47: #{tpu_custom_call.1} parent=39 // pred_region
          %s351 = sand.u32 %s24, 1
          %s352 = scalar_lea.sflag [#allocation8], %s351
          %s353 = sand.u32 %s80, 1
          %s354 = smul.addr %s353, 16
          %s355 = scalar_lea.vmem [#allocation7], %s354
          %s356 = sadd.s32 %s32, 1
          %s357 = smul.u32 %s356, 4
          %s358 = smul.u32 2, %s357
          %s360 = ssub.s32 256, 256
          %361 = vsyncadd %s352, %s360
          %s362 = smul.addr %s358, 2
          %s363 = smul.addr %s31, 36
          %s364 = sadd.s32 %s362, %s363
          %s365 = smul.addr %s364, 64
          %s366 = scalar_lea.hbm %s1, %s365
          %s367 = sshll.u32 %s355, 4
          %s368 = int_to_ptr.vmem [resolvable:$true] %s367
          %373 = dma.hbm_to_vmem [thread:$0]  %s366, 256, %s368, %s352, 128, 128, 8
        $region48: #{tpu_custom_call.1} parent=39 // pred_fallthru
          _
      $region40: #{tpu_custom_call.1} parent=5 // pred_fallthru
        _
      %p374 = scmp.le.s32.totalorder 1, %s24
      %p375 = scmp.lt.s32.totalorder %s24, 5
      %p376 = pnand %p374, %p375
      %p377 = pneg %p376
      // Predicated region
      $region49: #{tpu_custom_call.1} parent=5 // pred_check
        _
      $region50: #{tpu_custom_call.1} parent=5 // pred_check_branch
        %379 = sbr.rel (%p376) target = $region52
      $region51: #{tpu_custom_call.1} parent=5 // pred_region
        %s380 = ssub.s32 %s24, 1
        %s381 = sand.u32 %s51, 1
        %s382 = scalar_lea.sflag [#allocation5], %s381
        %s383 = sand.u32 %s51, 1
        %s384 = smul.addr %s383, 64
        %s385 = scalar_lea.vmem [#allocation4], %s384
        // Predicated region
        $region53: #{tpu_custom_call.1} parent=51 // pred_check
          %p386 = pneg %p64
        $region54: #{tpu_custom_call.1} parent=51 // pred_check_branch
          %388 = sbr.rel (%p386) target = $region56
        $region55: #{tpu_custom_call.1} parent=51 // pred_region
          %389 = dma.done %s382, 1024
        $region56: #{tpu_custom_call.1} parent=51 // pred_fallthru
          _
        %s390 = sand.u32 %s29, 1
        %s391 = scalar_lea.sflag [#allocation8], %s390
        %s392 = sand.u32 %s83, 1
        %s393 = smul.addr %s392, 16
        %s394 = scalar_lea.vmem [#allocation7], %s393
        // Predicated region
        $region57: #{tpu_custom_call.1} parent=51 // pred_check
          %p395 = pneg %p96
        $region58: #{tpu_custom_call.1} parent=51 // pred_check_branch
          %397 = sbr.rel (%p395) target = $region60
        $region59: #{tpu_custom_call.1} parent=51 // pred_region
          %398 = dma.done %s391, 256
        $region60: #{tpu_custom_call.1} parent=51 // pred_fallthru
          _
        // Predicated region
        $region61: #{tpu_custom_call.1} parent=51 // pred_check
          %p399 = pneg %p117
        $region62: #{tpu_custom_call.1} parent=51 // pred_check_branch
          %401 = sbr.rel (%p399) target = $region64
        $region63: #{tpu_custom_call.1} parent=51 // pred_region
          %402 = dma.done [#allocation8], 6144
        $region64: #{tpu_custom_call.1} parent=51 // pred_fallthru
          _
        // Predicated region
        $region65: #{tpu_custom_call.1} parent=51 // pred_check
          %p403 = pneg %p159
        $region66: #{tpu_custom_call.1} parent=51 // pred_check_branch
          %405 = sbr.rel (%p403) target = $region68
        $region67: #{tpu_custom_call.1} parent=51 // pred_region
          %406 = dma.done [#allocation11], 5120
        $region68: #{tpu_custom_call.1} parent=51 // pred_fallthru
          _
        // Predicated region
        $region69: #{tpu_custom_call.1} parent=51 // pred_check
          %p407 = pneg %p201
        $region70: #{tpu_custom_call.1} parent=51 // pred_check_branch
          %409 = sbr.rel (%p407) target = $region72
        $region71: #{tpu_custom_call.1} parent=51 // pred_region
          %410 = dma.done [#allocation11], 5120
        $region72: #{tpu_custom_call.1} parent=51 // pred_fallthru
          _
        %s411 = sand.u32 %s51, 1
        %s412 = scalar_lea.sflag [#allocation5], %s411
        %s413 = sand.u32 %s51, 1
        %s414 = smul.addr %s413, 64
        %s415 = scalar_lea.vmem [#allocation4], %s414
        %p416 = pneg %p64
        %p417 = pneg %p61
        %s418 = sand.u32 %s29, 1
        %s419 = scalar_lea.sflag [#allocation8], %s418
        %s420 = sand.u32 %s83, 1
        %s421 = smul.addr %s420, 16
        %s422 = scalar_lea.vmem [#allocation7], %s421
        %p423 = pneg %p96
        %p424 = pneg %p93
        %p425 = pneg %p117
        %p426 = pneg %p114
        %p427 = pneg %p138
        %p428 = pneg %p135
        %p429 = pneg %p159
        %p430 = pneg %p156
        %p431 = pneg %p180
        %p432 = pneg %p177
        %p433 = pneg %p201
        %p434 = pneg %p198
        %p435 = pneg %p222
        %p436 = pneg %p219
        %p437 = pneg %p250
        %p438 = pneg %p247
        %s439 = sand.u32 %s237, 1
        %s440 = scalar_lea.sflag [#allocation6], %s439
        %s441 = sand.u32 %s237, 1
        %s442 = smul.addr %s441, 64
        %s443 = scalar_lea.vmem [#allocation13], %s442
        %s444 = smul.u32 8, %s34
        %s445 = ssub.s32 18, %s444
        %p446 = scmp.lt.s32.totalorder %s445, 8
        %s447 = scalar_select %p446, %s445, 8
        %s448 = smul.u32 64, %s447
        %s449 = smul.u32 %s448, 2
        %s450 = sadd.s32 %s34, 1
        %s451 = smul.u32 %s450, 4
        %s452 = smul.u32 2, %s451
        %s453 = smul.u32 8, %s34
        %v455 = vld [vmem:[%s385] sm:$0xff]
        %v456 = vld [vmem:[%s385 + $0x8] sm:$0xff]
        %v457 = vld [vmem:[%s385 + $0x10] sm:$0xff]
        %v458 = vld [vmem:[%s385 + $0x18] sm:$0xff]
        %v459 = vld [vmem:[%s385 + $0x20] sm:$0xff]
        %v460 = vld [vmem:[%s385 + $0x28] sm:$0xff]
        %v461 = vld [vmem:[%s385 + $0x30] sm:$0xff]
        %v462 = vld [vmem:[%s385 + $0x38] sm:$0xff]
        %v471 = vunpack.c.l.b16 %v455
        %v472 = vunpack.c.h.b16 %v455
        %v473 = vunpack.c.l.b16 %v456
        %v474 = vunpack.c.h.b16 %v456
        %v475 = vunpack.c.l.b16 %v457
        %v476 = vunpack.c.h.b16 %v457
        %v477 = vunpack.c.l.b16 %v458
        %v478 = vunpack.c.h.b16 %v458
        %v479 = vunpack.c.l.b16 %v459
        %v480 = vunpack.c.h.b16 %v459
        %v481 = vunpack.c.l.b16 %v460
        %v482 = vunpack.c.h.b16 %v460
        %v483 = vunpack.c.l.b16 %v461
        %v484 = vunpack.c.h.b16 %v461
        %v485 = vunpack.c.l.b16 %v462
        %v486 = vunpack.c.h.b16 %v462
        %v487 = vpack.c.b16 %v473, %v471
        %v488 = vpack.c.b16 %v474, %v472
        %v489 = vpack.c.b16 %v477, %v475
        %v490 = vpack.c.b16 %v478, %v476
        %v491 = vpack.c.b16 %v481, %v479
        %v492 = vpack.c.b16 %v482, %v480
        %v493 = vpack.c.b16 %v485, %v483
        %v494 = vpack.c.b16 %v486, %v484
        %503 = vst [vmem:[#allocation2] sm:$0xff] %v487
        %504 = vst [vmem:[#allocation2 + $0x8] sm:$0xff] %v488
        %505 = vst [vmem:[#allocation2 + $0x10] sm:$0xff] %v489
        %506 = vst [vmem:[#allocation2 + $0x18] sm:$0xff] %v490
        %507 = vst [vmem:[#allocation2 + $0x20] sm:$0xff] %v491
        %508 = vst [vmem:[#allocation2 + $0x28] sm:$0xff] %v492
        %509 = vst [vmem:[#allocation2 + $0x30] sm:$0xff] %v493
        %510 = vst [vmem:[#allocation2 + $0x38] sm:$0xff] %v494
        %v511 = vld [vmem:[%s394] sm:$0xff]
        %v512 = vld [vmem:[%s394 + $0x8] sm:$0xff]
        %v515 = vunpack.c.l.b16 %v511
        %v516 = vunpack.c.h.b16 %v511
        %v517 = vunpack.c.l.b16 %v512
        %v518 = vunpack.c.h.b16 %v512
        %v519 = vpack.c.b16 %v517, %v515
        %v520 = vpack.c.b16 %v518, %v516
        %523 = vst [vmem:[#allocation2 + $0x40] sm:$0xff] %v519
        %524 = vst [vmem:[#allocation2 + $0x48] sm:$0xff] %v520
        %v525 = vld [vmem:[#allocation2] sm:$0xff]
        %v526 = vld [vmem:[#allocation2 + $0x8] sm:$0xff]
        %v527 = vld [vmem:[#allocation2 + $0x10] sm:$0xff]
        %v528 = vld [vmem:[#allocation2 + $0x18] sm:$0xff]
        %v529 = vld [vmem:[#allocation2 + $0x20] sm:$0xff]
        %v530 = vld [vmem:[#allocation2 + $0x28] sm:$0xff]
        %v531 = vld [vmem:[#allocation2 + $0x30] sm:$0xff]
        %v532 = vld [vmem:[#allocation2 + $0x38] sm:$0xff]
        %v533 = vld [vmem:[#allocation2 + $0x40] sm:$0xf]
        %v534 = vld [vmem:[#allocation2 + $0x48] sm:$0xf]
        %v535 = vld [vmem:[#allocation9] sm:$0xf]
        %v536 = vld [vmem:[#allocation9 + $0x4] sm:$0xf]
        %v537 = vld [vmem:[#allocation9 + $0x8] sm:$0xf]
        %v538 = vld [vmem:[#allocation9 + $0xc] sm:$0xf]
        %v539 = vld [vmem:[#allocation9 + $0x10] sm:$0xf]
        %v540 = vld [vmem:[#allocation9 + $0x14] sm:$0xf]
        %v541 = vld [vmem:[#allocation9 + $0x18] sm:$0xf]
        %v542 = vld [vmem:[#allocation9 + $0x1c] sm:$0xf]
        %v543 = vld [vmem:[#allocation9 + $0x20] sm:$0xf]
        %v544 = vld [vmem:[#allocation9 + $0x24] sm:$0xf]
        %v545 = vld [vmem:[#allocation9 + $0x28] sm:$0xf]
        %v546 = vld [vmem:[#allocation9 + $0x2c] sm:$0xf]
        %v547 = vld [vmem:[#allocation9 + $0x30] sm:$0xf]
        %v548 = vld [vmem:[#allocation9 + $0x34] sm:$0xf]
        %v549 = vld [vmem:[#allocation9 + $0x38] sm:$0xf]
        %v550 = vld [vmem:[#allocation9 + $0x3c] sm:$0xf]
        %v551 = vld [vmem:[#allocation9 + $0x40] sm:$0xf]
        %v552 = vld [vmem:[#allocation9 + $0x44] sm:$0xf]
        %v553 = vld [vmem:[#allocation9 + $0x48] sm:$0xf]
        %v554 = vld [vmem:[#allocation9 + $0x4c] sm:$0xf]
        %v555 = vld [vmem:[#allocation9 + $0x50] sm:$0xf]
        %v556 = vld [vmem:[#allocation9 + $0x54] sm:$0xf]
        %v557 = vld [vmem:[#allocation9 + $0x58] sm:$0xf]
        %v558 = vld [vmem:[#allocation9 + $0x5c] sm:$0xf]
        %v559 = vld [vmem:[#allocation9 + $0x60] sm:$0xf]
        %v560 = vld [vmem:[#allocation9 + $0x64] sm:$0xf]
        %v561 = vld [vmem:[#allocation9 + $0x68] sm:$0xf]
        %v562 = vld [vmem:[#allocation9 + $0x6c] sm:$0xf]
        %v563 = vld [vmem:[#allocation9 + $0x70] sm:$0xf]
        %v564 = vld [vmem:[#allocation9 + $0x74] sm:$0xf]
        %v565 = vld [vmem:[#allocation9 + $0x78] sm:$0xf]
        %v566 = vld [vmem:[#allocation9 + $0x7c] sm:$0xf]
        %v567 = vld [vmem:[#allocation2 + $0x40] sm:$0x1f]
        %v568 = vld [vmem:[#allocation2 + $0x48] sm:$0x1f]
        %s569 = scalar_lea.vmem [#allocation9], 128
        %v570 = vld [vmem:[%s569] sm:$0xf]
        %v571 = vld [vmem:[%s569 + $0x4] sm:$0xf]
        %v572 = vld [vmem:[%s569 + $0x8] sm:$0xf]
        %v573 = vld [vmem:[%s569 + $0xc] sm:$0xf]
        %v574 = vld [vmem:[%s569 + $0x10] sm:$0xf]
        %v575 = vld [vmem:[%s569 + $0x14] sm:$0xf]
        %v576 = vld [vmem:[%s569 + $0x18] sm:$0xf]
        %v577 = vld [vmem:[%s569 + $0x1c] sm:$0xf]
        %v578 = vld [vmem:[%s569 + $0x20] sm:$0xf]
        %v579 = vld [vmem:[%s569 + $0x24] sm:$0xf]
        %v580 = vld [vmem:[%s569 + $0x28] sm:$0xf]
        %v581 = vld [vmem:[%s569 + $0x2c] sm:$0xf]
        %v582 = vld [vmem:[%s569 + $0x30] sm:$0xf]
        %v583 = vld [vmem:[%s569 + $0x34] sm:$0xf]
        %v584 = vld [vmem:[%s569 + $0x38] sm:$0xf]
        %v585 = vld [vmem:[%s569 + $0x3c] sm:$0xf]
        %v586 = vld [vmem:[%s569 + $0x40] sm:$0xf]
        %v587 = vld [vmem:[%s569 + $0x44] sm:$0xf]
        %v588 = vld [vmem:[%s569 + $0x48] sm:$0xf]
        %v589 = vld [vmem:[%s569 + $0x4c] sm:$0xf]
        %v590 = vld [vmem:[%s569 + $0x50] sm:$0xf]
        %v591 = vld [vmem:[%s569 + $0x54] sm:$0xf]
        %v592 = vld [vmem:[%s569 + $0x58] sm:$0xf]
        %v593 = vld [vmem:[%s569 + $0x5c] sm:$0xf]
        %v594 = vld [vmem:[%s569 + $0x60] sm:$0xf]
        %v595 = vld [vmem:[%s569 + $0x64] sm:$0xf]
        %v596 = vld [vmem:[%s569 + $0x68] sm:$0xf]
        %v597 = vld [vmem:[%s569 + $0x6c] sm:$0xf]
        %v598 = vld [vmem:[%s569 + $0x70] sm:$0xf]
        %v599 = vld [vmem:[%s569 + $0x74] sm:$0xf]
        %v600 = vld [vmem:[%s569 + $0x78] sm:$0xf]
        %v601 = vld [vmem:[%s569 + $0x7c] sm:$0xf]
        %vm602 = vsmask.f32 7424
        %v604 = vshrl.u32 %v525, 16
        %v606 = vshll.u32 %v525, 16
        %v608 = vrot.slane %v606, 1
        %v609 = vor.u32 %v604, %v608
        %v611 = vshll.u32 %v527, 16
        %v613 = vrot.slane %v611, 1
        %v614 = vsel %vm602, %v609, %v613
        %v616 = vshrl.u32 %v526, 16
        %v618 = vshll.u32 %v526, 16
        %v620 = vrot.slane %v618, 1
        %v621 = vor.u32 %v616, %v620
        %v623 = vshll.u32 %v528, 16
        %v625 = vrot.slane %v623, 1
        %v626 = vsel %vm602, %v621, %v625
        %v627 = vshrl.u32 %v527, 16
        %v629 = vor.u32 %v627, %v613
        %v631 = vshll.u32 %v529, 16
        %v633 = vrot.slane %v631, 1
        %v634 = vsel %vm602, %v629, %v633
        %v635 = vshrl.u32 %v528, 16
        %v637 = vor.u32 %v635, %v625
        %v639 = vshll.u32 %v530, 16
        %v641 = vrot.slane %v639, 1
        %v642 = vsel %vm602, %v637, %v641
        %v643 = vshrl.u32 %v529, 16
        %v645 = vor.u32 %v643, %v633
        %v647 = vshll.u32 %v531, 16
        %v649 = vrot.slane %v647, 1
        %v650 = vsel %vm602, %v645, %v649
        %v651 = vshrl.u32 %v530, 16
        %v653 = vor.u32 %v651, %v641
        %v655 = vshll.u32 %v532, 16
        %v657 = vrot.slane %v655, 1
        %v658 = vsel %vm602, %v653, %v657
        %v659 = vshrl.u32 %v531, 16
        %v661 = vor.u32 %v659, %v649
        %v663 = vshll.u32 %v567, 16
        %v665 = vrot.slane %v663, 1
        %v666 = vsel %vm602, %v661, %v665
        %v667 = vshrl.u32 %v532, 16
        %v669 = vor.u32 %v667, %v657
        %v671 = vshll.u32 %v568, 16
        %v673 = vrot.slane %v671, 1
        %v674 = vsel %vm602, %v669, %v673
        %v675 = vshrl.u32 %v567, 16
        %v677 = vor.u32 %v675, %v665
        %v678 = vshrl.u32 %v568, 16
        %v680 = vor.u32 %v678, %v673
        %v723 = vunpack.c.l.b16 %v570
        %v724 = vunpack.c.l.b16 %v571
        %v725 = vunpack.c.l.b16 %v572
        %v726 = vunpack.c.l.b16 %v573
        %v727 = vunpack.c.l.b16 %v574
        %v728 = vunpack.c.l.b16 %v575
        %v729 = vunpack.c.l.b16 %v576
        %v730 = vunpack.c.l.b16 %v577
        %v731 = vunpack.c.l.b16 %v578
        %v732 = vunpack.c.l.b16 %v579
        %v733 = vunpack.c.l.b16 %v580
        %v734 = vunpack.c.l.b16 %v581
        %v735 = vunpack.c.l.b16 %v582
        %v736 = vunpack.c.l.b16 %v583
        %v737 = vunpack.c.l.b16 %v584
        %v738 = vunpack.c.l.b16 %v585
        %v739 = vunpack.c.l.b16 %v586
        %v740 = vunpack.c.l.b16 %v587
        %v741 = vunpack.c.l.b16 %v588
        %v742 = vunpack.c.l.b16 %v589
        %v743 = vunpack.c.l.b16 %v590
        %v744 = vunpack.c.l.b16 %v591
        %v745 = vunpack.c.l.b16 %v592
        %v746 = vunpack.c.l.b16 %v593
        %v747 = vunpack.c.l.b16 %v594
        %v748 = vunpack.c.l.b16 %v595
        %v749 = vunpack.c.l.b16 %v596
        %v750 = vunpack.c.l.b16 %v597
        %v751 = vunpack.c.l.b16 %v598
        %v752 = vunpack.c.l.b16 %v599
        %v753 = vunpack.c.l.b16 %v600
        %v754 = vunpack.c.l.b16 %v601
        %v755 = vpack.c.b16 %v724, %v723
        %v756 = vpack.c.b16 %v726, %v725
        %v757 = vpack.c.b16 %v728, %v727
        %v758 = vpack.c.b16 %v730, %v729
        %v759 = vpack.c.b16 %v732, %v731
        %v760 = vpack.c.b16 %v734, %v733
        %v761 = vpack.c.b16 %v736, %v735
        %v762 = vpack.c.b16 %v738, %v737
        %v763 = vpack.c.b16 %v740, %v739
        %v764 = vpack.c.b16 %v742, %v741
        %v765 = vpack.c.b16 %v744, %v743
        %v766 = vpack.c.b16 %v746, %v745
        %v767 = vpack.c.b16 %v748, %v747
        %v768 = vpack.c.b16 %v750, %v749
        %v769 = vpack.c.b16 %v752, %v751
        %v770 = vpack.c.b16 %v754, %v753
        %787 = vmatprep.subr.bf16.mxu0 0
        %788 = vmatpush1.bf16.msra.mxu0 %v755
        %789 = vmatprep.subr.bf16.mxu0 0
        %790 = vmatpush1.bf16.msra.mxu0 %v756
        %791 = vmatprep.subr.bf16.mxu0 0
        %792 = vmatpush1.bf16.msra.mxu0 %v757
        %793 = vmatprep.subr.bf16.mxu0 0
        %794 = vmatpush1.bf16.msra.mxu0 %v758
        %795 = vmatprep.subr.bf16.mxu0 0
        %796 = vmatpush1.bf16.msra.mxu0 %v759
        %797 = vmatprep.subr.bf16.mxu0 0
        %798 = vmatpush1.bf16.msra.mxu0 %v760
        %799 = vmatprep.subr.bf16.mxu0 0
        %800 = vmatpush1.bf16.msra.mxu0 %v761
        %801 = vmatprep.subr.bf16.mxu0 0
        %802 = vmatpush1.bf16.msra.mxu0 %v762
        %803 = vmatprep.subr.bf16.mxu0 0
        %804 = vmatpush1.bf16.msra.mxu0 %v763
        %805 = vmatprep.subr.bf16.mxu0 0
        %806 = vmatpush1.bf16.msra.mxu0 %v764
        %807 = vmatprep.subr.bf16.mxu0 0
        %808 = vmatpush1.bf16.msra.mxu0 %v765
        %809 = vmatprep.subr.bf16.mxu0 0
        %810 = vmatpush1.bf16.msra.mxu0 %v766
        %811 = vmatprep.subr.bf16.mxu0 0
        %812 = vmatpush1.bf16.msra.mxu0 %v767
        %813 = vmatprep.subr.bf16.mxu0 0
        %814 = vmatpush1.bf16.msra.mxu0 %v768
        %815 = vmatprep.subr.bf16.mxu0 0
        %816 = vmatpush1.bf16.msra.mxu0 %v769
        %817 = vmatprep.subr.bf16.mxu0 0
        %818 = vmatpush1.bf16.msra.mxu0 %v770
        %819 = vmatprep.mubr.bf16.mxu0 %v626
        %820 = vmatmul.mubr.bf16.gmra.mrb[0].mxu0 %v614
        %v821 = vpop.f32.mrb[0].mxu0
        %v822 = vadd.f32 0.0, %v821
        %v823 = vpop.f32.mrb[0].mxu0
        %v824 = vpop.f32.mrb[0].mxu0
        %v825 = vadd.f32 0.0, %v824
        %v826 = vpop.f32.mrb[0].mxu0
        %827 = vmatprep.mubr.bf16.mxu0 %v642
        %828 = vmatmul.mubr.bf16.gmra.mrb[0].mxu0 %v634
        %v829 = vpop.f32.mrb[0].mxu0
        %v830 = vadd.f32 0.0, %v829
        %v831 = vpop.f32.mrb[0].mxu0
        %v832 = vpop.f32.mrb[0].mxu0
        %v833 = vadd.f32 0.0, %v832
        %v834 = vpop.f32.mrb[0].mxu0
        %835 = vmatprep.mubr.bf16.mxu0 %v658
        %836 = vmatmul.mubr.bf16.gmra.mrb[0].mxu0 %v650
        %v837 = vpop.f32.mrb[0].mxu0
        %v838 = vadd.f32 0.0, %v837
        %v839 = vpop.f32.mrb[0].mxu0
        %v840 = vpop.f32.mrb[0].mxu0
        %v841 = vadd.f32 0.0, %v840
        %v842 = vpop.f32.mrb[0].mxu0
        %843 = vmatprep.mubr.bf16.mxu0 %v674
        %844 = vmatmul.mubr.bf16.gmra.mrb[0].mxu0 %v666
        %v845 = vpop.f32.mrb[0].mxu0
        %v846 = vadd.f32 0.0, %v845
        %v847 = vpop.f32.mrb[0].mxu0
        %v848 = vpop.f32.mrb[0].mxu0
        %v849 = vadd.f32 0.0, %v848
        %v850 = vpop.f32.mrb[0].mxu0
        %851 = vmatprep.mubr.bf16.mxu0 %v680
        %852 = vmatmul.mubr.bf16.gmra.mrb[0].mxu0 %v677
        %v853 = vpop.f32.mrb[0].mxu0
        %v854 = vadd.f32 0.0, %v853
        %v855 = vpop.f32.mrb[0].mxu0
        %v856 = vpop.f32.mrb[0].mxu0
        %v857 = vpop.f32.mrb[0].mxu0
        %858 = vdwg.mxu0
        %v891 = vunpack.c.l.b16 %v535
        %v892 = vunpack.c.l.b16 %v536
        %v893 = vunpack.c.l.b16 %v537
        %v894 = vunpack.c.l.b16 %v538
        %v895 = vunpack.c.l.b16 %v539
        %v896 = vunpack.c.l.b16 %v540
        %v897 = vunpack.c.l.b16 %v541
        %v898 = vunpack.c.l.b16 %v542
        %v899 = vunpack.c.l.b16 %v543
        %v900 = vunpack.c.l.b16 %v544
        %v901 = vunpack.c.l.b16 %v545
        %v902 = vunpack.c.l.b16 %v546
        %v903 = vunpack.c.l.b16 %v547
        %v904 = vunpack.c.l.b16 %v548
        %v905 = vunpack.c.l.b16 %v549
        %v906 = vunpack.c.l.b16 %v550
        %v907 = vunpack.c.l.b16 %v551
        %v908 = vunpack.c.l.b16 %v552
        %v909 = vunpack.c.l.b16 %v553
        %v910 = vunpack.c.l.b16 %v554
        %v911 = vunpack.c.l.b16 %v555
        %v912 = vunpack.c.l.b16 %v556
        %v913 = vunpack.c.l.b16 %v557
        %v914 = vunpack.c.l.b16 %v558
        %v915 = vunpack.c.l.b16 %v559
        %v916 = vunpack.c.l.b16 %v560
        %v917 = vunpack.c.l.b16 %v561
        %v918 = vunpack.c.l.b16 %v562
        %v919 = vunpack.c.l.b16 %v563
        %v920 = vunpack.c.l.b16 %v564
        %v921 = vunpack.c.l.b16 %v565
        %v922 = vunpack.c.l.b16 %v566
        %v923 = vpack.c.b16 %v892, %v891
        %v924 = vpack.c.b16 %v894, %v893
        %v925 = vpack.c.b16 %v896, %v895
        %v926 = vpack.c.b16 %v898, %v897
        %v927 = vpack.c.b16 %v900, %v899
        %v928 = vpack.c.b16 %v902, %v901
        %v929 = vpack.c.b16 %v904, %v903
        %v930 = vpack.c.b16 %v906, %v905
        %v931 = vpack.c.b16 %v908, %v907
        %v932 = vpack.c.b16 %v910, %v909
        %v933 = vpack.c.b16 %v912, %v911
        %v934 = vpack.c.b16 %v914, %v913
        %v935 = vpack.c.b16 %v916, %v915
        %v936 = vpack.c.b16 %v918, %v917
        %v937 = vpack.c.b16 %v920, %v919
        %v938 = vpack.c.b16 %v922, %v921
        %955 = vmatprep.subr.bf16.mxu0 0
        %956 = vmatpush1.bf16.msra.mxu0 %v923
        %957 = vmatprep.subr.bf16.mxu0 0
        %958 = vmatpush1.bf16.msra.mxu0 %v924
        %959 = vmatprep.subr.bf16.mxu0 0
        %960 = vmatpush1.bf16.msra.mxu0 %v925
        %961 = vmatprep.subr.bf16.mxu0 0
        %962 = vmatpush1.bf16.msra.mxu0 %v926
        %963 = vmatprep.subr.bf16.mxu0 0
        %964 = vmatpush1.bf16.msra.mxu0 %v927
        %965 = vmatprep.subr.bf16.mxu0 0
        %966 = vmatpush1.bf16.msra.mxu0 %v928
        %967 = vmatprep.subr.bf16.mxu0 0
        %968 = vmatpush1.bf16.msra.mxu0 %v929
        %969 = vmatprep.subr.bf16.mxu0 0
        %970 = vmatpush1.bf16.msra.mxu0 %v930
        %971 = vmatprep.subr.bf16.mxu0 0
        %972 = vmatpush1.bf16.msra.mxu0 %v931
        %973 = vmatprep.subr.bf16.mxu0 0
        %974 = vmatpush1.bf16.msra.mxu0 %v932
        %975 = vmatprep.subr.bf16.mxu0 0
        %976 = vmatpush1.bf16.msra.mxu0 %v933
        %977 = vmatprep.subr.bf16.mxu0 0
        %978 = vmatpush1.bf16.msra.mxu0 %v934
        %979 = vmatprep.subr.bf16.mxu0 0
        %980 = vmatpush1.bf16.msra.mxu0 %v935
        %981 = vmatprep.subr.bf16.mxu0 0
        %982 = vmatpush1.bf16.msra.mxu0 %v936
        %983 = vmatprep.subr.bf16.mxu0 0
        %984 = vmatpush1.bf16.msra.mxu0 %v937
        %985 = vmatprep.subr.bf16.mxu0 0
        %986 = vmatpush1.bf16.msra.mxu0 %v938
        %987 = vmatprep.mubr.bf16.mxu0 %v526
        %988 = vmatmul.mubr.bf16.gmra.mrb[0].mxu0 %v525
        %v989 = vpop.f32.mrb[0].mxu0
        %v990 = vadd.f32 %v822, %v989
        %v991 = vpop.f32.mrb[0].mxu0
        %v992 = vpop.f32.mrb[0].mxu0
        %v993 = vadd.f32 %v825, %v992
        %v994 = vpop.f32.mrb[0].mxu0
        %995 = vmatprep.mubr.bf16.mxu0 %v528
        %996 = vmatmul.mubr.bf16.gmra.mrb[0].mxu0 %v527
        %v997 = vpop.f32.mrb[0].mxu0
        %v998 = vadd.f32 %v830, %v997
        %v999 = vpop.f32.mrb[0].mxu0
        %v1000 = vpop.f32.mrb[0].mxu0
        %v1001 = vadd.f32 %v833, %v1000
        %v1002 = vpop.f32.mrb[0].mxu0
        %1003 = vmatprep.mubr.bf16.mxu0 %v530
        %1004 = vmatmul.mubr.bf16.gmra.mrb[0].mxu0 %v529
        %v1005 = vpop.f32.mrb[0].mxu0
        %v1006 = vadd.f32 %v838, %v1005
        %v1007 = vpop.f32.mrb[0].mxu0
        %v1008 = vpop.f32.mrb[0].mxu0
        %v1009 = vadd.f32 %v841, %v1008
        %v1010 = vpop.f32.mrb[0].mxu0
        %1011 = vmatprep.mubr.bf16.mxu0 %v532
        %1012 = vmatmul.mubr.bf16.gmra.mrb[0].mxu0 %v531
        %v1013 = vpop.f32.mrb[0].mxu0
        %v1014 = vadd.f32 %v846, %v1013
        %v1015 = vpop.f32.mrb[0].mxu0
        %v1016 = vpop.f32.mrb[0].mxu0
        %v1017 = vadd.f32 %v849, %v1016
        %v1018 = vpop.f32.mrb[0].mxu0
        %1019 = vmatprep.mubr.bf16.mxu0 %v534
        %1020 = vmatmul.mubr.bf16.gmra.mrb[0].mxu0 %v533
        %v1021 = vpop.f32.mrb[0].mxu0
        %v1022 = vadd.f32 %v854, %v1021
        %v1023 = vpop.f32.mrb[0].mxu0
        %v1024 = vpop.f32.mrb[0].mxu0
        %v1025 = vpop.f32.mrb[0].mxu0
        %1026 = vdwg.mxu0
        %v1027 = vld [vmem:[#allocation2] sm:$0xfe]
        %v1028 = vld [vmem:[#allocation2 + $0x8] sm:$0xfe]
        %s1029 = scalar_lea.vmem [#allocation9], 256
        %v1030 = vld [vmem:[%s1029] sm:$0xf]
        %v1031 = vld [vmem:[%s1029 + $0x4] sm:$0xf]
        %v1032 = vld [vmem:[%s1029 + $0x8] sm:$0xf]
        %v1033 = vld [vmem:[%s1029 + $0xc] sm:$0xf]
        %v1034 = vld [vmem:[%s1029 + $0x10] sm:$0xf]
        %v1035 = vld [vmem:[%s1029 + $0x14] sm:$0xf]
        %v1036 = vld [vmem:[%s1029 + $0x18] sm:$0xf]
        %v1037 = vld [vmem:[%s1029 + $0x1c] sm:$0xf]
        %v1038 = vld [vmem:[%s1029 + $0x20] sm:$0xf]
        %v1039 = vld [vmem:[%s1029 + $0x24] sm:$0xf]
        %v1040 = vld [vmem:[%s1029 + $0x28] sm:$0xf]
        %v1041 = vld [vmem:[%s1029 + $0x2c] sm:$0xf]
        %v1042 = vld [vmem:[%s1029 + $0x30] sm:$0xf]
        %v1043 = vld [vmem:[%s1029 + $0x34] sm:$0xf]
        %v1044 = vld [vmem:[%s1029 + $0x38] sm:$0xf]
        %v1045 = vld [vmem:[%s1029 + $0x3c] sm:$0xf]
        %v1046 = vld [vmem:[%s1029 + $0x40] sm:$0xf]
        %v1047 = vld [vmem:[%s1029 + $0x44] sm:$0xf]
        %v1048 = vld [vmem:[%s1029 + $0x48] sm:$0xf]
        %v1049 = vld [vmem:[%s1029 + $0x4c] sm:$0xf]
        %v1050 = vld [vmem:[%s1029 + $0x50] sm:$0xf]
        %v1051 = vld [vmem:[%s1029 + $0x54] sm:$0xf]
        %v1052 = vld [vmem:[%s1029 + $0x58] sm:$0xf]
        %v1053 = vld [vmem:[%s1029 + $0x5c] sm:$0xf]
        %v1054 = vld [vmem:[%s1029 + $0x60] sm:$0xf]
        %v1055 = vld [vmem:[%s1029 + $0x64] sm:$0xf]
        %v1056 = vld [vmem:[%s1029 + $0x68] sm:$0xf]
        %v1057 = vld [vmem:[%s1029 + $0x6c] sm:$0xf]
        %v1058 = vld [vmem:[%s1029 + $0x70] sm:$0xf]
        %v1059 = vld [vmem:[%s1029 + $0x74] sm:$0xf]
        %v1060 = vld [vmem:[%s1029 + $0x78] sm:$0xf]
        %v1061 = vld [vmem:[%s1029 + $0x7c] sm:$0xf]
        %vm1072 = vcmask 1046528
        %v1073 = vrot.slane %v1027, 1
        %v1074 = vrot.slane %v527, 1
        %v1075 = vsel %vm1072, %v1073, %v1074
        %v1076 = vrot.slane %v1028, 1
        %v1077 = vrot.slane %v528, 1
        %v1078 = vsel %vm1072, %v1076, %v1077
        %v1079 = vrot.slane %v529, 1
        %v1080 = vsel %vm1072, %v1074, %v1079
        %v1081 = vrot.slane %v530, 1
        %v1082 = vsel %vm1072, %v1077, %v1081
        %v1083 = vrot.slane %v531, 1
        %v1084 = vsel %vm1072, %v1079, %v1083
        %v1085 = vrot.slane %v532, 1
        %v1086 = vsel %vm1072, %v1081, %v1085
        %v1087 = vrot.slane %v567, 1
        %v1088 = vsel %vm1072, %v1083, %v1087
        %v1089 = vrot.slane %v568, 1
        %v1090 = vsel %vm1072, %v1085, %v1089
        %v1133 = vunpack.c.l.b16 %v1030
        %v1134 = vunpack.c.l.b16 %v1031
        %v1135 = vunpack.c.l.b16 %v1032
        %v1136 = vunpack.c.l.b16 %v1033
        %v1137 = vunpack.c.l.b16 %v1034
        %v1138 = vunpack.c.l.b16 %v1035
        %v1139 = vunpack.c.l.b16 %v1036
        %v1140 = vunpack.c.l.b16 %v1037
        %v1141 = vunpack.c.l.b16 %v1038
        %v1142 = vunpack.c.l.b16 %v1039
        %v1143 = vunpack.c.l.b16 %v1040
        %v1144 = vunpack.c.l.b16 %v1041
        %v1145 = vunpack.c.l.b16 %v1042
        %v1146 = vunpack.c.l.b16 %v1043
        %v1147 = vunpack.c.l.b16 %v1044
        %v1148 = vunpack.c.l.b16 %v1045
        %v1149 = vunpack.c.l.b16 %v1046
        %v1150 = vunpack.c.l.b16 %v1047
        %v1151 = vunpack.c.l.b16 %v1048
        %v1152 = vunpack.c.l.b16 %v1049
        %v1153 = vunpack.c.l.b16 %v1050
        %v1154 = vunpack.c.l.b16 %v1051
        %v1155 = vunpack.c.l.b16 %v1052
        %v1156 = vunpack.c.l.b16 %v1053
        %v1157 = vunpack.c.l.b16 %v1054
        %v1158 = vunpack.c.l.b16 %v1055
        %v1159 = vunpack.c.l.b16 %v1056
        %v1160 = vunpack.c.l.b16 %v1057
        %v1161 = vunpack.c.l.b16 %v1058
        %v1162 = vunpack.c.l.b16 %v1059
        %v1163 = vunpack.c.l.b16 %v1060
        %v1164 = vunpack.c.l.b16 %v1061
        %v1165 = vpack.c.b16 %v1134, %v1133
        %v1166 = vpack.c.b16 %v1136, %v1135
        %v1167 = vpack.c.b16 %v1138, %v1137
        %v1168 = vpack.c.b16 %v1140, %v1139
        %v1169 = vpack.c.b16 %v1142, %v1141
        %v1170 = vpack.c.b16 %v1144, %v1143
        %v1171 = vpack.c.b16 %v1146, %v1145
        %v1172 = vpack.c.b16 %v1148, %v1147
        %v1173 = vpack.c.b16 %v1150, %v1149
        %v1174 = vpack.c.b16 %v1152, %v1151
        %v1175 = vpack.c.b16 %v1154, %v1153
        %v1176 = vpack.c.b16 %v1156, %v1155
        %v1177 = vpack.c.b16 %v1158, %v1157
        %v1178 = vpack.c.b16 %v1160, %v1159
        %v1179 = vpack.c.b16 %v1162, %v1161
        %v1180 = vpack.c.b16 %v1164, %v1163
        %1197 = vmatprep.subr.bf16.mxu0 0
        %1198 = vmatpush1.bf16.msra.mxu0 %v1165
        %1199 = vmatprep.subr.bf16.mxu0 0
        %1200 = vmatpush1.bf16.msra.mxu0 %v1166
        %1201 = vmatprep.subr.bf16.mxu0 0
        %1202 = vmatpush1.bf16.msra.mxu0 %v1167
        %1203 = vmatprep.subr.bf16.mxu0 0
        %1204 = vmatpush1.bf16.msra.mxu0 %v1168
        %1205 = vmatprep.subr.bf16.mxu0 0
        %1206 = vmatpush1.bf16.msra.mxu0 %v1169
        %1207 = vmatprep.subr.bf16.mxu0 0
        %1208 = vmatpush1.bf16.msra.mxu0 %v1170
        %1209 = vmatprep.subr.bf16.mxu0 0
        %1210 = vmatpush1.bf16.msra.mxu0 %v1171
        %1211 = vmatprep.subr.bf16.mxu0 0
        %1212 = vmatpush1.bf16.msra.mxu0 %v1172
        %1213 = vmatprep.subr.bf16.mxu0 0
        %1214 = vmatpush1.bf16.msra.mxu0 %v1173
        %1215 = vmatprep.subr.bf16.mxu0 0
        %1216 = vmatpush1.bf16.msra.mxu0 %v1174
        %1217 = vmatprep.subr.bf16.mxu0 0
        %1218 = vmatpush1.bf16.msra.mxu0 %v1175
        %1219 = vmatprep.subr.bf16.mxu0 0
        %1220 = vmatpush1.bf16.msra.mxu0 %v1176
        %1221 = vmatprep.subr.bf16.mxu0 0
        %1222 = vmatpush1.bf16.msra.mxu0 %v1177
        %1223 = vmatprep.subr.bf16.mxu0 0
        %1224 = vmatpush1.bf16.msra.mxu0 %v1178
        %1225 = vmatprep.subr.bf16.mxu0 0
        %1226 = vmatpush1.bf16.msra.mxu0 %v1179
        %1227 = vmatprep.subr.bf16.mxu0 0
        %1228 = vmatpush1.bf16.msra.mxu0 %v1180
        %1229 = vmatprep.mubr.bf16.mxu0 %v1078
        %1230 = vmatmul.mubr.bf16.gmra.mrb[0].mxu0 %v1075
        %v1231 = vpop.f32.mrb[0].mxu0
        %v1232 = vadd.f32 0.0, %v1231
        %v1233 = vpop.f32.mrb[0].mxu0
        %v1234 = vpop.f32.mrb[0].mxu0
        %v1235 = vadd.f32 0.0, %v1234
        %v1236 = vpop.f32.mrb[0].mxu0
        %1237 = vmatprep.mubr.bf16.mxu0 %v1082
        %1238 = vmatmul.mubr.bf16.gmra.mrb[0].mxu0 %v1080
        %v1239 = vpop.f32.mrb[0].mxu0
        %v1240 = vadd.f32 0.0, %v1239
        %v1241 = vpop.f32.mrb[0].mxu0
        %v1242 = vpop.f32.mrb[0].mxu0
        %v1243 = vadd.f32 0.0, %v1242
        %v1244 = vpop.f32.mrb[0].mxu0
        %1245 = vmatprep.mubr.bf16.mxu0 %v1086
        %1246 = vmatmul.mubr.bf16.gmra.mrb[0].mxu0 %v1084
        %v1247 = vpop.f32.mrb[0].mxu0
        %v1248 = vadd.f32 0.0, %v1247
        %v1249 = vpop.f32.mrb[0].mxu0
        %v1250 = vpop.f32.mrb[0].mxu0
        %v1251 = vadd.f32 0.0, %v1250
        %v1252 = vpop.f32.mrb[0].mxu0
        %1253 = vmatprep.mubr.bf16.mxu0 %v1090
        %1254 = vmatmul.mubr.bf16.gmra.mrb[0].mxu0 %v1088
        %v1255 = vpop.f32.mrb[0].mxu0
        %v1256 = vadd.f32 0.0, %v1255
        %v1257 = vpop.f32.mrb[0].mxu0
        %v1258 = vpop.f32.mrb[0].mxu0
        %v1259 = vadd.f32 0.0, %v1258
        %v1260 = vpop.f32.mrb[0].mxu0
        %1261 = vmatprep.mubr.bf16.mxu0 %v1089
        %1262 = vmatmul.mubr.bf16.gmra.mrb[0].mxu0 %v1087
        %v1263 = vpop.f32.mrb[0].mxu0
        %v1264 = vadd.f32 0.0, %v1263
        %v1265 = vpop.f32.mrb[0].mxu0
        %v1266 = vpop.f32.mrb[0].mxu0
        %v1267 = vpop.f32.mrb[0].mxu0
        %1268 = vdwg.mxu0
        %v1269 = vadd.f32 %v990, %v1232
        %v1270 = vadd.f32 %v993, %v1235
        %v1271 = vadd.f32 %v998, %v1240
        %v1272 = vadd.f32 %v1001, %v1243
        %v1273 = vadd.f32 %v1006, %v1248
        %v1274 = vadd.f32 %v1009, %v1251
        %v1275 = vadd.f32 %v1014, %v1256
        %v1276 = vadd.f32 %v1017, %v1259
        %v1277 = vadd.f32 %v1022, %v1264
        %v1278 = vld [vmem:[%s3] sm:$0x1]
        %v1280 = vlaneseq
        %v1281 = vshrl.u32 %v1280, 7
        %v1282 = vsub.s32 0, %v1281
        %v1283 = vrot.slane %v1278, %v1282
        %v1285 = vadd.f32 %v1269, %v1283
        %v1286 = vadd.f32 %v1270, %v1283
        %v1287 = vadd.f32 %v1271, %v1283
        %v1288 = vadd.f32 %v1272, %v1283
        %v1289 = vadd.f32 %v1273, %v1283
        %v1290 = vadd.f32 %v1274, %v1283
        %v1291 = vadd.f32 %v1275, %v1283
        %v1292 = vadd.f32 %v1276, %v1283
        %v1293 = vadd.f32 %v1277, %v1283
        %v1294 = vmax.f32 %v1285, 0.0
        %v1295 = vmax.f32 %v1286, 0.0
        %v1296 = vmax.f32 %v1287, 0.0
        %v1297 = vmax.f32 %v1288, 0.0
        %v1298 = vmax.f32 %v1289, 0.0
        %v1299 = vmax.f32 %v1290, 0.0
        %v1300 = vmax.f32 %v1291, 0.0
        %v1301 = vmax.f32 %v1292, 0.0
        %v1302 = vmax.f32 %v1293, 0.0
        %s1303 = smul.u32 %s34, 64
        %s1304 = ssub.s32 %s1303, 4
        %v1305 = vlaneseq
        %v1306 = vshrl.u32 %v1305, 7
        %v1307 = vadd.s32 %v1306, 8
        %v1308 = vadd.s32 %v1306, 16
        %v1309 = vadd.s32 %v1306, 24
        %v1310 = vadd.s32 %v1306, 32
        %v1311 = vadd.s32 %v1306, 40
        %v1312 = vadd.s32 %v1306, 48
        %v1313 = vadd.s32 %v1306, 56
        %v1314 = vadd.s32 %v1306, 64
        %v1315 = vstv %s1304
        %v1316 = vadd.s32 %v1315, %v1306
        %v1317 = vadd.s32 %v1315, %v1307
        %v1318 = vadd.s32 %v1315, %v1308
        %v1319 = vadd.s32 %v1315, %v1309
        %v1320 = vadd.s32 %v1315, %v1310
        %v1321 = vadd.s32 %v1315, %v1311
        %v1322 = vadd.s32 %v1315, %v1312
        %v1323 = vadd.s32 %v1315, %v1313
        %v1324 = vadd.s32 %v1315, %v1314
        %vm1325 = vcmp.ge.s32.totalorder %v1316, 0
        %vm1326 = vcmp.ge.s32.totalorder %v1317, 0
        %vm1327 = vcmp.ge.s32.totalorder %v1318, 0
        %vm1328 = vcmp.ge.s32.totalorder %v1319, 0
        %vm1329 = vcmp.ge.s32.totalorder %v1320, 0
        %vm1330 = vcmp.ge.s32.totalorder %v1321, 0
        %vm1331 = vcmp.ge.s32.totalorder %v1322, 0
        %vm1332 = vcmp.ge.s32.totalorder %v1323, 0
        %vm1333 = vcmp.ge.s32.totalorder %v1324, 0
        %vm1334 = vcmp.lt.s32.totalorder %v1316, 100
        %vm1335 = vcmp.lt.s32.totalorder %v1317, 100
        %vm1336 = vcmp.lt.s32.totalorder %v1318, 100
        %vm1337 = vcmp.lt.s32.totalorder %v1319, 100
        %vm1338 = vcmp.lt.s32.totalorder %v1320, 100
        %vm1339 = vcmp.lt.s32.totalorder %v1321, 100
        %vm1340 = vcmp.lt.s32.totalorder %v1322, 100
        %vm1341 = vcmp.lt.s32.totalorder %v1323, 100
        %vm1342 = vcmp.lt.s32.totalorder %v1324, 100
        %vm1343 = vmand %vm1325, %vm1334
        %vm1344 = vmand %vm1326, %vm1335
        %vm1345 = vmand %vm1327, %vm1336
        %vm1346 = vmand %vm1328, %vm1337
        %vm1347 = vmand %vm1329, %vm1338
        %vm1348 = vmand %vm1330, %vm1339
        %vm1349 = vmand %vm1331, %vm1340
        %vm1350 = vmand %vm1332, %vm1341
        %vm1351 = vmand %vm1333, %vm1342
        %v1352 = vsel %vm1343, 1, 0
        %v1353 = vsel %vm1344, 1, 0
        %v1354 = vsel %vm1345, 1, 0
        %v1355 = vsel %vm1346, 1, 0
        %v1356 = vsel %vm1347, 1, 0
        %v1357 = vsel %vm1348, 1, 0
        %v1358 = vsel %vm1349, 1, 0
        %v1359 = vsel %vm1350, 1, 0
        %v1360 = vsel %vm1351, 1, 0
        %vm1361 = vcmp.eq.s32.totalorder %v1352, 1
        %vm1362 = vcmp.eq.s32.totalorder %v1353, 1
        %vm1363 = vcmp.eq.s32.totalorder %v1354, 1
        %vm1364 = vcmp.eq.s32.totalorder %v1355, 1
        %vm1365 = vcmp.eq.s32.totalorder %v1356, 1
        %vm1366 = vcmp.eq.s32.totalorder %v1357, 1
        %vm1367 = vcmp.eq.s32.totalorder %v1358, 1
        %vm1368 = vcmp.eq.s32.totalorder %v1359, 1
        %vm1369 = vcmp.eq.s32.totalorder %v1360, 1
        %v1370 = vsel %vm1361, %v1294, 0.0
        %v1371 = vsel %vm1362, %v1295, 0.0
        %v1372 = vsel %vm1363, %v1296, 0.0
        %v1373 = vsel %vm1364, %v1297, 0.0
        %v1374 = vsel %vm1365, %v1298, 0.0
        %v1375 = vsel %vm1366, %v1299, 0.0
        %v1376 = vsel %vm1367, %v1300, 0.0
        %v1377 = vsel %vm1368, %v1301, 0.0
        %v1378 = vsel %vm1369, %v1302, 0.0
        %v1379 = vpack.c.bf16 %v1371, %v1370
        %v1380 = vpack.c.bf16 %v1373, %v1372
        %v1381 = vpack.c.bf16 %v1375, %v1374
        %v1382 = vpack.c.bf16 %v1377, %v1376
        %v1383 = vpack.c.bf16 %v1378, %v1378
        %v1389 = vunpack.c.l.b16 %v1379
        %v1390 = vunpack.c.h.b16 %v1379
        %v1391 = vunpack.c.l.b16 %v1380
        %v1392 = vunpack.c.h.b16 %v1380
        %v1393 = vunpack.c.l.b16 %v1381
        %v1394 = vunpack.c.h.b16 %v1381
        %v1395 = vunpack.c.l.b16 %v1382
        %v1396 = vunpack.c.h.b16 %v1382
        %v1397 = vunpack.c.l.b16 %v1383
        %v1398 = vpack.c.b16 %v1389, %v1389
        %v1399 = vpack.c.b16 %v1390, %v1390
        %v1400 = vpack.c.b16 %v1391, %v1391
        %v1401 = vpack.c.b16 %v1392, %v1392
        %v1402 = vpack.c.b16 %v1393, %v1393
        %v1403 = vpack.c.b16 %v1394, %v1394
        %v1404 = vpack.c.b16 %v1395, %v1395
        %v1405 = vpack.c.b16 %v1396, %v1396
        %v1406 = vpack.c.b16 %v1397, %v1397
        %1416 = vst [vmem:[#allocation3] sm:$0xf] %v1398
        %1417 = vst [vmem:[#allocation3 + $0x14] sm:$0xf] %v1399
        %1418 = vst [vmem:[#allocation3 + $0x28] sm:$0xf] %v1400
        %1419 = vst [vmem:[#allocation3 + $0x3c] sm:$0xf] %v1401
        %1420 = vst [vmem:[#allocation3 + $0x50] sm:$0xf] %v1402
        %1421 = vst [vmem:[#allocation3 + $0x64] sm:$0xf] %v1403
        %1422 = vst [vmem:[#allocation3 + $0x78] sm:$0xf] %v1404
        %1423 = vst [vmem:[#allocation3 + $0x8c] sm:$0xf] %v1405
        %1424 = vst [vmem:[#allocation3 + $0xa0] sm:$0x3] %v1406
        %vm1425 = vsmask.f32 3328
        %vm1426 = vsmask.f32 7440
        %vm1427 = vmor %vm1425, %vm1426
        %v1429 = vshrl.u32 %v1398, 16
        %v1431 = vrot.slane %v1429, 4
        %v1432 = vshll.u32 %v1398, 16
        %v1434 = vrot.slane %v1432, 5
        %v1435 = vor.u32 %v1431, %v1434
        %v1436 = vrot.slane %v1435, 4
        %v1438 = vshll.u32 %v1399, 16
        %v1440 = vrot.slane %v1438, 5
        %v1441 = vsel %vm1427, %v1436, %v1440
        %v1442 = vshrl.u32 %v1399, 16
        %v1444 = vrot.slane %v1442, 4
        %v1445 = vor.u32 %v1444, %v1440
        %v1446 = vrot.slane %v1445, 4
        %v1448 = vshll.u32 %v1400, 16
        %v1450 = vrot.slane %v1448, 5
        %v1451 = vsel %vm1427, %v1446, %v1450
        %v1452 = vshrl.u32 %v1400, 16
        %v1454 = vrot.slane %v1452, 4
        %v1455 = vor.u32 %v1454, %v1450
        %v1456 = vrot.slane %v1455, 4
        %v1458 = vshll.u32 %v1401, 16
        %v1460 = vrot.slane %v1458, 5
        %v1461 = vsel %vm1427, %v1456, %v1460
        %v1462 = vshrl.u32 %v1401, 16
        %v1464 = vrot.slane %v1462, 4
        %v1465 = vor.u32 %v1464, %v1460
        %v1466 = vrot.slane %v1465, 4
        %v1468 = vshll.u32 %v1402, 16
        %v1470 = vrot.slane %v1468, 5
        %v1471 = vsel %vm1427, %v1466, %v1470
        %v1472 = vshrl.u32 %v1402, 16
        %v1474 = vrot.slane %v1472, 4
        %v1475 = vor.u32 %v1474, %v1470
        %v1476 = vrot.slane %v1475, 4
        %v1478 = vshll.u32 %v1403, 16
        %v1480 = vrot.slane %v1478, 5
        %v1481 = vsel %vm1427, %v1476, %v1480
        %v1482 = vshrl.u32 %v1403, 16
        %v1484 = vrot.slane %v1482, 4
        %v1485 = vor.u32 %v1484, %v1480
        %v1486 = vrot.slane %v1485, 4
        %v1488 = vshll.u32 %v1404, 16
        %v1490 = vrot.slane %v1488, 5
        %v1491 = vsel %vm1427, %v1486, %v1490
        %v1492 = vshrl.u32 %v1404, 16
        %v1494 = vrot.slane %v1492, 4
        %v1495 = vor.u32 %v1494, %v1490
        %v1496 = vrot.slane %v1495, 4
        %v1498 = vshll.u32 %v1405, 16
        %v1500 = vrot.slane %v1498, 5
        %v1501 = vsel %vm1427, %v1496, %v1500
        %v1502 = vshrl.u32 %v1405, 16
        %v1504 = vrot.slane %v1502, 4
        %v1505 = vor.u32 %v1504, %v1500
        %v1506 = vrot.slane %v1505, 4
        %v1508 = vshll.u32 %v1406, 16
        %v1510 = vrot.slane %v1508, 5
        %v1511 = vsel %vm1427, %v1506, %v1510
        %v1512 = vshrl.u32 %v1406, 16
        %v1514 = vrot.slane %v1512, 4
        %v1515 = vor.u32 %v1514, %v1510
        %v1516 = vrot.slane %v1515, 4
        %1526 = vst [vmem:[#allocation3 + $0x4] sm:$0xf] %v1441
        %1527 = vst [vmem:[#allocation3 + $0x18] sm:$0xf] %v1451
        %1528 = vst [vmem:[#allocation3 + $0x2c] sm:$0xf] %v1461
        %1529 = vst [vmem:[#allocation3 + $0x40] sm:$0xf] %v1471
        %1530 = vst [vmem:[#allocation3 + $0x54] sm:$0xf] %v1481
        %1531 = vst [vmem:[#allocation3 + $0x68] sm:$0xf] %v1491
        %1532 = vst [vmem:[#allocation3 + $0x7c] sm:$0xf] %v1501
        %1533 = vst [vmem:[#allocation3 + $0x90] sm:$0xf] %v1511
        %1534 = vst [vmem:[#allocation3 + $0xa4] sm:$0x3] %v1516
        %vm1535 = vcmask 1042432
        %vm1536 = vcmask 1046532
        %vm1537 = vmor %vm1535, %vm1536
        %v1538 = vrot.slane %v1398, 5
        %v1539 = vrot.slane %v1538, 4
        %v1540 = vrot.slane %v1399, 5
        %v1541 = vsel %vm1537, %v1539, %v1540
        %v1542 = vrot.slane %v1540, 4
        %v1543 = vrot.slane %v1400, 5
        %v1544 = vsel %vm1537, %v1542, %v1543
        %v1545 = vrot.slane %v1543, 4
        %v1546 = vrot.slane %v1401, 5
        %v1547 = vsel %vm1537, %v1545, %v1546
        %v1548 = vrot.slane %v1546, 4
        %v1549 = vrot.slane %v1402, 5
        %v1550 = vsel %vm1537, %v1548, %v1549
        %v1551 = vrot.slane %v1549, 4
        %v1552 = vrot.slane %v1403, 5
        %v1553 = vsel %vm1537, %v1551, %v1552
        %v1554 = vrot.slane %v1552, 4
        %v1555 = vrot.slane %v1404, 5
        %v1556 = vsel %vm1537, %v1554, %v1555
        %v1557 = vrot.slane %v1555, 4
        %v1558 = vrot.slane %v1405, 5
        %v1559 = vsel %vm1537, %v1557, %v1558
        %v1560 = vrot.slane %v1558, 4
        %v1561 = vrot.slane %v1406, 5
        %v1562 = vsel %vm1537, %v1560, %v1561
        %v1563 = vrot.slane %v1561, 4
        %1573 = vst [vmem:[#allocation3 + $0x8] sm:$0xf] %v1541
        %1574 = vst [vmem:[#allocation3 + $0x1c] sm:$0xf] %v1544
        %1575 = vst [vmem:[#allocation3 + $0x30] sm:$0xf] %v1547
        %1576 = vst [vmem:[#allocation3 + $0x44] sm:$0xf] %v1550
        %1577 = vst [vmem:[#allocation3 + $0x58] sm:$0xf] %v1553
        %1578 = vst [vmem:[#allocation3 + $0x6c] sm:$0xf] %v1556
        %1579 = vst [vmem:[#allocation3 + $0x80] sm:$0xf] %v1559
        %1580 = vst [vmem:[#allocation3 + $0x94] sm:$0xf] %v1562
        %1581 = vst [vmem:[#allocation3 + $0xa8] sm:$0x3] %v1563
        %vm1582 = vsmask.f32 2304
        %vm1583 = vsmask.f32 6416
        %vm1584 = vmor %vm1582, %vm1583
        %v1585 = vrot.slane %v1429, 5
        %v1586 = vrot.slane %v1432, 6
        %v1587 = vor.u32 %v1585, %v1586
        %v1588 = vrot.slane %v1587, 4
        %v1589 = vrot.slane %v1442, 5
        %v1590 = vrot.slane %v1438, 6
        %v1591 = vor.u32 %v1589, %v1590
        %v1592 = vsel %vm1584, %v1588, %v1591
        %v1593 = vrot.slane %v1591, 4
        %v1594 = vrot.slane %v1452, 5
        %v1595 = vrot.slane %v1448, 6
        %v1596 = vor.u32 %v1594, %v1595
        %v1597 = vsel %vm1584, %v1593, %v1596
        %v1598 = vrot.slane %v1596, 4
        %v1599 = vrot.slane %v1462, 5
        %v1600 = vrot.slane %v1458, 6
        %v1601 = vor.u32 %v1599, %v1600
        %v1602 = vsel %vm1584, %v1598, %v1601
        %v1603 = vrot.slane %v1601, 4
        %v1604 = vrot.slane %v1472, 5
        %v1605 = vrot.slane %v1468, 6
        %v1606 = vor.u32 %v1604, %v1605
        %v1607 = vsel %vm1584, %v1603, %v1606
        %v1608 = vrot.slane %v1606, 4
        %v1609 = vrot.slane %v1482, 5
        %v1610 = vrot.slane %v1478, 6
        %v1611 = vor.u32 %v1609, %v1610
        %v1612 = vsel %vm1584, %v1608, %v1611
        %v1613 = vrot.slane %v1611, 4
        %v1614 = vrot.slane %v1492, 5
        %v1615 = vrot.slane %v1488, 6
        %v1616 = vor.u32 %v1614, %v1615
        %v1617 = vsel %vm1584, %v1613, %v1616
        %v1618 = vrot.slane %v1616, 4
        %v1619 = vrot.slane %v1502, 5
        %v1620 = vrot.slane %v1498, 6
        %v1621 = vor.u32 %v1619, %v1620
        %v1622 = vsel %vm1584, %v1618, %v1621
        %v1623 = vrot.slane %v1621, 4
        %v1624 = vrot.slane %v1512, 5
        %v1625 = vrot.slane %v1508, 6
        %v1626 = vor.u32 %v1624, %v1625
        %v1627 = vsel %vm1584, %v1623, %v1626
        %v1628 = vrot.slane %v1626, 4
        %1638 = vst [vmem:[#allocation3 + $0xc] sm:$0xf] %v1592
        %1639 = vst [vmem:[#allocation3 + $0x20] sm:$0xf] %v1597
        %1640 = vst [vmem:[#allocation3 + $0x34] sm:$0xf] %v1602
        %1641 = vst [vmem:[#allocation3 + $0x48] sm:$0xf] %v1607
        %1642 = vst [vmem:[#allocation3 + $0x5c] sm:$0xf] %v1612
        %1643 = vst [vmem:[#allocation3 + $0x70] sm:$0xf] %v1617
        %1644 = vst [vmem:[#allocation3 + $0x84] sm:$0xf] %v1622
        %1645 = vst [vmem:[#allocation3 + $0x98] sm:$0xf] %v1627
        %1646 = vst [vmem:[#allocation3 + $0xac] sm:$0x3] %v1628
        %vm1647 = vcmask 1041408
        %vm1648 = vcmask 1045508
        %vm1649 = vmor %vm1647, %vm1648
        %v1650 = vrot.slane %v1398, 6
        %v1651 = vrot.slane %v1650, 4
        %v1652 = vrot.slane %v1399, 6
        %v1653 = vsel %vm1649, %v1651, %v1652
        %v1654 = vrot.slane %v1652, 4
        %v1655 = vrot.slane %v1400, 6
        %v1656 = vsel %vm1649, %v1654, %v1655
        %v1657 = vrot.slane %v1655, 4
        %v1658 = vrot.slane %v1401, 6
        %v1659 = vsel %vm1649, %v1657, %v1658
        %v1660 = vrot.slane %v1658, 4
        %v1661 = vrot.slane %v1402, 6
        %v1662 = vsel %vm1649, %v1660, %v1661
        %v1663 = vrot.slane %v1661, 4
        %v1664 = vrot.slane %v1403, 6
        %v1665 = vsel %vm1649, %v1663, %v1664
        %v1666 = vrot.slane %v1664, 4
        %v1667 = vrot.slane %v1404, 6
        %v1668 = vsel %vm1649, %v1666, %v1667
        %v1669 = vrot.slane %v1667, 4
        %v1670 = vrot.slane %v1405, 6
        %v1671 = vsel %vm1649, %v1669, %v1670
        %v1672 = vrot.slane %v1670, 4
        %v1673 = vrot.slane %v1406, 6
        %v1674 = vsel %vm1649, %v1672, %v1673
        %v1675 = vrot.slane %v1673, 4
        %1685 = vst [vmem:[#allocation3 + $0x10] sm:$0xf] %v1653
        %1686 = vst [vmem:[#allocation3 + $0x24] sm:$0xf] %v1656
        %1687 = vst [vmem:[#allocation3 + $0x38] sm:$0xf] %v1659
        %1688 = vst [vmem:[#allocation3 + $0x4c] sm:$0xf] %v1662
        %1689 = vst [vmem:[#allocation3 + $0x60] sm:$0xf] %v1665
        %1690 = vst [vmem:[#allocation3 + $0x74] sm:$0xf] %v1668
        %1691 = vst [vmem:[#allocation3 + $0x88] sm:$0xf] %v1671
        %1692 = vst [vmem:[#allocation3 + $0x9c] sm:$0xf] %v1674
        %1693 = vst [vmem:[#allocation3 + $0xb0] sm:$0x3] %v1675
        %v1694 = vld [vmem:[#allocation3] sm:$0xff]
        %v1695 = vld [vmem:[#allocation3 + $0x8] sm:$0xff]
        %v1696 = vld [vmem:[#allocation3 + $0x10] sm:$0xf]
        %v1697 = vld [vmem:[#allocation3 + $0x14] sm:$0xff]
        %v1698 = vld [vmem:[#allocation3 + $0x1c] sm:$0xff]
        %v1699 = vld [vmem:[#allocation3 + $0x24] sm:$0xf]
        %v1700 = vld [vmem:[#allocation3 + $0x28] sm:$0xff]
        %v1701 = vld [vmem:[#allocation3 + $0x30] sm:$0xff]
        %v1702 = vld [vmem:[#allocation3 + $0x38] sm:$0xf]
        %v1703 = vld [vmem:[#allocation3 + $0x3c] sm:$0xff]
        %v1704 = vld [vmem:[#allocation3 + $0x44] sm:$0xff]
        %v1705 = vld [vmem:[#allocation3 + $0x4c] sm:$0xf]
        %v1706 = vld [vmem:[#allocation3 + $0x50] sm:$0xff]
        %v1707 = vld [vmem:[#allocation3 + $0x58] sm:$0xff]
        %v1708 = vld [vmem:[#allocation3 + $0x60] sm:$0xf]
        %v1709 = vld [vmem:[#allocation3 + $0x64] sm:$0xff]
        %v1710 = vld [vmem:[#allocation3 + $0x6c] sm:$0xff]
        %v1711 = vld [vmem:[#allocation3 + $0x74] sm:$0xf]
        %v1712 = vld [vmem:[#allocation3 + $0x78] sm:$0xff]
        %v1713 = vld [vmem:[#allocation3 + $0x80] sm:$0xff]
        %v1714 = vld [vmem:[#allocation3 + $0x88] sm:$0xf]
        %v1715 = vld [vmem:[#allocation3 + $0x8c] sm:$0xff]
        %v1716 = vld [vmem:[#allocation3 + $0x94] sm:$0xff]
        %v1717 = vld [vmem:[#allocation3 + $0x9c] sm:$0xf]
        %v1718 = vld [vmem:[#allocation3 + $0xa0] sm:$0x33]
        %v1719 = vld [vmem:[#allocation3 + $0xa8] sm:$0x33]
        %v1720 = vld [vmem:[#allocation3 + $0xb0] sm:$0x3]
        %v1721 = vld [vmem:[#allocation10] sm:$0xf]
        %v1722 = vld [vmem:[#allocation10 + $0x4] sm:$0xf]
        %v1723 = vld [vmem:[#allocation10 + $0x8] sm:$0xf]
        %v1724 = vld [vmem:[#allocation10 + $0xc] sm:$0xf]
        %v1725 = vld [vmem:[#allocation10 + $0x10] sm:$0xf]
        %v1726 = vld [vmem:[#allocation10 + $0x14] sm:$0xf]
        %v1727 = vld [vmem:[#allocation10 + $0x18] sm:$0xf]
        %v1728 = vld [vmem:[#allocation10 + $0x1c] sm:$0xf]
        %v1729 = vld [vmem:[#allocation10 + $0x20] sm:$0xf]
        %v1730 = vld [vmem:[#allocation10 + $0x24] sm:$0xf]
        %v1731 = vld [vmem:[#allocation10 + $0x28] sm:$0xf]
        %v1732 = vld [vmem:[#allocation10 + $0x2c] sm:$0xf]
        %v1733 = vld [vmem:[#allocation10 + $0x30] sm:$0xf]
        %v1734 = vld [vmem:[#allocation10 + $0x34] sm:$0xf]
        %v1735 = vld [vmem:[#allocation10 + $0x38] sm:$0xf]
        %v1736 = vld [vmem:[#allocation10 + $0x3c] sm:$0xf]
        %v1737 = vld [vmem:[#allocation10 + $0x40] sm:$0xf]
        %v1738 = vld [vmem:[#allocation10 + $0x44] sm:$0xf]
        %v1739 = vld [vmem:[#allocation10 + $0x48] sm:$0xf]
        %v1740 = vld [vmem:[#allocation10 + $0x4c] sm:$0xf]
        %v1741 = vld [vmem:[#allocation10 + $0x50] sm:$0xf]
        %v1742 = vld [vmem:[#allocation10 + $0x54] sm:$0xf]
        %v1743 = vld [vmem:[#allocation10 + $0x58] sm:$0xf]
        %v1744 = vld [vmem:[#allocation10 + $0x5c] sm:$0xf]
        %v1745 = vld [vmem:[#allocation10 + $0x60] sm:$0xf]
        %v1746 = vld [vmem:[#allocation10 + $0x64] sm:$0xf]
        %v1747 = vld [vmem:[#allocation10 + $0x68] sm:$0xf]
        %v1748 = vld [vmem:[#allocation10 + $0x6c] sm:$0xf]
        %v1749 = vld [vmem:[#allocation10 + $0x70] sm:$0xf]
        %v1750 = vld [vmem:[#allocation10 + $0x74] sm:$0xf]
        %v1751 = vld [vmem:[#allocation10 + $0x78] sm:$0xf]
        %v1752 = vld [vmem:[#allocation10 + $0x7c] sm:$0xf]
        %v1753 = vld [vmem:[#allocation10 + $0x80] sm:$0xf]
        %v1754 = vld [vmem:[#allocation10 + $0x84] sm:$0xf]
        %v1755 = vld [vmem:[#allocation10 + $0x88] sm:$0xf]
        %v1756 = vld [vmem:[#allocation10 + $0x8c] sm:$0xf]
        %v1757 = vld [vmem:[#allocation10 + $0x90] sm:$0xf]
        %v1758 = vld [vmem:[#allocation10 + $0x94] sm:$0xf]
        %v1759 = vld [vmem:[#allocation10 + $0x98] sm:$0xf]
        %v1760 = vld [vmem:[#allocation10 + $0x9c] sm:$0xf]
        %v1761 = vld [vmem:[#allocation10 + $0xa0] sm:$0xf]
        %v1762 = vld [vmem:[#allocation10 + $0xa4] sm:$0xf]
        %v1763 = vld [vmem:[#allocation10 + $0xa8] sm:$0xf]
        %v1764 = vld [vmem:[#allocation10 + $0xac] sm:$0xf]
        %v1765 = vld [vmem:[#allocation10 + $0xb0] sm:$0xf]
        %v1766 = vld [vmem:[#allocation10 + $0xb4] sm:$0xf]
        %v1767 = vld [vmem:[#allocation10 + $0xb8] sm:$0xf]
        %v1768 = vld [vmem:[#allocation10 + $0xbc] sm:$0xf]
        %v1769 = vld [vmem:[#allocation10 + $0xc0] sm:$0xf]
        %v1770 = vld [vmem:[#allocation10 + $0xc4] sm:$0xf]
        %v1771 = vld [vmem:[#allocation10 + $0xc8] sm:$0xf]
        %v1772 = vld [vmem:[#allocation10 + $0xcc] sm:$0xf]
        %v1773 = vld [vmem:[#allocation10 + $0xd0] sm:$0xf]
        %v1774 = vld [vmem:[#allocation10 + $0xd4] sm:$0xf]
        %v1775 = vld [vmem:[#allocation10 + $0xd8] sm:$0xf]
        %v1776 = vld [vmem:[#allocation10 + $0xdc] sm:$0xf]
        %v1777 = vld [vmem:[#allocation10 + $0xe0] sm:$0xf]
        %v1778 = vld [vmem:[#allocation10 + $0xe4] sm:$0xf]
        %v1779 = vld [vmem:[#allocation10 + $0xe8] sm:$0xf]
        %v1780 = vld [vmem:[#allocation10 + $0xec] sm:$0xf]
        %v1781 = vld [vmem:[#allocation10 + $0xf0] sm:$0xf]
        %v1782 = vld [vmem:[#allocation10 + $0xf4] sm:$0xf]
        %v1783 = vld [vmem:[#allocation10 + $0xf8] sm:$0xf]
        %v1784 = vld [vmem:[#allocation10 + $0xfc] sm:$0xf]
        %v1785 = vld [vmem:[#allocation10 + $0x100] sm:$0xf]
        %v1786 = vld [vmem:[#allocation10 + $0x104] sm:$0xf]
        %v1787 = vld [vmem:[#allocation10 + $0x108] sm:$0xf]
        %v1788 = vld [vmem:[#allocation10 + $0x10c] sm:$0xf]
        %v1789 = vld [vmem:[#allocation10 + $0x110] sm:$0xf]
        %v1790 = vld [vmem:[#allocation10 + $0x114] sm:$0xf]
        %v1791 = vld [vmem:[#allocation10 + $0x118] sm:$0xf]
        %v1792 = vld [vmem:[#allocation10 + $0x11c] sm:$0xf]
        %v1793 = vld [vmem:[#allocation10 + $0x120] sm:$0xf]
        %v1794 = vld [vmem:[#allocation10 + $0x124] sm:$0xf]
        %v1795 = vld [vmem:[#allocation10 + $0x128] sm:$0xf]
        %v1796 = vld [vmem:[#allocation10 + $0x12c] sm:$0xf]
        %v1797 = vld [vmem:[#allocation10 + $0x130] sm:$0xf]
        %v1798 = vld [vmem:[#allocation10 + $0x134] sm:$0xf]
        %v1799 = vld [vmem:[#allocation10 + $0x138] sm:$0xf]
        %v1800 = vld [vmem:[#allocation10 + $0x13c] sm:$0xf]
        %v1801 = vld [vmem:[%s5] sm:$0x1]
        %v1803 = vlaneseq
        %v1804 = vshrl.u32 %v1803, 7
        %v1805 = vsub.s32 0, %v1804
        %v1806 = vrot.slane %v1801, %v1805
        %v1835 = vunpack.c.l.b16 %v1694
        %v1836 = vunpack.c.h.b16 %v1694
        %v1837 = vunpack.c.l.b16 %v1695
        %v1838 = vunpack.c.h.b16 %v1695
        %v1839 = vunpack.c.l.b16 %v1696
        %v1840 = vunpack.c.l.b16 %v1697
        %v1841 = vunpack.c.h.b16 %v1697
        %v1842 = vunpack.c.l.b16 %v1698
        %v1843 = vunpack.c.h.b16 %v1698
        %v1844 = vunpack.c.l.b16 %v1699
        %v1845 = vunpack.c.l.b16 %v1700
        %v1846 = vunpack.c.h.b16 %v1700
        %v1847 = vunpack.c.l.b16 %v1701
        %v1848 = vunpack.c.h.b16 %v1701
        %v1849 = vunpack.c.l.b16 %v1702
        %v1850 = vunpack.c.l.b16 %v1703
        %v1851 = vunpack.c.h.b16 %v1703
        %v1852 = vunpack.c.l.b16 %v1704
        %v1853 = vunpack.c.h.b16 %v1704
        %v1854 = vunpack.c.l.b16 %v1705
        %v1855 = vunpack.c.l.b16 %v1706
        %v1856 = vunpack.c.h.b16 %v1706
        %v1857 = vunpack.c.l.b16 %v1707
        %v1858 = vunpack.c.h.b16 %v1707
        %v1859 = vunpack.c.l.b16 %v1708
        %v1860 = vunpack.c.l.b16 %v1709
        %v1861 = vunpack.c.h.b16 %v1709
        %v1862 = vunpack.c.l.b16 %v1710
        %v1863 = vunpack.c.h.b16 %v1710
        %v1864 = vunpack.c.l.b16 %v1711
        %v1865 = vunpack.c.l.b16 %v1712
        %v1866 = vunpack.c.h.b16 %v1712
        %v1867 = vunpack.c.l.b16 %v1713
        %v1868 = vunpack.c.h.b16 %v1713
        %v1869 = vunpack.c.l.b16 %v1714
        %v1870 = vunpack.c.l.b16 %v1715
        %v1871 = vunpack.c.h.b16 %v1715
        %v1872 = vunpack.c.l.b16 %v1716
        %v1873 = vunpack.c.h.b16 %v1716
        %v1874 = vunpack.c.l.b16 %v1717
        %v1875 = vunpack.c.l.b16 %v1718
        %v1876 = vunpack.c.h.b16 %v1718
        %v1877 = vunpack.c.l.b16 %v1719
        %v1878 = vunpack.c.h.b16 %v1719
        %v1879 = vunpack.c.l.b16 %v1720
        %v1880 = vpack.c.b16 %v1840, %v1835
        %v1881 = vpack.c.b16 %v1841, %v1836
        %v1882 = vpack.c.b16 %v1842, %v1837
        %v1883 = vpack.c.b16 %v1843, %v1838
        %v1884 = vpack.c.b16 %v1844, %v1839
        %v1885 = vpack.c.b16 %v1850, %v1845
        %v1886 = vpack.c.b16 %v1851, %v1846
        %v1887 = vpack.c.b16 %v1852, %v1847
        %v1888 = vpack.c.b16 %v1853, %v1848
        %v1889 = vpack.c.b16 %v1854, %v1849
        %v1890 = vpack.c.b16 %v1860, %v1855
        %v1891 = vpack.c.b16 %v1861, %v1856
        %v1892 = vpack.c.b16 %v1862, %v1857
        %v1893 = vpack.c.b16 %v1863, %v1858
        %v1894 = vpack.c.b16 %v1864, %v1859
        %v1895 = vpack.c.b16 %v1870, %v1865
        %v1896 = vpack.c.b16 %v1871, %v1866
        %v1897 = vpack.c.b16 %v1872, %v1867
        %v1898 = vpack.c.b16 %v1873, %v1868
        %v1899 = vpack.c.b16 %v1874, %v1869
        %v1900 = vpack.c.b16 %v1875, %v1875
        %v1901 = vpack.c.b16 %v1876, %v1876
        %v1902 = vpack.c.b16 %v1877, %v1877
        %v1903 = vpack.c.b16 %v1878, %v1878
        %v1904 = vpack.c.b16 %v1879, %v1879
        %v2010 = vunpack.c.l.b16 %v1721
        %v2011 = vunpack.c.l.b16 %v1722
        %v2012 = vunpack.c.l.b16 %v1723
        %v2013 = vunpack.c.l.b16 %v1724
        %v2014 = vunpack.c.l.b16 %v1725
        %v2015 = vunpack.c.l.b16 %v1726
        %v2016 = vunpack.c.l.b16 %v1727
        %v2017 = vunpack.c.l.b16 %v1728
        %v2018 = vunpack.c.l.b16 %v1729
        %v2019 = vunpack.c.l.b16 %v1730
        %v2020 = vunpack.c.l.b16 %v1731
        %v2021 = vunpack.c.l.b16 %v1732
        %v2022 = vunpack.c.l.b16 %v1733
        %v2023 = vunpack.c.l.b16 %v1734
        %v2024 = vunpack.c.l.b16 %v1735
        %v2025 = vunpack.c.l.b16 %v1736
        %v2026 = vunpack.c.l.b16 %v1737
        %v2027 = vunpack.c.l.b16 %v1738
        %v2028 = vunpack.c.l.b16 %v1739
        %v2029 = vunpack.c.l.b16 %v1740
        %v2030 = vunpack.c.l.b16 %v1741
        %v2031 = vunpack.c.l.b16 %v1742
        %v2032 = vunpack.c.l.b16 %v1743
        %v2033 = vunpack.c.l.b16 %v1744
        %v2034 = vunpack.c.l.b16 %v1745
        %v2035 = vunpack.c.l.b16 %v1746
        %v2036 = vunpack.c.l.b16 %v1747
        %v2037 = vunpack.c.l.b16 %v1748
        %v2038 = vunpack.c.l.b16 %v1749
        %v2039 = vunpack.c.l.b16 %v1750
        %v2040 = vunpack.c.l.b16 %v1751
        %v2041 = vunpack.c.l.b16 %v1752
        %v2042 = vunpack.c.l.b16 %v1753
        %v2043 = vunpack.c.l.b16 %v1754
        %v2044 = vunpack.c.l.b16 %v1755
        %v2045 = vunpack.c.l.b16 %v1756
        %v2046 = vunpack.c.l.b16 %v1757
        %v2047 = vunpack.c.l.b16 %v1758
        %v2048 = vunpack.c.l.b16 %v1759
        %v2049 = vunpack.c.l.b16 %v1760
        %v2050 = vunpack.c.l.b16 %v1761
        %v2051 = vunpack.c.l.b16 %v1762
        %v2052 = vunpack.c.l.b16 %v1763
        %v2053 = vunpack.c.l.b16 %v1764
        %v2054 = vunpack.c.l.b16 %v1765
        %v2055 = vunpack.c.l.b16 %v1766
        %v2056 = vunpack.c.l.b16 %v1767
        %v2057 = vunpack.c.l.b16 %v1768
        %v2058 = vunpack.c.l.b16 %v1769
        %v2059 = vunpack.c.l.b16 %v1770
        %v2060 = vunpack.c.l.b16 %v1771
        %v2061 = vunpack.c.l.b16 %v1772
        %v2062 = vunpack.c.l.b16 %v1773
        %v2063 = vunpack.c.l.b16 %v1774
        %v2064 = vunpack.c.l.b16 %v1775
        %v2065 = vunpack.c.l.b16 %v1776
        %v2066 = vunpack.c.l.b16 %v1777
        %v2067 = vunpack.c.l.b16 %v1778
        %v2068 = vunpack.c.l.b16 %v1779
        %v2069 = vunpack.c.l.b16 %v1780
        %v2070 = vunpack.c.l.b16 %v1781
        %v2071 = vunpack.c.l.b16 %v1782
        %v2072 = vunpack.c.l.b16 %v1783
        %v2073 = vunpack.c.l.b16 %v1784
        %v2074 = vunpack.c.l.b16 %v1785
        %v2075 = vunpack.c.l.b16 %v1786
        %v2076 = vunpack.c.l.b16 %v1787
        %v2077 = vunpack.c.l.b16 %v1788
        %v2078 = vunpack.c.l.b16 %v1789
        %v2079 = vunpack.c.l.b16 %v1790
        %v2080 = vunpack.c.l.b16 %v1791
        %v2081 = vunpack.c.l.b16 %v1792
        %v2082 = vunpack.c.l.b16 %v1793
        %v2083 = vunpack.c.l.b16 %v1794
        %v2084 = vunpack.c.l.b16 %v1795
        %v2085 = vunpack.c.l.b16 %v1796
        %v2086 = vunpack.c.l.b16 %v1797
        %v2087 = vunpack.c.l.b16 %v1798
        %v2088 = vunpack.c.l.b16 %v1799
        %v2089 = vunpack.c.l.b16 %v1800
        %v2090 = vpack.c.b16 %v2011, %v2010
        %v2091 = vpack.c.b16 %v2013, %v2012
        %v2092 = vpack.c.b16 %v2015, %v2014
        %v2093 = vpack.c.b16 %v2017, %v2016
        %v2094 = vpack.c.b16 %v2019, %v2018
        %v2095 = vpack.c.b16 %v2021, %v2020
        %v2096 = vpack.c.b16 %v2023, %v2022
        %v2097 = vpack.c.b16 %v2025, %v2024
        %v2098 = vpack.c.b16 %v2027, %v2026
        %v2099 = vpack.c.b16 %v2029, %v2028
        %v2100 = vpack.c.b16 %v2031, %v2030
        %v2101 = vpack.c.b16 %v2033, %v2032
        %v2102 = vpack.c.b16 %v2035, %v2034
        %v2103 = vpack.c.b16 %v2037, %v2036
        %v2104 = vpack.c.b16 %v2039, %v2038
        %v2105 = vpack.c.b16 %v2041, %v2040
        %v2106 = vpack.c.b16 %v2043, %v2042
        %v2107 = vpack.c.b16 %v2045, %v2044
        %v2108 = vpack.c.b16 %v2047, %v2046
        %v2109 = vpack.c.b16 %v2049, %v2048
        %v2110 = vpack.c.b16 %v2051, %v2050
        %v2111 = vpack.c.b16 %v2053, %v2052
        %v2112 = vpack.c.b16 %v2055, %v2054
        %v2113 = vpack.c.b16 %v2057, %v2056
        %v2114 = vpack.c.b16 %v2059, %v2058
        %v2115 = vpack.c.b16 %v2061, %v2060
        %v2116 = vpack.c.b16 %v2063, %v2062
        %v2117 = vpack.c.b16 %v2065, %v2064
        %v2118 = vpack.c.b16 %v2067, %v2066
        %v2119 = vpack.c.b16 %v2069, %v2068
        %v2120 = vpack.c.b16 %v2071, %v2070
        %v2121 = vpack.c.b16 %v2073, %v2072
        %v2122 = vpack.c.b16 %v2075, %v2074
        %v2123 = vpack.c.b16 %v2077, %v2076
        %v2124 = vpack.c.b16 %v2079, %v2078
        %v2125 = vpack.c.b16 %v2081, %v2080
        %v2126 = vpack.c.b16 %v2083, %v2082
        %v2127 = vpack.c.b16 %v2085, %v2084
        %v2128 = vpack.c.b16 %v2087, %v2086
        %v2129 = vpack.c.b16 %v2089, %v2088
        %2170 = vmatprep.subr.bf16.mxu0 0
        %2171 = vmatpush1.bf16.msra.mxu0 %v2090
        %2172 = vmatprep.subr.bf16.mxu0 0
        %2173 = vmatpush1.bf16.msra.mxu0 %v2091
        %2174 = vmatprep.subr.bf16.mxu0 0
        %2175 = vmatpush1.bf16.msra.mxu0 %v2092
        %2176 = vmatprep.subr.bf16.mxu0 0
        %2177 = vmatpush1.bf16.msra.mxu0 %v2093
        %2178 = vmatprep.subr.bf16.mxu0 0
        %2179 = vmatpush1.bf16.msra.mxu0 %v2094
        %2180 = vmatprep.subr.bf16.mxu0 0
        %2181 = vmatpush1.bf16.msra.mxu0 %v2095
        %2182 = vmatprep.subr.bf16.mxu0 0
        %2183 = vmatpush1.bf16.msra.mxu0 %v2096
        %2184 = vmatprep.subr.bf16.mxu0 0
        %2185 = vmatpush1.bf16.msra.mxu0 %v2097
        %2186 = vmatprep.subr.bf16.mxu0 0
        %2187 = vmatpush1.bf16.msra.mxu0 %v2098
        %2188 = vmatprep.subr.bf16.mxu0 0
        %2189 = vmatpush1.bf16.msra.mxu0 %v2099
        %2190 = vmatprep.subr.bf16.mxu0 0
        %2191 = vmatpush1.bf16.msra.mxu0 %v2100
        %2192 = vmatprep.subr.bf16.mxu0 0
        %2193 = vmatpush1.bf16.msra.mxu0 %v2101
        %2194 = vmatprep.subr.bf16.mxu0 0
        %2195 = vmatpush1.bf16.msra.mxu0 %v2102
        %2196 = vmatprep.subr.bf16.mxu0 0
        %2197 = vmatpush1.bf16.msra.mxu0 %v2103
        %2198 = vmatprep.subr.bf16.mxu0 0
        %2199 = vmatpush1.bf16.msra.mxu0 %v2104
        %2200 = vmatprep.subr.bf16.mxu0 0
        %2201 = vmatpush1.bf16.msra.mxu0 %v2105
        %2202 = vmatprep.mubr.bf16.mxu0 %v1881
        %2203 = vmatmul.mubr.bf16.gmra.mrb[0].mxu0 %v1880
        %v2204 = vpop.f32.mrb[0].mxu0
        %v2205 = vadd.f32 %v1806, %v2204
        %v2206 = vpop.f32.mrb[0].mxu0
        %v2207 = vpop.f32.mrb[0].mxu0
        %v2208 = vadd.f32 %v1806, %v2207
        %v2209 = vpop.f32.mrb[0].mxu0
        %2210 = vmatprep.mubr.bf16.mxu0 %v1886
        %2211 = vmatmul.mubr.bf16.gmra.mrb[0].mxu0 %v1885
        %v2212 = vpop.f32.mrb[0].mxu0
        %v2213 = vadd.f32 %v1806, %v2212
        %v2214 = vpop.f32.mrb[0].mxu0
        %v2215 = vpop.f32.mrb[0].mxu0
        %v2216 = vadd.f32 %v1806, %v2215
        %v2217 = vpop.f32.mrb[0].mxu0
        %2218 = vmatprep.mubr.bf16.mxu0 %v1891
        %2219 = vmatmul.mubr.bf16.gmra.mrb[0].mxu0 %v1890
        %v2220 = vpop.f32.mrb[0].mxu0
        %v2221 = vadd.f32 %v1806, %v2220
        %v2222 = vpop.f32.mrb[0].mxu0
        %v2223 = vpop.f32.mrb[0].mxu0
        %v2224 = vadd.f32 %v1806, %v2223
        %v2225 = vpop.f32.mrb[0].mxu0
        %2226 = vmatprep.mubr.bf16.mxu0 %v1896
        %2227 = vmatmul.mubr.bf16.gmra.mrb[0].mxu0 %v1895
        %v2228 = vpop.f32.mrb[0].mxu0
        %v2229 = vadd.f32 %v1806, %v2228
        %v2230 = vpop.f32.mrb[0].mxu0
        %v2231 = vpop.f32.mrb[0].mxu0
        %v2232 = vadd.f32 %v1806, %v2231
        %v2233 = vpop.f32.mrb[0].mxu0
        %2234 = vmatprep.mubr.bf16.mxu0 %v1901
        %2235 = vmatmul.mubr.bf16.gmra.mrb[0].mxu0 %v1900
        %v2236 = vpop.f32.mrb[0].mxu0
        %v2237 = vadd.f32 %v1806, %v2236
        %v2238 = vpop.f32.mrb[0].mxu0
        %v2239 = vpop.f32.mrb[0].mxu0
        %v2240 = vpop.f32.mrb[0].mxu0
        %2241 = vdwg.mxu0
        %2242 = vmatprep.subr.bf16.mxu0 0
        %2243 = vmatpush1.bf16.msra.mxu0 %v2106
        %2244 = vmatprep.subr.bf16.mxu0 0
        %2245 = vmatpush1.bf16.msra.mxu0 %v2107
        %2246 = vmatprep.subr.bf16.mxu0 0
        %2247 = vmatpush1.bf16.msra.mxu0 %v2108
        %2248 = vmatprep.subr.bf16.mxu0 0
        %2249 = vmatpush1.bf16.msra.mxu0 %v2109
        %2250 = vmatprep.subr.bf16.mxu0 0
        %2251 = vmatpush1.bf16.msra.mxu0 %v2110
        %2252 = vmatprep.subr.bf16.mxu0 0
        %2253 = vmatpush1.bf16.msra.mxu0 %v2111
        %2254 = vmatprep.subr.bf16.mxu0 0
        %2255 = vmatpush1.bf16.msra.mxu0 %v2112
        %2256 = vmatprep.subr.bf16.mxu0 0
        %2257 = vmatpush1.bf16.msra.mxu0 %v2113
        %2258 = vmatprep.subr.bf16.mxu0 0
        %2259 = vmatpush1.bf16.msra.mxu0 %v2114
        %2260 = vmatprep.subr.bf16.mxu0 0
        %2261 = vmatpush1.bf16.msra.mxu0 %v2115
        %2262 = vmatprep.subr.bf16.mxu0 0
        %2263 = vmatpush1.bf16.msra.mxu0 %v2116
        %2264 = vmatprep.subr.bf16.mxu0 0
        %2265 = vmatpush1.bf16.msra.mxu0 %v2117
        %2266 = vmatprep.subr.bf16.mxu0 0
        %2267 = vmatpush1.bf16.msra.mxu0 %v2118
        %2268 = vmatprep.subr.bf16.mxu0 0
        %2269 = vmatpush1.bf16.msra.mxu0 %v2119
        %2270 = vmatprep.subr.bf16.mxu0 0
        %2271 = vmatpush1.bf16.msra.mxu0 %v2120
        %2272 = vmatprep.subr.bf16.mxu0 0
        %2273 = vmatpush1.bf16.msra.mxu0 %v2121
        %2274 = vmatprep.mubr.bf16.mxu0 %v1883
        %2275 = vmatmul.mubr.bf16.gmra.mrb[0].mxu0 %v1882
        %v2276 = vpop.f32.mrb[0].mxu0
        %v2277 = vadd.f32 %v2205, %v2276
        %v2278 = vpop.f32.mrb[0].mxu0
        %v2279 = vpop.f32.mrb[0].mxu0
        %v2280 = vadd.f32 %v2208, %v2279
        %v2281 = vpop.f32.mrb[0].mxu0
        %2282 = vmatprep.mubr.bf16.mxu0 %v1888
        %2283 = vmatmul.mubr.bf16.gmra.mrb[0].mxu0 %v1887
        %v2284 = vpop.f32.mrb[0].mxu0
        %v2285 = vadd.f32 %v2213, %v2284
        %v2286 = vpop.f32.mrb[0].mxu0
        %v2287 = vpop.f32.mrb[0].mxu0
        %v2288 = vadd.f32 %v2216, %v2287
        %v2289 = vpop.f32.mrb[0].mxu0
        %2290 = vmatprep.mubr.bf16.mxu0 %v1893
        %2291 = vmatmul.mubr.bf16.gmra.mrb[0].mxu0 %v1892
        %v2292 = vpop.f32.mrb[0].mxu0
        %v2293 = vadd.f32 %v2221, %v2292
        %v2294 = vpop.f32.mrb[0].mxu0
        %v2295 = vpop.f32.mrb[0].mxu0
        %v2296 = vadd.f32 %v2224, %v2295
        %v2297 = vpop.f32.mrb[0].mxu0
        %2298 = vmatprep.mubr.bf16.mxu0 %v1898
        %2299 = vmatmul.mubr.bf16.gmra.mrb[0].mxu0 %v1897
        %v2300 = vpop.f32.mrb[0].mxu0
        %v2301 = vadd.f32 %v2229, %v2300
        %v2302 = vpop.f32.mrb[0].mxu0
        %v2303 = vpop.f32.mrb[0].mxu0
        %v2304 = vadd.f32 %v2232, %v2303
        %v2305 = vpop.f32.mrb[0].mxu0
        %2306 = vmatprep.mubr.bf16.mxu0 %v1903
        %2307 = vmatmul.mubr.bf16.gmra.mrb[0].mxu0 %v1902
        %v2308 = vpop.f32.mrb[0].mxu0
        %v2309 = vadd.f32 %v2237, %v2308
        %v2310 = vpop.f32.mrb[0].mxu0
        %v2311 = vpop.f32.mrb[0].mxu0
        %v2312 = vpop.f32.mrb[0].mxu0
        %2313 = vdwg.mxu0
        %2314 = vmatprep.subr.bf16.mxu0 0
        %2315 = vmatpush1.bf16.msra.mxu0 %v2122
        %2316 = vmatprep.subr.bf16.mxu0 0
        %2317 = vmatpush1.bf16.msra.mxu0 %v2123
        %2318 = vmatprep.subr.bf16.mxu0 0
        %2319 = vmatpush1.bf16.msra.mxu0 %v2124
        %2320 = vmatprep.subr.bf16.mxu0 0
        %2321 = vmatpush1.bf16.msra.mxu0 %v2125
        %2322 = vmatprep.subr.bf16.mxu0 0
        %2323 = vmatpush1.bf16.msra.mxu0 %v2126
        %2324 = vmatprep.subr.bf16.mxu0 0
        %2325 = vmatpush1.bf16.msra.mxu0 %v2127
        %2326 = vmatprep.subr.bf16.mxu0 0
        %2327 = vmatpush1.bf16.msra.mxu0 %v2128
        %2328 = vmatprep.subr.bf16.mxu0 0
        %2329 = vmatpush1.bf16.msra.mxu0 %v2129
        %2330 = vmatprep.subr.bf16.mxu0 0
        %2331 = vmatpush1.bf16.msra.mxu0 0
        %2332 = vmatprep.subr.bf16.mxu0 0
        %2333 = vmatpush1.bf16.msra.mxu0 0
        %2334 = vmatprep.subr.bf16.mxu0 0
        %2335 = vmatpush1.bf16.msra.mxu0 0
        %2336 = vmatprep.subr.bf16.mxu0 0
        %2337 = vmatpush1.bf16.msra.mxu0 0
        %2338 = vmatprep.subr.bf16.mxu0 0
        %2339 = vmatpush1.bf16.msra.mxu0 0
        %2340 = vmatprep.subr.bf16.mxu0 0
        %2341 = vmatpush1.bf16.msra.mxu0 0
        %2342 = vmatprep.subr.bf16.mxu0 0
        %2343 = vmatpush1.bf16.msra.mxu0 0
        %2344 = vmatprep.subr.bf16.mxu0 0
        %2345 = vmatpush1.bf16.msra.mxu0 0
        %2346 = vmatprep.mubr.bf16.mxu0 0
        %2347 = vmatmul.mubr.bf16.gmra.mrb[0].mxu0 %v1884
        %v2348 = vpop.f32.mrb[0].mxu0
        %v2349 = vadd.f32 %v2277, %v2348
        %v2350 = vpop.f32.mrb[0].mxu0
        %v2351 = vpop.f32.mrb[0].mxu0
        %v2352 = vadd.f32 %v2280, %v2351
        %v2353 = vpop.f32.mrb[0].mxu0
        %2354 = vmatprep.mubr.bf16.mxu0 0
        %2355 = vmatmul.mubr.bf16.gmra.mrb[0].mxu0 %v1889
        %v2356 = vpop.f32.mrb[0].mxu0
        %v2357 = vadd.f32 %v2285, %v2356
        %v2358 = vpop.f32.mrb[0].mxu0
        %v2359 = vpop.f32.mrb[0].mxu0
        %v2360 = vadd.f32 %v2288, %v2359
        %v2361 = vpop.f32.mrb[0].mxu0
        %2362 = vmatprep.mubr.bf16.mxu0 0
        %2363 = vmatmul.mubr.bf16.gmra.mrb[0].mxu0 %v1894
        %v2364 = vpop.f32.mrb[0].mxu0
        %v2365 = vadd.f32 %v2293, %v2364
        %v2366 = vpop.f32.mrb[0].mxu0
        %v2367 = vpop.f32.mrb[0].mxu0
        %v2368 = vadd.f32 %v2296, %v2367
        %v2369 = vpop.f32.mrb[0].mxu0
        %2370 = vmatprep.mubr.bf16.mxu0 0
        %2371 = vmatmul.mubr.bf16.gmra.mrb[0].mxu0 %v1899
        %v2372 = vpop.f32.mrb[0].mxu0
        %v2373 = vadd.f32 %v2301, %v2372
        %v2374 = vpop.f32.mrb[0].mxu0
        %v2375 = vpop.f32.mrb[0].mxu0
        %v2376 = vadd.f32 %v2304, %v2375
        %v2377 = vpop.f32.mrb[0].mxu0
        %2378 = vmatprep.mubr.bf16.mxu0 0
        %2379 = vmatmul.mubr.bf16.gmra.mrb[0].mxu0 %v1904
        %v2380 = vpop.f32.mrb[0].mxu0
        %v2381 = vadd.f32 %v2309, %v2380
        %v2382 = vpop.f32.mrb[0].mxu0
        %v2383 = vpop.f32.mrb[0].mxu0
        %v2384 = vpop.f32.mrb[0].mxu0
        %2385 = vdwg.mxu0
        %v2386 = vmax.f32 %v2349, 0.0
        %v2387 = vmax.f32 %v2352, 0.0
        %v2388 = vmax.f32 %v2357, 0.0
        %v2389 = vmax.f32 %v2360, 0.0
        %v2390 = vmax.f32 %v2365, 0.0
        %v2391 = vmax.f32 %v2368, 0.0
        %v2392 = vmax.f32 %v2373, 0.0
        %v2393 = vmax.f32 %v2376, 0.0
        %v2394 = vmax.f32 %v2381, 0.0
        %s2395 = ssub.s32 %s1303, 2
        %v2396 = vstv %s2395
        %v2397 = vadd.s32 %v2396, %v1306
        %v2398 = vadd.s32 %v2396, %v1307
        %v2399 = vadd.s32 %v2396, %v1308
        %v2400 = vadd.s32 %v2396, %v1309
        %v2401 = vadd.s32 %v2396, %v1310
        %v2402 = vadd.s32 %v2396, %v1311
        %v2403 = vadd.s32 %v2396, %v1312
        %v2404 = vadd.s32 %v2396, %v1313
        %v2405 = vadd.s32 %v2396, %v1314
        %vm2406 = vcmp.ge.s32.totalorder %v2397, 0
        %vm2407 = vcmp.ge.s32.totalorder %v2398, 0
        %vm2408 = vcmp.ge.s32.totalorder %v2399, 0
        %vm2409 = vcmp.ge.s32.totalorder %v2400, 0
        %vm2410 = vcmp.ge.s32.totalorder %v2401, 0
        %vm2411 = vcmp.ge.s32.totalorder %v2402, 0
        %vm2412 = vcmp.ge.s32.totalorder %v2403, 0
        %vm2413 = vcmp.ge.s32.totalorder %v2404, 0
        %vm2414 = vcmp.ge.s32.totalorder %v2405, 0
        %vm2415 = vcmp.lt.s32.totalorder %v2397, 100
        %vm2416 = vcmp.lt.s32.totalorder %v2398, 100
        %vm2417 = vcmp.lt.s32.totalorder %v2399, 100
        %vm2418 = vcmp.lt.s32.totalorder %v2400, 100
        %vm2419 = vcmp.lt.s32.totalorder %v2401, 100
        %vm2420 = vcmp.lt.s32.totalorder %v2402, 100
        %vm2421 = vcmp.lt.s32.totalorder %v2403, 100
        %vm2422 = vcmp.lt.s32.totalorder %v2404, 100
        %vm2423 = vcmp.lt.s32.totalorder %v2405, 100
        %vm2424 = vmand %vm2406, %vm2415
        %vm2425 = vmand %vm2407, %vm2416
        %vm2426 = vmand %vm2408, %vm2417
        %vm2427 = vmand %vm2409, %vm2418
        %vm2428 = vmand %vm2410, %vm2419
        %vm2429 = vmand %vm2411, %vm2420
        %vm2430 = vmand %vm2412, %vm2421
        %vm2431 = vmand %vm2413, %vm2422
        %vm2432 = vmand %vm2414, %vm2423
        %v2433 = vsel %vm2424, 1, 0
        %v2434 = vsel %vm2425, 1, 0
        %v2435 = vsel %vm2426, 1, 0
        %v2436 = vsel %vm2427, 1, 0
        %v2437 = vsel %vm2428, 1, 0
        %v2438 = vsel %vm2429, 1, 0
        %v2439 = vsel %vm2430, 1, 0
        %v2440 = vsel %vm2431, 1, 0
        %v2441 = vsel %vm2432, 1, 0
        %vm2442 = vcmp.eq.s32.totalorder %v2433, 1
        %vm2443 = vcmp.eq.s32.totalorder %v2434, 1
        %vm2444 = vcmp.eq.s32.totalorder %v2435, 1
        %vm2445 = vcmp.eq.s32.totalorder %v2436, 1
        %vm2446 = vcmp.eq.s32.totalorder %v2437, 1
        %vm2447 = vcmp.eq.s32.totalorder %v2438, 1
        %vm2448 = vcmp.eq.s32.totalorder %v2439, 1
        %vm2449 = vcmp.eq.s32.totalorder %v2440, 1
        %vm2450 = vcmp.eq.s32.totalorder %v2441, 1
        %v2451 = vsel %vm2442, %v2386, 0.0
        %v2452 = vsel %vm2443, %v2387, 0.0
        %v2453 = vsel %vm2444, %v2388, 0.0
        %v2454 = vsel %vm2445, %v2389, 0.0
        %v2455 = vsel %vm2446, %v2390, 0.0
        %v2456 = vsel %vm2447, %v2391, 0.0
        %v2457 = vsel %vm2448, %v2392, 0.0
        %v2458 = vsel %vm2449, %v2393, 0.0
        %v2459 = vsel %vm2450, %v2394, 0.0
        %v2460 = vpack.c.bf16 %v2452, %v2451
        %v2461 = vpack.c.bf16 %v2454, %v2453
        %v2462 = vpack.c.bf16 %v2456, %v2455
        %v2463 = vpack.c.bf16 %v2458, %v2457
        %v2464 = vpack.c.bf16 %v2459, %v2459
        %v2469 = vunpack.c.l.b16 %v2460
        %v2470 = vunpack.c.h.b16 %v2460
        %v2471 = vunpack.c.l.b16 %v2461
        %v2472 = vunpack.c.h.b16 %v2461
        %v2473 = vunpack.c.l.b16 %v2462
        %v2474 = vunpack.c.h.b16 %v2462
        %v2475 = vunpack.c.l.b16 %v2463
        %v2476 = vunpack.c.h.b16 %v2463
        %v2477 = vpack.c.b16 %v2469, %v2469
        %v2478 = vpack.c.b16 %v2470, %v2470
        %v2479 = vpack.c.b16 %v2471, %v2471
        %v2480 = vpack.c.b16 %v2472, %v2472
        %v2481 = vpack.c.b16 %v2473, %v2473
        %v2482 = vpack.c.b16 %v2474, %v2474
        %v2483 = vpack.c.b16 %v2475, %v2475
        %v2484 = vpack.c.b16 %v2476, %v2476
        %2493 = vst [vmem:[#allocation3] sm:$0xf] %v2477
        %2494 = vst [vmem:[#allocation3 + $0x14] sm:$0xf] %v2478
        %2495 = vst [vmem:[#allocation3 + $0x28] sm:$0xf] %v2479
        %2496 = vst [vmem:[#allocation3 + $0x3c] sm:$0xf] %v2480
        %2497 = vst [vmem:[#allocation3 + $0x50] sm:$0xf] %v2481
        %2498 = vst [vmem:[#allocation3 + $0x64] sm:$0xf] %v2482
        %2499 = vst [vmem:[#allocation3 + $0x78] sm:$0xf] %v2483
        %2500 = vst [vmem:[#allocation3 + $0x8c] sm:$0xf] %v2484
        %v2502 = vunpack.c.l.b16 %v2464
        %v2503 = vpack.c.b16 %v2502, %v2502
        %v2505 = vshrl.u32 %v2477, 16
        %v2507 = vrot.slane %v2505, 4
        %v2508 = vshll.u32 %v2477, 16
        %v2510 = vrot.slane %v2508, 5
        %v2511 = vor.u32 %v2507, %v2510
        %v2512 = vrot.slane %v2511, 4
        %v2514 = vshll.u32 %v2478, 16
        %v2516 = vrot.slane %v2514, 5
        %v2517 = vsel %vm1427, %v2512, %v2516
        %v2518 = vshrl.u32 %v2478, 16
        %v2520 = vrot.slane %v2518, 4
        %v2521 = vor.u32 %v2520, %v2516
        %v2522 = vrot.slane %v2521, 4
        %v2524 = vshll.u32 %v2479, 16
        %v2526 = vrot.slane %v2524, 5
        %v2527 = vsel %vm1427, %v2522, %v2526
        %v2528 = vshrl.u32 %v2479, 16
        %v2530 = vrot.slane %v2528, 4
        %v2531 = vor.u32 %v2530, %v2526
        %v2532 = vrot.slane %v2531, 4
        %v2534 = vshll.u32 %v2480, 16
        %v2536 = vrot.slane %v2534, 5
        %v2537 = vsel %vm1427, %v2532, %v2536
        %v2538 = vshrl.u32 %v2480, 16
        %v2540 = vrot.slane %v2538, 4
        %v2541 = vor.u32 %v2540, %v2536
        %v2542 = vrot.slane %v2541, 4
        %v2544 = vshll.u32 %v2481, 16
        %v2546 = vrot.slane %v2544, 5
        %v2547 = vsel %vm1427, %v2542, %v2546
        %v2548 = vshrl.u32 %v2481, 16
        %v2550 = vrot.slane %v2548, 4
        %v2551 = vor.u32 %v2550, %v2546
        %v2552 = vrot.slane %v2551, 4
        %v2554 = vshll.u32 %v2482, 16
        %v2556 = vrot.slane %v2554, 5
        %v2557 = vsel %vm1427, %v2552, %v2556
        %v2558 = vshrl.u32 %v2482, 16
        %v2560 = vrot.slane %v2558, 4
        %v2561 = vor.u32 %v2560, %v2556
        %v2562 = vrot.slane %v2561, 4
        %v2564 = vshll.u32 %v2483, 16
        %v2566 = vrot.slane %v2564, 5
        %v2567 = vsel %vm1427, %v2562, %v2566
        %v2568 = vshrl.u32 %v2483, 16
        %v2570 = vrot.slane %v2568, 4
        %v2571 = vor.u32 %v2570, %v2566
        %v2572 = vrot.slane %v2571, 4
        %v2574 = vshll.u32 %v2484, 16
        %v2576 = vrot.slane %v2574, 5
        %v2577 = vsel %vm1427, %v2572, %v2576
        %v2578 = vshrl.u32 %v2484, 16
        %v2580 = vrot.slane %v2578, 4
        %v2581 = vor.u32 %v2580, %v2576
        %v2582 = vrot.slane %v2581, 4
        %v2584 = vshll.u32 %v2503, 16
        %v2586 = vrot.slane %v2584, 5
        %v2587 = vsel %vm1427, %v2582, %v2586
        %2596 = vst [vmem:[#allocation3 + $0x4] sm:$0xf] %v2517
        %2597 = vst [vmem:[#allocation3 + $0x18] sm:$0xf] %v2527
        %2598 = vst [vmem:[#allocation3 + $0x2c] sm:$0xf] %v2537
        %2599 = vst [vmem:[#allocation3 + $0x40] sm:$0xf] %v2547
        %2600 = vst [vmem:[#allocation3 + $0x54] sm:$0xf] %v2557
        %2601 = vst [vmem:[#allocation3 + $0x68] sm:$0xf] %v2567
        %2602 = vst [vmem:[#allocation3 + $0x7c] sm:$0xf] %v2577
        %2603 = vst [vmem:[#allocation3 + $0x90] sm:$0xf] %v2587
        %v2604 = vrot.slane %v2477, 5
        %v2605 = vrot.slane %v2604, 4
        %v2606 = vrot.slane %v2478, 5
        %v2607 = vsel %vm1537, %v2605, %v2606
        %v2608 = vrot.slane %v2606, 4
        %v2609 = vrot.slane %v2479, 5
        %v2610 = vsel %vm1537, %v2608, %v2609
        %v2611 = vrot.slane %v2609, 4
        %v2612 = vrot.slane %v2480, 5
        %v2613 = vsel %vm1537, %v2611, %v2612
        %v2614 = vrot.slane %v2612, 4
        %v2615 = vrot.slane %v2481, 5
        %v2616 = vsel %vm1537, %v2614, %v2615
        %v2617 = vrot.slane %v2615, 4
        %v2618 = vrot.slane %v2482, 5
        %v2619 = vsel %vm1537, %v2617, %v2618
        %v2620 = vrot.slane %v2618, 4
        %v2621 = vrot.slane %v2483, 5
        %v2622 = vsel %vm1537, %v2620, %v2621
        %v2623 = vrot.slane %v2621, 4
        %v2624 = vrot.slane %v2484, 5
        %v2625 = vsel %vm1537, %v2623, %v2624
        %v2626 = vrot.slane %v2624, 4
        %v2627 = vrot.slane %v2503, 5
        %v2628 = vsel %vm1537, %v2626, %v2627
        %2637 = vst [vmem:[#allocation3 + $0x8] sm:$0xf] %v2607
        %2638 = vst [vmem:[#allocation3 + $0x1c] sm:$0xf] %v2610
        %2639 = vst [vmem:[#allocation3 + $0x30] sm:$0xf] %v2613
        %2640 = vst [vmem:[#allocation3 + $0x44] sm:$0xf] %v2616
        %2641 = vst [vmem:[#allocation3 + $0x58] sm:$0xf] %v2619
        %2642 = vst [vmem:[#allocation3 + $0x6c] sm:$0xf] %v2622
        %2643 = vst [vmem:[#allocation3 + $0x80] sm:$0xf] %v2625
        %2644 = vst [vmem:[#allocation3 + $0x94] sm:$0xf] %v2628
        %v2645 = vrot.slane %v2505, 5
        %v2646 = vrot.slane %v2508, 6
        %v2647 = vor.u32 %v2645, %v2646
        %v2648 = vrot.slane %v2647, 4
        %v2649 = vrot.slane %v2518, 5
        %v2650 = vrot.slane %v2514, 6
        %v2651 = vor.u32 %v2649, %v2650
        %v2652 = vsel %vm1584, %v2648, %v2651
        %v2653 = vrot.slane %v2651, 4
        %v2654 = vrot.slane %v2528, 5
        %v2655 = vrot.slane %v2524, 6
        %v2656 = vor.u32 %v2654, %v2655
        %v2657 = vsel %vm1584, %v2653, %v2656
        %v2658 = vrot.slane %v2656, 4
        %v2659 = vrot.slane %v2538, 5
        %v2660 = vrot.slane %v2534, 6
        %v2661 = vor.u32 %v2659, %v2660
        %v2662 = vsel %vm1584, %v2658, %v2661
        %v2663 = vrot.slane %v2661, 4
        %v2664 = vrot.slane %v2548, 5
        %v2665 = vrot.slane %v2544, 6
        %v2666 = vor.u32 %v2664, %v2665
        %v2667 = vsel %vm1584, %v2663, %v2666
        %v2668 = vrot.slane %v2666, 4
        %v2669 = vrot.slane %v2558, 5
        %v2670 = vrot.slane %v2554, 6
        %v2671 = vor.u32 %v2669, %v2670
        %v2672 = vsel %vm1584, %v2668, %v2671
        %v2673 = vrot.slane %v2671, 4
        %v2674 = vrot.slane %v2568, 5
        %v2675 = vrot.slane %v2564, 6
        %v2676 = vor.u32 %v2674, %v2675
        %v2677 = vsel %vm1584, %v2673, %v2676
        %v2678 = vrot.slane %v2676, 4
        %v2679 = vrot.slane %v2578, 5
        %v2680 = vrot.slane %v2574, 6
        %v2681 = vor.u32 %v2679, %v2680
        %v2682 = vsel %vm1584, %v2678, %v2681
        %v2683 = vrot.slane %v2681, 4
        %v2684 = vshrl.u32 %v2503, 16
        %v2686 = vrot.slane %v2684, 5
        %v2687 = vrot.slane %v2584, 6
        %v2688 = vor.u32 %v2686, %v2687
        %v2689 = vsel %vm1584, %v2683, %v2688
        %2698 = vst [vmem:[#allocation3 + $0xc] sm:$0xf] %v2652
        %2699 = vst [vmem:[#allocation3 + $0x20] sm:$0xf] %v2657
        %2700 = vst [vmem:[#allocation3 + $0x34] sm:$0xf] %v2662
        %2701 = vst [vmem:[#allocation3 + $0x48] sm:$0xf] %v2667
        %2702 = vst [vmem:[#allocation3 + $0x5c] sm:$0xf] %v2672
        %2703 = vst [vmem:[#allocation3 + $0x70] sm:$0xf] %v2677
        %2704 = vst [vmem:[#allocation3 + $0x84] sm:$0xf] %v2682
        %2705 = vst [vmem:[#allocation3 + $0x98] sm:$0xf] %v2689
        %v2706 = vrot.slane %v2477, 6
        %v2707 = vrot.slane %v2706, 4
        %v2708 = vrot.slane %v2478, 6
        %v2709 = vsel %vm1649, %v2707, %v2708
        %v2710 = vrot.slane %v2708, 4
        %v2711 = vrot.slane %v2479, 6
        %v2712 = vsel %vm1649, %v2710, %v2711
        %v2713 = vrot.slane %v2711, 4
        %v2714 = vrot.slane %v2480, 6
        %v2715 = vsel %vm1649, %v2713, %v2714
        %v2716 = vrot.slane %v2714, 4
        %v2717 = vrot.slane %v2481, 6
        %v2718 = vsel %vm1649, %v2716, %v2717
        %v2719 = vrot.slane %v2717, 4
        %v2720 = vrot.slane %v2482, 6
        %v2721 = vsel %vm1649, %v2719, %v2720
        %v2722 = vrot.slane %v2720, 4
        %v2723 = vrot.slane %v2483, 6
        %v2724 = vsel %vm1649, %v2722, %v2723
        %v2725 = vrot.slane %v2723, 4
        %v2726 = vrot.slane %v2484, 6
        %v2727 = vsel %vm1649, %v2725, %v2726
        %v2728 = vrot.slane %v2726, 4
        %v2729 = vrot.slane %v2503, 6
        %v2730 = vsel %vm1649, %v2728, %v2729
        %2739 = vst [vmem:[#allocation3 + $0x10] sm:$0xf] %v2709
        %2740 = vst [vmem:[#allocation3 + $0x24] sm:$0xf] %v2712
        %2741 = vst [vmem:[#allocation3 + $0x38] sm:$0xf] %v2715
        %2742 = vst [vmem:[#allocation3 + $0x4c] sm:$0xf] %v2718
        %2743 = vst [vmem:[#allocation3 + $0x60] sm:$0xf] %v2721
        %2744 = vst [vmem:[#allocation3 + $0x74] sm:$0xf] %v2724
        %2745 = vst [vmem:[#allocation3 + $0x88] sm:$0xf] %v2727
        %2746 = vst [vmem:[#allocation3 + $0x9c] sm:$0xf] %v2730
        %v2747 = vld [vmem:[#allocation3] sm:$0xff]
        %v2748 = vld [vmem:[#allocation3 + $0x8] sm:$0xff]
        %v2749 = vld [vmem:[#allocation3 + $0x10] sm:$0xf]
        %v2750 = vld [vmem:[#allocation3 + $0x14] sm:$0xff]
        %v2751 = vld [vmem:[#allocation3 + $0x1c] sm:$0xff]
        %v2752 = vld [vmem:[#allocation3 + $0x24] sm:$0xf]
        %v2753 = vld [vmem:[#allocation3 + $0x28] sm:$0xff]
        %v2754 = vld [vmem:[#allocation3 + $0x30] sm:$0xff]
        %v2755 = vld [vmem:[#allocation3 + $0x38] sm:$0xf]
        %v2756 = vld [vmem:[#allocation3 + $0x3c] sm:$0xff]
        %v2757 = vld [vmem:[#allocation3 + $0x44] sm:$0xff]
        %v2758 = vld [vmem:[#allocation3 + $0x4c] sm:$0xf]
        %v2759 = vld [vmem:[#allocation3 + $0x50] sm:$0xff]
        %v2760 = vld [vmem:[#allocation3 + $0x58] sm:$0xff]
        %v2761 = vld [vmem:[#allocation3 + $0x60] sm:$0xf]
        %v2762 = vld [vmem:[#allocation3 + $0x64] sm:$0xff]
        %v2763 = vld [vmem:[#allocation3 + $0x6c] sm:$0xff]
        %v2764 = vld [vmem:[#allocation3 + $0x74] sm:$0xf]
        %v2765 = vld [vmem:[#allocation3 + $0x78] sm:$0xff]
        %v2766 = vld [vmem:[#allocation3 + $0x80] sm:$0xff]
        %v2767 = vld [vmem:[#allocation3 + $0x88] sm:$0xf]
        %v2768 = vld [vmem:[#allocation3 + $0x8c] sm:$0xff]
        %v2769 = vld [vmem:[#allocation3 + $0x94] sm:$0xff]
        %v2770 = vld [vmem:[#allocation3 + $0x9c] sm:$0xf]
        %v2771 = vld [vmem:[#allocation12] sm:$0xf]
        %v2772 = vld [vmem:[#allocation12 + $0x4] sm:$0xf]
        %v2773 = vld [vmem:[#allocation12 + $0x8] sm:$0xf]
        %v2774 = vld [vmem:[#allocation12 + $0xc] sm:$0xf]
        %v2775 = vld [vmem:[#allocation12 + $0x10] sm:$0xf]
        %v2776 = vld [vmem:[#allocation12 + $0x14] sm:$0xf]
        %v2777 = vld [vmem:[#allocation12 + $0x18] sm:$0xf]
        %v2778 = vld [vmem:[#allocation12 + $0x1c] sm:$0xf]
        %v2779 = vld [vmem:[#allocation12 + $0x20] sm:$0xf]
        %v2780 = vld [vmem:[#allocation12 + $0x24] sm:$0xf]
        %v2781 = vld [vmem:[#allocation12 + $0x28] sm:$0xf]
        %v2782 = vld [vmem:[#allocation12 + $0x2c] sm:$0xf]
        %v2783 = vld [vmem:[#allocation12 + $0x30] sm:$0xf]
        %v2784 = vld [vmem:[#allocation12 + $0x34] sm:$0xf]
        %v2785 = vld [vmem:[#allocation12 + $0x38] sm:$0xf]
        %v2786 = vld [vmem:[#allocation12 + $0x3c] sm:$0xf]
        %v2787 = vld [vmem:[#allocation12 + $0x40] sm:$0xf]
        %v2788 = vld [vmem:[#allocation12 + $0x44] sm:$0xf]
        %v2789 = vld [vmem:[#allocation12 + $0x48] sm:$0xf]
        %v2790 = vld [vmem:[#allocation12 + $0x4c] sm:$0xf]
        %v2791 = vld [vmem:[#allocation12 + $0x50] sm:$0xf]
        %v2792 = vld [vmem:[#allocation12 + $0x54] sm:$0xf]
        %v2793 = vld [vmem:[#allocation12 + $0x58] sm:$0xf]
        %v2794 = vld [vmem:[#allocation12 + $0x5c] sm:$0xf]
        %v2795 = vld [vmem:[#allocation12 + $0x60] sm:$0xf]
        %v2796 = vld [vmem:[#allocation12 + $0x64] sm:$0xf]
        %v2797 = vld [vmem:[#allocation12 + $0x68] sm:$0xf]
        %v2798 = vld [vmem:[#allocation12 + $0x6c] sm:$0xf]
        %v2799 = vld [vmem:[#allocation12 + $0x70] sm:$0xf]
        %v2800 = vld [vmem:[#allocation12 + $0x74] sm:$0xf]
        %v2801 = vld [vmem:[#allocation12 + $0x78] sm:$0xf]
        %v2802 = vld [vmem:[#allocation12 + $0x7c] sm:$0xf]
        %v2803 = vld [vmem:[#allocation12 + $0x80] sm:$0xf]
        %v2804 = vld [vmem:[#allocation12 + $0x84] sm:$0xf]
        %v2805 = vld [vmem:[#allocation12 + $0x88] sm:$0xf]
        %v2806 = vld [vmem:[#allocation12 + $0x8c] sm:$0xf]
        %v2807 = vld [vmem:[#allocation12 + $0x90] sm:$0xf]
        %v2808 = vld [vmem:[#allocation12 + $0x94] sm:$0xf]
        %v2809 = vld [vmem:[#allocation12 + $0x98] sm:$0xf]
        %v2810 = vld [vmem:[#allocation12 + $0x9c] sm:$0xf]
        %v2811 = vld [vmem:[#allocation12 + $0xa0] sm:$0xf]
        %v2812 = vld [vmem:[#allocation12 + $0xa4] sm:$0xf]
        %v2813 = vld [vmem:[#allocation12 + $0xa8] sm:$0xf]
        %v2814 = vld [vmem:[#allocation12 + $0xac] sm:$0xf]
        %v2815 = vld [vmem:[#allocation12 + $0xb0] sm:$0xf]
        %v2816 = vld [vmem:[#allocation12 + $0xb4] sm:$0xf]
        %v2817 = vld [vmem:[#allocation12 + $0xb8] sm:$0xf]
        %v2818 = vld [vmem:[#allocation12 + $0xbc] sm:$0xf]
        %v2819 = vld [vmem:[#allocation12 + $0xc0] sm:$0xf]
        %v2820 = vld [vmem:[#allocation12 + $0xc4] sm:$0xf]
        %v2821 = vld [vmem:[#allocation12 + $0xc8] sm:$0xf]
        %v2822 = vld [vmem:[#allocation12 + $0xcc] sm:$0xf]
        %v2823 = vld [vmem:[#allocation12 + $0xd0] sm:$0xf]
        %v2824 = vld [vmem:[#allocation12 + $0xd4] sm:$0xf]
        %v2825 = vld [vmem:[#allocation12 + $0xd8] sm:$0xf]
        %v2826 = vld [vmem:[#allocation12 + $0xdc] sm:$0xf]
        %v2827 = vld [vmem:[#allocation12 + $0xe0] sm:$0xf]
        %v2828 = vld [vmem:[#allocation12 + $0xe4] sm:$0xf]
        %v2829 = vld [vmem:[#allocation12 + $0xe8] sm:$0xf]
        %v2830 = vld [vmem:[#allocation12 + $0xec] sm:$0xf]
        %v2831 = vld [vmem:[#allocation12 + $0xf0] sm:$0xf]
        %v2832 = vld [vmem:[#allocation12 + $0xf4] sm:$0xf]
        %v2833 = vld [vmem:[#allocation12 + $0xf8] sm:$0xf]
        %v2834 = vld [vmem:[#allocation12 + $0xfc] sm:$0xf]
        %v2835 = vld [vmem:[#allocation12 + $0x100] sm:$0xf]
        %v2836 = vld [vmem:[#allocation12 + $0x104] sm:$0xf]
        %v2837 = vld [vmem:[#allocation12 + $0x108] sm:$0xf]
        %v2838 = vld [vmem:[#allocation12 + $0x10c] sm:$0xf]
        %v2839 = vld [vmem:[#allocation12 + $0x110] sm:$0xf]
        %v2840 = vld [vmem:[#allocation12 + $0x114] sm:$0xf]
        %v2841 = vld [vmem:[#allocation12 + $0x118] sm:$0xf]
        %v2842 = vld [vmem:[#allocation12 + $0x11c] sm:$0xf]
        %v2843 = vld [vmem:[#allocation12 + $0x120] sm:$0xf]
        %v2844 = vld [vmem:[#allocation12 + $0x124] sm:$0xf]
        %v2845 = vld [vmem:[#allocation12 + $0x128] sm:$0xf]
        %v2846 = vld [vmem:[#allocation12 + $0x12c] sm:$0xf]
        %v2847 = vld [vmem:[#allocation12 + $0x130] sm:$0xf]
        %v2848 = vld [vmem:[#allocation12 + $0x134] sm:$0xf]
        %v2849 = vld [vmem:[#allocation12 + $0x138] sm:$0xf]
        %v2850 = vld [vmem:[#allocation12 + $0x13c] sm:$0xf]
        %v2851 = vld [vmem:[%s7] sm:$0x1]
        %v2853 = vlaneseq
        %v2854 = vshrl.u32 %v2853, 7
        %v2855 = vsub.s32 0, %v2854
        %v2856 = vrot.slane %v2851, %v2855
        %v2882 = vunpack.c.l.b16 %v2747
        %v2883 = vunpack.c.h.b16 %v2747
        %v2884 = vunpack.c.l.b16 %v2748
        %v2885 = vunpack.c.h.b16 %v2748
        %v2886 = vunpack.c.l.b16 %v2749
        %v2887 = vunpack.c.l.b16 %v2750
        %v2888 = vunpack.c.h.b16 %v2750
        %v2889 = vunpack.c.l.b16 %v2751
        %v2890 = vunpack.c.h.b16 %v2751
        %v2891 = vunpack.c.l.b16 %v2752
        %v2892 = vunpack.c.l.b16 %v2753
        %v2893 = vunpack.c.h.b16 %v2753
        %v2894 = vunpack.c.l.b16 %v2754
        %v2895 = vunpack.c.h.b16 %v2754
        %v2896 = vunpack.c.l.b16 %v2755
        %v2897 = vunpack.c.l.b16 %v2756
        %v2898 = vunpack.c.h.b16 %v2756
        %v2899 = vunpack.c.l.b16 %v2757
        %v2900 = vunpack.c.h.b16 %v2757
        %v2901 = vunpack.c.l.b16 %v2758
        %v2902 = vunpack.c.l.b16 %v2759
        %v2903 = vunpack.c.h.b16 %v2759
        %v2904 = vunpack.c.l.b16 %v2760
        %v2905 = vunpack.c.h.b16 %v2760
        %v2906 = vunpack.c.l.b16 %v2761
        %v2907 = vunpack.c.l.b16 %v2762
        %v2908 = vunpack.c.h.b16 %v2762
        %v2909 = vunpack.c.l.b16 %v2763
        %v2910 = vunpack.c.h.b16 %v2763
        %v2911 = vunpack.c.l.b16 %v2764
        %v2912 = vunpack.c.l.b16 %v2765
        %v2913 = vunpack.c.h.b16 %v2765
        %v2914 = vunpack.c.l.b16 %v2766
        %v2915 = vunpack.c.h.b16 %v2766
        %v2916 = vunpack.c.l.b16 %v2767
        %v2917 = vunpack.c.l.b16 %v2768
        %v2918 = vunpack.c.h.b16 %v2768
        %v2919 = vunpack.c.l.b16 %v2769
        %v2920 = vunpack.c.h.b16 %v2769
        %v2921 = vunpack.c.l.b16 %v2770
        %v2922 = vpack.c.b16 %v2887, %v2882
        %v2923 = vpack.c.b16 %v2888, %v2883
        %v2924 = vpack.c.b16 %v2889, %v2884
        %v2925 = vpack.c.b16 %v2890, %v2885
        %v2926 = vpack.c.b16 %v2891, %v2886
        %v2927 = vpack.c.b16 %v2897, %v2892
        %v2928 = vpack.c.b16 %v2898, %v2893
        %v2929 = vpack.c.b16 %v2899, %v2894
        %v2930 = vpack.c.b16 %v2900, %v2895
        %v2931 = vpack.c.b16 %v2901, %v2896
        %v2932 = vpack.c.b16 %v2907, %v2902
        %v2933 = vpack.c.b16 %v2908, %v2903
        %v2934 = vpack.c.b16 %v2909, %v2904
        %v2935 = vpack.c.b16 %v2910, %v2905
        %v2936 = vpack.c.b16 %v2911, %v2906
        %v2937 = vpack.c.b16 %v2917, %v2912
        %v2938 = vpack.c.b16 %v2918, %v2913
        %v2939 = vpack.c.b16 %v2919, %v2914
        %v2940 = vpack.c.b16 %v2920, %v2915
        %v2941 = vpack.c.b16 %v2921, %v2916
        %v3042 = vunpack.c.l.b16 %v2771
        %v3043 = vunpack.c.l.b16 %v2772
        %v3044 = vunpack.c.l.b16 %v2773
        %v3045 = vunpack.c.l.b16 %v2774
        %v3046 = vunpack.c.l.b16 %v2775
        %v3047 = vunpack.c.l.b16 %v2776
        %v3048 = vunpack.c.l.b16 %v2777
        %v3049 = vunpack.c.l.b16 %v2778
        %v3050 = vunpack.c.l.b16 %v2779
        %v3051 = vunpack.c.l.b16 %v2780
        %v3052 = vunpack.c.l.b16 %v2781
        %v3053 = vunpack.c.l.b16 %v2782
        %v3054 = vunpack.c.l.b16 %v2783
        %v3055 = vunpack.c.l.b16 %v2784
        %v3056 = vunpack.c.l.b16 %v2785
        %v3057 = vunpack.c.l.b16 %v2786
        %v3058 = vunpack.c.l.b16 %v2787
        %v3059 = vunpack.c.l.b16 %v2788
        %v3060 = vunpack.c.l.b16 %v2789
        %v3061 = vunpack.c.l.b16 %v2790
        %v3062 = vunpack.c.l.b16 %v2791
        %v3063 = vunpack.c.l.b16 %v2792
        %v3064 = vunpack.c.l.b16 %v2793
        %v3065 = vunpack.c.l.b16 %v2794
        %v3066 = vunpack.c.l.b16 %v2795
        %v3067 = vunpack.c.l.b16 %v2796
        %v3068 = vunpack.c.l.b16 %v2797
        %v3069 = vunpack.c.l.b16 %v2798
        %v3070 = vunpack.c.l.b16 %v2799
        %v3071 = vunpack.c.l.b16 %v2800
        %v3072 = vunpack.c.l.b16 %v2801
        %v3073 = vunpack.c.l.b16 %v2802
        %v3074 = vunpack.c.l.b16 %v2803
        %v3075 = vunpack.c.l.b16 %v2804
        %v3076 = vunpack.c.l.b16 %v2805
        %v3077 = vunpack.c.l.b16 %v2806
        %v3078 = vunpack.c.l.b16 %v2807
        %v3079 = vunpack.c.l.b16 %v2808
        %v3080 = vunpack.c.l.b16 %v2809
        %v3081 = vunpack.c.l.b16 %v2810
        %v3082 = vunpack.c.l.b16 %v2811
        %v3083 = vunpack.c.l.b16 %v2812
        %v3084 = vunpack.c.l.b16 %v2813
        %v3085 = vunpack.c.l.b16 %v2814
        %v3086 = vunpack.c.l.b16 %v2815
        %v3087 = vunpack.c.l.b16 %v2816
        %v3088 = vunpack.c.l.b16 %v2817
        %v3089 = vunpack.c.l.b16 %v2818
        %v3090 = vunpack.c.l.b16 %v2819
        %v3091 = vunpack.c.l.b16 %v2820
        %v3092 = vunpack.c.l.b16 %v2821
        %v3093 = vunpack.c.l.b16 %v2822
        %v3094 = vunpack.c.l.b16 %v2823
        %v3095 = vunpack.c.l.b16 %v2824
        %v3096 = vunpack.c.l.b16 %v2825
        %v3097 = vunpack.c.l.b16 %v2826
        %v3098 = vunpack.c.l.b16 %v2827
        %v3099 = vunpack.c.l.b16 %v2828
        %v3100 = vunpack.c.l.b16 %v2829
        %v3101 = vunpack.c.l.b16 %v2830
        %v3102 = vunpack.c.l.b16 %v2831
        %v3103 = vunpack.c.l.b16 %v2832
        %v3104 = vunpack.c.l.b16 %v2833
        %v3105 = vunpack.c.l.b16 %v2834
        %v3106 = vunpack.c.l.b16 %v2835
        %v3107 = vunpack.c.l.b16 %v2836
        %v3108 = vunpack.c.l.b16 %v2837
        %v3109 = vunpack.c.l.b16 %v2838
        %v3110 = vunpack.c.l.b16 %v2839
        %v3111 = vunpack.c.l.b16 %v2840
        %v3112 = vunpack.c.l.b16 %v2841
        %v3113 = vunpack.c.l.b16 %v2842
        %v3114 = vunpack.c.l.b16 %v2843
        %v3115 = vunpack.c.l.b16 %v2844
        %v3116 = vunpack.c.l.b16 %v2845
        %v3117 = vunpack.c.l.b16 %v2846
        %v3118 = vunpack.c.l.b16 %v2847
        %v3119 = vunpack.c.l.b16 %v2848
        %v3120 = vunpack.c.l.b16 %v2849
        %v3121 = vunpack.c.l.b16 %v2850
        %v3122 = vpack.c.b16 %v3043, %v3042
        %v3123 = vpack.c.b16 %v3045, %v3044
        %v3124 = vpack.c.b16 %v3047, %v3046
        %v3125 = vpack.c.b16 %v3049, %v3048
        %v3126 = vpack.c.b16 %v3051, %v3050
        %v3127 = vpack.c.b16 %v3053, %v3052
        %v3128 = vpack.c.b16 %v3055, %v3054
        %v3129 = vpack.c.b16 %v3057, %v3056
        %v3130 = vpack.c.b16 %v3059, %v3058
        %v3131 = vpack.c.b16 %v3061, %v3060
        %v3132 = vpack.c.b16 %v3063, %v3062
        %v3133 = vpack.c.b16 %v3065, %v3064
        %v3134 = vpack.c.b16 %v3067, %v3066
        %v3135 = vpack.c.b16 %v3069, %v3068
        %v3136 = vpack.c.b16 %v3071, %v3070
        %v3137 = vpack.c.b16 %v3073, %v3072
        %v3138 = vpack.c.b16 %v3075, %v3074
        %v3139 = vpack.c.b16 %v3077, %v3076
        %v3140 = vpack.c.b16 %v3079, %v3078
        %v3141 = vpack.c.b16 %v3081, %v3080
        %v3142 = vpack.c.b16 %v3083, %v3082
        %v3143 = vpack.c.b16 %v3085, %v3084
        %v3144 = vpack.c.b16 %v3087, %v3086
        %v3145 = vpack.c.b16 %v3089, %v3088
        %v3146 = vpack.c.b16 %v3091, %v3090
        %v3147 = vpack.c.b16 %v3093, %v3092
        %v3148 = vpack.c.b16 %v3095, %v3094
        %v3149 = vpack.c.b16 %v3097, %v3096
        %v3150 = vpack.c.b16 %v3099, %v3098
        %v3151 = vpack.c.b16 %v3101, %v3100
        %v3152 = vpack.c.b16 %v3103, %v3102
        %v3153 = vpack.c.b16 %v3105, %v3104
        %v3154 = vpack.c.b16 %v3107, %v3106
        %v3155 = vpack.c.b16 %v3109, %v3108
        %v3156 = vpack.c.b16 %v3111, %v3110
        %v3157 = vpack.c.b16 %v3113, %v3112
        %v3158 = vpack.c.b16 %v3115, %v3114
        %v3159 = vpack.c.b16 %v3117, %v3116
        %v3160 = vpack.c.b16 %v3119, %v3118
        %v3161 = vpack.c.b16 %v3121, %v3120
        %3202 = vmatprep.subr.bf16.mxu0 0
        %3203 = vmatpush1.bf16.msra.mxu0 %v3122
        %3204 = vmatprep.subr.bf16.mxu0 0
        %3205 = vmatpush1.bf16.msra.mxu0 %v3123
        %3206 = vmatprep.subr.bf16.mxu0 0
        %3207 = vmatpush1.bf16.msra.mxu0 %v3124
        %3208 = vmatprep.subr.bf16.mxu0 0
        %3209 = vmatpush1.bf16.msra.mxu0 %v3125
        %3210 = vmatprep.subr.bf16.mxu0 0
        %3211 = vmatpush1.bf16.msra.mxu0 %v3126
        %3212 = vmatprep.subr.bf16.mxu0 0
        %3213 = vmatpush1.bf16.msra.mxu0 %v3127
        %3214 = vmatprep.subr.bf16.mxu0 0
        %3215 = vmatpush1.bf16.msra.mxu0 %v3128
        %3216 = vmatprep.subr.bf16.mxu0 0
        %3217 = vmatpush1.bf16.msra.mxu0 %v3129
        %3218 = vmatprep.subr.bf16.mxu0 0
        %3219 = vmatpush1.bf16.msra.mxu0 %v3130
        %3220 = vmatprep.subr.bf16.mxu0 0
        %3221 = vmatpush1.bf16.msra.mxu0 %v3131
        %3222 = vmatprep.subr.bf16.mxu0 0
        %3223 = vmatpush1.bf16.msra.mxu0 %v3132
        %3224 = vmatprep.subr.bf16.mxu0 0
        %3225 = vmatpush1.bf16.msra.mxu0 %v3133
        %3226 = vmatprep.subr.bf16.mxu0 0
        %3227 = vmatpush1.bf16.msra.mxu0 %v3134
        %3228 = vmatprep.subr.bf16.mxu0 0
        %3229 = vmatpush1.bf16.msra.mxu0 %v3135
        %3230 = vmatprep.subr.bf16.mxu0 0
        %3231 = vmatpush1.bf16.msra.mxu0 %v3136
        %3232 = vmatprep.subr.bf16.mxu0 0
        %3233 = vmatpush1.bf16.msra.mxu0 %v3137
        %3234 = vmatprep.mubr.bf16.mxu0 %v2923
        %3235 = vmatmul.mubr.bf16.gmra.mrb[0].mxu0 %v2922
        %v3236 = vpop.f32.mrb[0].mxu0
        %v3237 = vadd.f32 %v2856, %v3236
        %v3238 = vpop.f32.mrb[0].mxu0
        %v3239 = vpop.f32.mrb[0].mxu0
        %v3240 = vadd.f32 %v2856, %v3239
        %v3241 = vpop.f32.mrb[0].mxu0
        %3242 = vmatprep.mubr.bf16.mxu0 %v2928
        %3243 = vmatmul.mubr.bf16.gmra.mrb[0].mxu0 %v2927
        %v3244 = vpop.f32.mrb[0].mxu0
        %v3245 = vadd.f32 %v2856, %v3244
        %v3246 = vpop.f32.mrb[0].mxu0
        %v3247 = vpop.f32.mrb[0].mxu0
        %v3248 = vadd.f32 %v2856, %v3247
        %v3249 = vpop.f32.mrb[0].mxu0
        %3250 = vmatprep.mubr.bf16.mxu0 %v2933
        %3251 = vmatmul.mubr.bf16.gmra.mrb[0].mxu0 %v2932
        %v3252 = vpop.f32.mrb[0].mxu0
        %v3253 = vadd.f32 %v2856, %v3252
        %v3254 = vpop.f32.mrb[0].mxu0
        %v3255 = vpop.f32.mrb[0].mxu0
        %v3256 = vadd.f32 %v2856, %v3255
        %v3257 = vpop.f32.mrb[0].mxu0
        %3258 = vmatprep.mubr.bf16.mxu0 %v2938
        %3259 = vmatmul.mubr.bf16.gmra.mrb[0].mxu0 %v2937
        %v3260 = vpop.f32.mrb[0].mxu0
        %v3261 = vadd.f32 %v2856, %v3260
        %v3262 = vpop.f32.mrb[0].mxu0
        %v3263 = vpop.f32.mrb[0].mxu0
        %v3264 = vadd.f32 %v2856, %v3263
        %v3265 = vpop.f32.mrb[0].mxu0
        %3266 = vdwg.mxu0
        %3267 = vmatprep.subr.bf16.mxu0 0
        %3268 = vmatpush1.bf16.msra.mxu0 %v3138
        %3269 = vmatprep.subr.bf16.mxu0 0
        %3270 = vmatpush1.bf16.msra.mxu0 %v3139
        %3271 = vmatprep.subr.bf16.mxu0 0
        %3272 = vmatpush1.bf16.msra.mxu0 %v3140
        %3273 = vmatprep.subr.bf16.mxu0 0
        %3274 = vmatpush1.bf16.msra.mxu0 %v3141
        %3275 = vmatprep.subr.bf16.mxu0 0
        %3276 = vmatpush1.bf16.msra.mxu0 %v3142
        %3277 = vmatprep.subr.bf16.mxu0 0
        %3278 = vmatpush1.bf16.msra.mxu0 %v3143
        %3279 = vmatprep.subr.bf16.mxu0 0
        %3280 = vmatpush1.bf16.msra.mxu0 %v3144
        %3281 = vmatprep.subr.bf16.mxu0 0
        %3282 = vmatpush1.bf16.msra.mxu0 %v3145
        %3283 = vmatprep.subr.bf16.mxu0 0
        %3284 = vmatpush1.bf16.msra.mxu0 %v3146
        %3285 = vmatprep.subr.bf16.mxu0 0
        %3286 = vmatpush1.bf16.msra.mxu0 %v3147
        %3287 = vmatprep.subr.bf16.mxu0 0
        %3288 = vmatpush1.bf16.msra.mxu0 %v3148
        %3289 = vmatprep.subr.bf16.mxu0 0
        %3290 = vmatpush1.bf16.msra.mxu0 %v3149
        %3291 = vmatprep.subr.bf16.mxu0 0
        %3292 = vmatpush1.bf16.msra.mxu0 %v3150
        %3293 = vmatprep.subr.bf16.mxu0 0
        %3294 = vmatpush1.bf16.msra.mxu0 %v3151
        %3295 = vmatprep.subr.bf16.mxu0 0
        %3296 = vmatpush1.bf16.msra.mxu0 %v3152
        %3297 = vmatprep.subr.bf16.mxu0 0
        %3298 = vmatpush1.bf16.msra.mxu0 %v3153
        %3299 = vmatprep.mubr.bf16.mxu0 %v2925
        %3300 = vmatmul.mubr.bf16.gmra.mrb[0].mxu0 %v2924
        %v3301 = vpop.f32.mrb[0].mxu0
        %v3302 = vadd.f32 %v3237, %v3301
        %v3303 = vpop.f32.mrb[0].mxu0
        %v3304 = vpop.f32.mrb[0].mxu0
        %v3305 = vadd.f32 %v3240, %v3304
        %v3306 = vpop.f32.mrb[0].mxu0
        %3307 = vmatprep.mubr.bf16.mxu0 %v2930
        %3308 = vmatmul.mubr.bf16.gmra.mrb[0].mxu0 %v2929
        %v3309 = vpop.f32.mrb[0].mxu0
        %v3310 = vadd.f32 %v3245, %v3309
        %v3311 = vpop.f32.mrb[0].mxu0
        %v3312 = vpop.f32.mrb[0].mxu0
        %v3313 = vadd.f32 %v3248, %v3312
        %v3314 = vpop.f32.mrb[0].mxu0
        %3315 = vmatprep.mubr.bf16.mxu0 %v2935
        %3316 = vmatmul.mubr.bf16.gmra.mrb[0].mxu0 %v2934
        %v3317 = vpop.f32.mrb[0].mxu0
        %v3318 = vadd.f32 %v3253, %v3317
        %v3319 = vpop.f32.mrb[0].mxu0
        %v3320 = vpop.f32.mrb[0].mxu0
        %v3321 = vadd.f32 %v3256, %v3320
        %v3322 = vpop.f32.mrb[0].mxu0
        %3323 = vmatprep.mubr.bf16.mxu0 %v2940
        %3324 = vmatmul.mubr.bf16.gmra.mrb[0].mxu0 %v2939
        %v3325 = vpop.f32.mrb[0].mxu0
        %v3326 = vadd.f32 %v3261, %v3325
        %v3327 = vpop.f32.mrb[0].mxu0
        %v3328 = vpop.f32.mrb[0].mxu0
        %v3329 = vadd.f32 %v3264, %v3328
        %v3330 = vpop.f32.mrb[0].mxu0
        %3331 = vdwg.mxu0
        %3332 = vmatprep.subr.bf16.mxu0 0
        %3333 = vmatpush1.bf16.msra.mxu0 %v3154
        %3334 = vmatprep.subr.bf16.mxu0 0
        %3335 = vmatpush1.bf16.msra.mxu0 %v3155
        %3336 = vmatprep.subr.bf16.mxu0 0
        %3337 = vmatpush1.bf16.msra.mxu0 %v3156
        %3338 = vmatprep.subr.bf16.mxu0 0
        %3339 = vmatpush1.bf16.msra.mxu0 %v3157
        %3340 = vmatprep.subr.bf16.mxu0 0
        %3341 = vmatpush1.bf16.msra.mxu0 %v3158
        %3342 = vmatprep.subr.bf16.mxu0 0
        %3343 = vmatpush1.bf16.msra.mxu0 %v3159
        %3344 = vmatprep.subr.bf16.mxu0 0
        %3345 = vmatpush1.bf16.msra.mxu0 %v3160
        %3346 = vmatprep.subr.bf16.mxu0 0
        %3347 = vmatpush1.bf16.msra.mxu0 %v3161
        %3348 = vmatprep.subr.bf16.mxu0 0
        %3349 = vmatpush1.bf16.msra.mxu0 0
        %3350 = vmatprep.subr.bf16.mxu0 0
        %3351 = vmatpush1.bf16.msra.mxu0 0
        %3352 = vmatprep.subr.bf16.mxu0 0
        %3353 = vmatpush1.bf16.msra.mxu0 0
        %3354 = vmatprep.subr.bf16.mxu0 0
        %3355 = vmatpush1.bf16.msra.mxu0 0
        %3356 = vmatprep.subr.bf16.mxu0 0
        %3357 = vmatpush1.bf16.msra.mxu0 0
        %3358 = vmatprep.subr.bf16.mxu0 0
        %3359 = vmatpush1.bf16.msra.mxu0 0
        %3360 = vmatprep.subr.bf16.mxu0 0
        %3361 = vmatpush1.bf16.msra.mxu0 0
        %3362 = vmatprep.subr.bf16.mxu0 0
        %3363 = vmatpush1.bf16.msra.mxu0 0
        %3364 = vmatprep.mubr.bf16.mxu0 0
        %3365 = vmatmul.mubr.bf16.gmra.mrb[0].mxu0 %v2926
        %v3366 = vpop.f32.mrb[0].mxu0
        %v3367 = vadd.f32 %v3302, %v3366
        %v3368 = vpop.f32.mrb[0].mxu0
        %v3369 = vpop.f32.mrb[0].mxu0
        %v3370 = vadd.f32 %v3305, %v3369
        %v3371 = vpop.f32.mrb[0].mxu0
        %3372 = vmatprep.mubr.bf16.mxu0 0
        %3373 = vmatmul.mubr.bf16.gmra.mrb[0].mxu0 %v2931
        %v3374 = vpop.f32.mrb[0].mxu0
        %v3375 = vadd.f32 %v3310, %v3374
        %v3376 = vpop.f32.mrb[0].mxu0
        %v3377 = vpop.f32.mrb[0].mxu0
        %v3378 = vadd.f32 %v3313, %v3377
        %v3379 = vpop.f32.mrb[0].mxu0
        %3380 = vmatprep.mubr.bf16.mxu0 0
        %3381 = vmatmul.mubr.bf16.gmra.mrb[0].mxu0 %v2936
        %v3382 = vpop.f32.mrb[0].mxu0
        %v3383 = vadd.f32 %v3318, %v3382
        %v3384 = vpop.f32.mrb[0].mxu0
        %v3385 = vpop.f32.mrb[0].mxu0
        %v3386 = vadd.f32 %v3321, %v3385
        %v3387 = vpop.f32.mrb[0].mxu0
        %3388 = vmatprep.mubr.bf16.mxu0 0
        %3389 = vmatmul.mubr.bf16.gmra.mrb[0].mxu0 %v2941
        %v3390 = vpop.f32.mrb[0].mxu0
        %v3391 = vadd.f32 %v3326, %v3390
        %v3392 = vpop.f32.mrb[0].mxu0
        %v3393 = vpop.f32.mrb[0].mxu0
        %v3394 = vadd.f32 %v3329, %v3393
        %v3395 = vpop.f32.mrb[0].mxu0
        %3396 = vdwg.mxu0
        %vm3406 = vcmask 1043456
        %v3407 = vrot.slane %v1370, 4
        %v3408 = vrot.slane %v1371, 4
        %v3409 = vsel %vm3406, %v3407, %v3408
        %v3410 = vrot.slane %v1372, 4
        %v3411 = vsel %vm3406, %v3408, %v3410
        %v3412 = vrot.slane %v1373, 4
        %v3413 = vsel %vm3406, %v3410, %v3412
        %v3414 = vrot.slane %v1374, 4
        %v3415 = vsel %vm3406, %v3412, %v3414
        %v3416 = vrot.slane %v1375, 4
        %v3417 = vsel %vm3406, %v3414, %v3416
        %v3418 = vrot.slane %v1376, 4
        %v3419 = vsel %vm3406, %v3416, %v3418
        %v3420 = vrot.slane %v1377, 4
        %v3421 = vsel %vm3406, %v3418, %v3420
        %v3422 = vrot.slane %v1378, 4
        %v3423 = vsel %vm3406, %v3420, %v3422
        %v3432 = vadd.f32 %v3367, %v3409
        %v3433 = vadd.f32 %v3370, %v3411
        %v3434 = vadd.f32 %v3375, %v3413
        %v3435 = vadd.f32 %v3378, %v3415
        %v3436 = vadd.f32 %v3383, %v3417
        %v3437 = vadd.f32 %v3386, %v3419
        %v3438 = vadd.f32 %v3391, %v3421
        %v3439 = vadd.f32 %v3394, %v3423
        %v3440 = vmax.f32 %v3432, 0.0
        %v3441 = vmax.f32 %v3433, 0.0
        %v3442 = vmax.f32 %v3434, 0.0
        %v3443 = vmax.f32 %v3435, 0.0
        %v3444 = vmax.f32 %v3436, 0.0
        %v3445 = vmax.f32 %v3437, 0.0
        %v3446 = vmax.f32 %v3438, 0.0
        %v3447 = vmax.f32 %v3439, 0.0
        %3448 = vst [vmem:[%s443] sm:$0xff] %v3440
        %3449 = vst [vmem:[%s443 + $0x8] sm:$0xff] %v3441
        %3450 = vst [vmem:[%s443 + $0x10] sm:$0xff] %v3442
        %3451 = vst [vmem:[%s443 + $0x18] sm:$0xff] %v3443
        %3452 = vst [vmem:[%s443 + $0x20] sm:$0xff] %v3444
        %3453 = vst [vmem:[%s443 + $0x28] sm:$0xff] %v3445
        %3454 = vst [vmem:[%s443 + $0x30] sm:$0xff] %v3446
        %3455 = vst [vmem:[%s443 + $0x38] sm:$0xff] %v3447
        %s3456 = sand.u32 %s237, 1
        %s3457 = scalar_lea.sflag [#allocation6], %s3456
        %s3458 = sand.u32 %s237, 1
        %s3459 = smul.addr %s3458, 64
        %s3460 = scalar_lea.vmem [#allocation13], %s3459
        // Predicated region
        $region73: #{tpu_custom_call.1} parent=51 // pred_check
          %p3461 = pneg %p247
        $region74: #{tpu_custom_call.1} parent=51 // pred_check_branch
          %3463 = sbr.rel (%p3461) target = $region76
        $region75: #{tpu_custom_call.1} parent=51 // pred_region
          %s3464 = smul.u32 8, %s34
          %s3466 = ssub.s32 1024, 1024
          %3467 = vsyncadd %s3457, %s3466
          %s3468 = smul.addr %s33, 16
          %s3469 = sadd.s32 %s3464, %s3468
          %s3470 = smul.addr %s3469, 128
          %s3471 = scalar_lea.hbm %s8, %s3470
          %s3472 = sshll.u32 %s3460, 4
          %s3473 = int_to_ptr.vmem [resolvable:$true] %s3472
          %3478 = dma.vmem_to_hbm [thread:$0]  %s3473, 1024, %s3471, %s3457, 128, 128, 8
        $region76: #{tpu_custom_call.1} parent=51 // pred_fallthru
          _
      $region52: #{tpu_custom_call.1} parent=5 // pred_fallthru
        _
      %p3479 = scmp.le.s32.totalorder 2, %s24
      // Predicated region
      $region77: #{tpu_custom_call.1} parent=5 // pred_check
        %p3480 = pneg %p3479
      $region78: #{tpu_custom_call.1} parent=5 // pred_check_branch
        %3482 = sbr.rel (%p3480) target = $region80
      $region79: #{tpu_custom_call.1} parent=5 // pred_region
        %s3483 = ssub.s32 %s24, 2
        // Predicated region
        $region81: #{tpu_custom_call.1} parent=79 // pred_check
          %p3484 = pneg %p253
        $region82: #{tpu_custom_call.1} parent=79 // pred_check_branch
          %3486 = sbr.rel (%p3484) target = $region84
        $region83: #{tpu_custom_call.1} parent=79 // pred_region
          %s3487 = sand.u32 %s238, 1
          %s3488 = scalar_lea.sflag [#allocation6], %s3487
          %s3489 = sand.u32 %s238, 1
          %s3490 = smul.addr %s3489, 64
          %s3491 = scalar_lea.vmem [#allocation13], %s3490
          %3492 = dma.done %s3488, 1024
        $region84: #{tpu_custom_call.1} parent=79 // pred_fallthru
          _
      $region80: #{tpu_custom_call.1} parent=5 // pred_fallthru
        _
    $region6: #{tpu_custom_call.1} parent=1 // loop_footer
      %s28 = sadd.s32 1, %s24
    $region7: #{tpu_custom_call.1} parent=1 // loop_footer_branch
      %23 = sbr.rel target = $region3
    $region8: #{tpu_custom_call.1} parent=1 // loop_exit
      _
    %3493 = vsyncpa [#allocation5], 1
    %s3494 = scalar_lea.sflag [#allocation5], 1
    %3495 = vsyncpa %s3494, 1
    %3496 = vsyncpa [#allocation8], 1
    %s3497 = scalar_lea.sflag [#allocation8], 1
    %3498 = vsyncpa %s3497, 1
    %3499 = vsyncpa [#allocation11], 1
    %3500 = vsyncpa [#allocation6], 1
    %s3501 = scalar_lea.sflag [#allocation6], 1
    %3502 = vsyncpa %s3501, 1

</llo_original>
